<compile_context>
chip_gen: v7x
topology: tpu7x:2x2x1
jax: 0.10.0
libtpu: 0.0.40
codegen_flags: <defaults>
</compile_context>

<pallas_src>
import functools

import jax
import jax.numpy as jnp
from jax import lax
from jax.experimental import pallas as pl
from jax.experimental.pallas import tpu as pltpu

LANE = 128


def _round_up(x, m):
    return (x + m - 1) // m * m


def _pad_last(a, mult):
    n = a.shape[-1]
    n_pad = _round_up(n, mult)
    if n_pad == n:
        return a
    pads = [(0, 0)] * (a.ndim - 1) + [(0, n_pad - n)]
    return jnp.pad(a, pads)


# ----------------------------------------------------------------------------
# Pallas kernel: fused (patches @ W) + bias + activation, lane-dense output
# ----------------------------------------------------------------------------
def _matmul_bias_act_kernel(x_ref, w_ref, b_ref, o_ref, *, act):
    acc = jnp.dot(x_ref[...], w_ref[...], preferred_element_type=jnp.float32)
    acc = acc + b_ref[...]              # (1, Np) broadcasts over rows
    if act == "relu":
        acc = jnp.maximum(acc, 0.0)
    elif act == "sigmoid":
        acc = jax.nn.sigmoid(acc)
    o_ref[...] = acc.astype(o_ref.dtype)


def _fused_matmul(x, w_mat, b_row, act):
    """x: (M, K) f32, w_mat: (K, Np) f32 with Np a multiple of 128,
    b_row: (1, Np) f32.  Returns (M, Np) f32."""
    M, K = x.shape
    Np = w_mat.shape[1]

    if M >= 32:
        # Two row blocks marked "parallel" -> both TensorCores on v7x; for the
        # large-M layers (e1: M=512, d3: M=578) this also gives tm >= 256, i.e.
        # full 256-row MXU utilization on v6e/v7x.
        tm = _round_up(pl.cdiv(M, 2), 8)
    else:
        # Tiny layer (e3: M=8): one non-gridded block; splitting 8 rows only
        # adds dispatch overhead.
        tm = _round_up(M, 8)
    m_pad = _round_up(M, tm)            # pads at most 15 rows (never a full tile)
    if m_pad != M:
        x = jnp.pad(x, ((0, m_pad - M), (0, 0)))

    kernel = functools.partial(_matmul_bias_act_kernel, act=act)
    out = pl.pallas_call(
        kernel,
        out_shape=jax.ShapeDtypeStruct((m_pad, Np), jnp.float32),
        grid=(m_pad // tm,),
        in_specs=[
            pl.BlockSpec((tm, K), lambda i: (i, 0)),    # patches row-tile, full K
            pl.BlockSpec((K, Np), lambda i: (0, 0)),    # resident weight matrix
            pl.BlockSpec((1, Np), lambda i: (0, 0)),    # bias row
        ],
        out_specs=pl.BlockSpec((tm, Np), lambda i: (i, 0)),
        compiler_params=pltpu.CompilerParams(
            dimension_semantics=("parallel",),
            # let XLA fold the im2col producer into the input DMA where legal
            allow_input_fusion=[True, False, False],
        ),
    )(x, w_mat, b_row)
    return out[:M] if m_pad != M else out


# ----------------------------------------------------------------------------
# im2col (data movement only; the matmul hot path is the Pallas kernel)
# ----------------------------------------------------------------------------
def _im2col(x_nhwc, k, stride, pad):
    """Extract (kh, kw, cin)-ordered patches. Returns (N, Ho, Wo, k*k*C)."""
    x = jnp.pad(x_nhwc, ((0, 0), (pad, pad), (pad, pad), (0, 0))) if pad else x_nhwc
    n, h, w, c = x.shape
    ho = (h - k) // stride + 1
    wo = (w - k) // stride + 1
    cols = []
    for i in range(k):
        for j in range(k):
            cols.append(x[:, i:i + stride * ho:stride, j:j + stride * wo:stride, :])
    return jnp.concatenate(cols, axis=-1), ho, wo


def _conv(x, w_mat, b_row, *, k, stride, pad, cout, act):
    """Conv2d (PyTorch semantics). w_mat/b_row are the prepacked, lane-padded
    matmul weights produced by prepare_params."""
    n, _, _, cin = x.shape
    patches, ho, wo = _im2col(x, k, stride, pad)
    out = _fused_matmul(patches.reshape(n * ho * wo, k * k * cin), w_mat, b_row, act)
    return out[:, :cout].reshape(n, ho, wo, cout)


def _conv_transpose(x, w_mat, b_row, *, k, cout, act):
    """ConvTranspose2d(stride=2, padding=1, output_padding=1) via sub-pixel
    (phase) decomposition — no zero-dilated input.

    out[oy, ox] depends only on kernel taps with kh ≡ (oy+1) mod 2 and
    kw ≡ (ox+1) mod 2, applied to input rows/cols qy-m, qx-n with
    qy=(oy+1)//2.  One im2col with window kmax=ceil(k/2) over the raw input
    and one matmul with a (kmax^2*cin, 4*cout) phase-expanded weight produce
    all four output phases at once; they are interleaved afterwards."""
    s, p, op = 2, 1, 1
    kmax = -(-k // s)
    n, h, w, cin = x.shape
    hout = (h - 1) * s - 2 * p + k + op
    wout = (w - 1) * s - 2 * p + k + op
    qh = hout // s + 1                  # patch positions needed per dim (p=1, s=2)
    qw = wout // s + 1
    xp = jnp.pad(x, ((0, 0), (kmax - 1, qh - h), (kmax - 1, qw - w), (0, 0)))
    patches, _, _ = _im2col(xp, kmax, 1, 0)              # (n, qh, qw, kmax^2*cin)
    out = _fused_matmul(patches.reshape(n * qh * qw, kmax * kmax * cin),
                        w_mat, b_row, act)
    res = out[:, :s * s * cout].reshape(n, qh, qw, s, s, cout)

    th, tw = hout // s, wout // s
    # out row oy <- res[qy=(oy+1)//2, ry=(oy+1)%2]: even rows use phase 1,
    # odd rows use phase 0 of the next patch row.  Same for columns.
    rows = jnp.stack([res[:, 0:th, :, 1], res[:, 1:th + 1, :, 0]], axis=2)
    rows = rows.reshape(n, hout, qw, s, cout)
    y = jnp.stack([rows[:, :, 0:tw, 1], rows[:, :, 1:tw + 1, 0]], axis=3)
    return y.reshape(n, hout, wout, cout)


# ----------------------------------------------------------------------------
# One-time weight repacking (outside the jitted forward)
# ----------------------------------------------------------------------------
def _convT_subpixel_weight(w_iohw, k, s, kmax):
    """(cin, cout, k, k) -> (kmax*kmax*cin, s*s*cout) phase-expanded matrix.
    Row order (a, b, cin) matches im2col; column order (ry, rx, cout)."""
    cin, cout = w_iohw.shape[0], w_iohw.shape[1]
    zero = jnp.zeros((cin, cout), w_iohw.dtype)
    rows = []
    for a in range(kmax):
        for b in range(kmax):
            cols = []
            for ry in range(s):
                for rx in range(s):
                    kh = ry + s * (kmax - 1 - a)
                    kw = rx + s * (kmax - 1 - b)
                    cols.append(w_iohw[:, :, kh, kw] if (kh < k and kw < k) else zero)
            rows.append(jnp.concatenate(cols, axis=1))   # (cin, s*s*cout)
    return jnp.concatenate(rows, axis=0)


def prepare_params(params):
    """Repack PyTorch-layout parameters into lane-dense matmul form (done once)."""
    prep = {}
    for name, k in (("e1", 3), ("e2", 3), ("e3", 7)):
        w, b = params[name + "_w"], params[name + "_b"]          # (cout,cin,k,k)
        cout, cin = w.shape[0], w.shape[1]
        w_mat = jnp.transpose(w, (2, 3, 1, 0)).reshape(k * k * cin, cout)
        prep[name + "_w"] = _pad_last(w_mat, LANE)
        prep[name + "_b"] = _pad_last(b.reshape(1, cout), LANE)
    s = 2
    for name, k in (("d1", 7), ("d2", 3), ("d3", 3)):
        w, b = params[name + "_w"], params[name + "_b"]          # (cin,cout,k,k)
        cout = w.shape[1]
        kmax = -(-k // s)
        w_mat = _convT_subpixel_weight(w, k, s, kmax)            # (kmax^2*cin, 4*cout)
        b_mat = jnp.tile(b, s * s).reshape(1, s * s * cout)
        prep[name + "_w"] = _pad_last(w_mat, LANE)
        prep[name + "_b"] = _pad_last(b_mat, LANE)
    return prep


# ----------------------------------------------------------------------------
# Parameter init (deterministic, PyTorch-like uniform fan-in scaling)
# ----------------------------------------------------------------------------
def _init_conv(key, cout, cin, k):
    kw, kb = jax.random.split(key)
    bound = 1.0 / jnp.sqrt(cin * k * k)
    w = jax.random.uniform(kw, (cout, cin, k, k), jnp.float32, -bound, bound)
    b = jax.random.uniform(kb, (cout,), jnp.float32, -bound, bound)
    return w, b


def _init_convT(key, cin, cout, k):
    kw, kb = jax.random.split(key)
    bound = 1.0 / jnp.sqrt(cout * k * k)
    w = jax.random.uniform(kw, (cin, cout, k, k), jnp.float32, -bound, bound)
    b = jax.random.uniform(kb, (cout,), jnp.float32, -bound, bound)
    return w, b


def init_params(key):
    ks = jax.random.split(key, 6)
    p = {}
    p["e1_w"], p["e1_b"] = _init_conv(ks[0], 16, 3, 3)
    p["e2_w"], p["e2_b"] = _init_conv(ks[1], 32, 16, 3)
    p["e3_w"], p["e3_b"] = _init_conv(ks[2], 64, 32, 7)
    p["d1_w"], p["d1_b"] = _init_convT(ks[3], 64, 32, 7)
    p["d2_w"], p["d2_b"] = _init_convT(ks[4], 32, 16, 3)
    p["d3_w"], p["d3_b"] = _init_convT(ks[5], 16, 3, 3)
    return p


# ----------------------------------------------------------------------------
# Full autoencoder forward (matches the PyTorch module)
# ----------------------------------------------------------------------------
@jax.jit
def autoencoder_forward(x_nchw, prep):
    x = jnp.transpose(x_nchw, (0, 2, 3, 1))  # NCHW -> NHWC
    # encoder
    x = _conv(x, prep["e1_w"], prep["e1_b"], k=3, stride=2, pad=1, cout=16, act="relu")
    x = _conv(x, prep["e2_w"], prep["e2_b"], k=3, stride=2, pad=1, cout=32, act="relu")
    x = _conv(x, prep["e3_w"], prep["e3_b"], k=7, stride=2, pad=1, cout=64, act="none")
    # decoder (all: stride=2, padding=1, output_padding=1)
    x = _conv_transpose(x, prep["d1_w"], prep["d1_b"], k=7, cout=32, act="relu")
    x = _conv_transpose(x, prep["d2_w"], prep["d2_b"], k=3, cout=16, act="relu")
    x = _conv_transpose(x, prep["d3_w"], prep["d3_b"], k=3, cout=3, act="sigmoid")
    return jnp.transpose(x, (0, 3, 1, 2))    # NHWC -> NCHW


# Plain-XLA reference of the same module (correctness oracle).
@jax.jit
def _reference_forward(x_nchw, params):
    dn = ("NHWC", "OIHW", "NHWC")
    x = jnp.transpose(x_nchw, (0, 2, 3, 1))

    def conv(x, w, b, stride, pad):
        y = lax.conv_general_dilated(x, w, (stride, stride),
                                     ((pad, pad), (pad, pad)),
                                     dimension_numbers=dn)
        return y + b

    def convT(x, w, b, stride, pad, op):
        k = w.shape[2]
        w_eq = jnp.flip(w, axis=(2, 3)).transpose(1, 0, 2, 3)    # (cout,cin,k,k)
        lo, hi = k - 1 - pad, k - 1 - pad + op
        y = lax.conv_general_dilated(x, w_eq, (1, 1), ((lo, hi), (lo, hi)),
                                     lhs_dilation=(stride, stride),
                                     dimension_numbers=dn)
        return y + b

    x = jax.nn.relu(conv(x, params["e1_w"], params["e1_b"], 2, 1))
    x = jax.nn.relu(conv(x, params["e2_w"], params["e2_b"], 2, 1))
    x = conv(x, params["e3_w"], params["e3_b"], 2, 1)
    x = jax.nn.relu(convT(x, params["d1_w"], params["d1_b"], 2, 1, 1))
    x = jax.nn.relu(convT(x, params["d2_w"], params["d2_b"], 2, 1, 1))
    x = jax.nn.sigmoid(convT(x, params["d3_w"], params["d3_b"], 2, 1, 1))
    return jnp.transpose(x, (0, 3, 1, 2))


if __name__ == "__main__":
    key = jax.random.PRNGKey(0)
    k_x, k_p = jax.random.split(key)
    # 32x32 images: 32 -> 16 -> 8 -> 2 (encoder) -> 8 -> 16 -> 32 (decoder)
    x = jax.random.uniform(k_x, (2, 3, 32, 32), jnp.float32)
    params = init_params(k_p)

    prep = prepare_params(params)            # one-time lane-dense weight repack
    y = jax.block_until_ready(autoencoder_forward(x, prep))

    assert y.shape == (2, 3, 32, 32), y.shape
    assert y.dtype == jnp.float32
    assert bool(jnp.all((y >= 0.0) & (y <= 1.0)))   # sigmoid output range

    # Compare against the plain-XLA reference (loose tol covers MXU/conv
    # precision-pass differences; structural bugs would be orders larger).
    y_ref = jax.block_until_ready(_reference_forward(x, params))
    err = float(jnp.max(jnp.abs(y - y_ref)))
    assert err < 2e-2, f"max abs error vs reference: {err}"

    print("KERNEL_OK")
</pallas_src>

<mosaic_0001>
module attributes {stable_mosaic.version = 11 : i64} {
  func.func @_matmul_bias_act_kernel(%arg0: i32, %arg1: memref<256x27xf32, #tpu.memory_space<vmem>>, %arg2: memref<27x128xf32, #tpu.memory_space<vmem>>, %arg3: memref<1x128xf32, #tpu.memory_space<vmem>>, %arg4: memref<256x128xf32, #tpu.memory_space<vmem>>) attributes {dimension_semantics = [#tpu.dimension_semantics<parallel>], iteration_bounds = array<i64: 2>, scalar_prefetch = 0 : i64, scratch_operands = 0 : i64, tpu.core_type = #tpu.core_type<tc>, window_params = [{transform_indices = @transform_0, window_bounds = array<i64: 256, 27>}, {pipeline_mode = #tpu.pipeline_mode<synchronous>, transform_indices = @transform_1, window_bounds = array<i64: 27, 128>}, {pipeline_mode = #tpu.pipeline_mode<synchronous>, transform_indices = @transform_2, window_bounds = array<i64: 1, 128>}, {transform_indices = @transform_3, window_bounds = array<i64: 256, 128>}]} {
    %c0 = arith.constant 0 : index
    %c0_0 = arith.constant 0 : index
    %0 = vector.load %arg1[%c0, %c0_0] : memref<256x27xf32, #tpu.memory_space<vmem>>, vector<256x27xf32>
    %c0_1 = arith.constant 0 : index
    %c0_2 = arith.constant 0 : index
    %1 = vector.load %arg2[%c0_1, %c0_2] : memref<27x128xf32, #tpu.memory_space<vmem>>, vector<27x128xf32>
    %cst = arith.constant dense<0.000000e+00> : vector<256x128xf32>
    %2 = tpu.matmul %0, %1, %cst {dimension_numbers = #tpu.dot_dimension_numbers<[1], [0], [0], [1], [0, 0, 1, 1], [], []>} : vector<256x27xf32>, vector<27x128xf32>, vector<256x128xf32> -> vector<256x128xf32>
    %c0_3 = arith.constant 0 : index
    %c0_4 = arith.constant 0 : index
    %3 = vector.load %arg3[%c0_3, %c0_4] : memref<1x128xf32, #tpu.memory_space<vmem>>, vector<1x128xf32>
    %4 = vector.broadcast %3 : vector<1x128xf32> to vector<256x128xf32>
    %5 = arith.addf %2, %4 : vector<256x128xf32>
    %cst_5 = arith.constant 0.000000e+00 : f32
    %6 = vector.broadcast %cst_5 : f32 to vector<256x128xf32>
    %7 = arith.maximumf %5, %6 : vector<256x128xf32>
    %c0_6 = arith.constant 0 : index
    %c0_7 = arith.constant 0 : index
    %8 = vector.load %arg4[%c0_6, %c0_7] : memref<256x128xf32, #tpu.memory_space<vmem>>, vector<256x128xf32>
    tpu.vector_store %arg4[%c0_6, %c0_7], %7 {strides = array<i32>} : memref<256x128xf32, #tpu.memory_space<vmem>>, vector<256x128xf32>,
    return
  }
  func.func @transform_0(%arg0: i32) -> (i32, i32) {
    %c0_i32 = arith.constant 0 : i32
    %c0_i32_0 = arith.constant 0 : i32
    return %arg0, %c0_i32 : i32, i32
  }
  func.func @transform_1(%arg0: i32) -> (i32, i32) {
    %c0_i32 = arith.constant 0 : i32
    %c0_i32_0 = arith.constant 0 : i32
    %c0_i32_1 = arith.constant 0 : i32
    return %c0_i32, %c0_i32_0 : i32, i32
  }
  func.func @transform_2(%arg0: i32) -> (i32, i32) {
    %c0_i32 = arith.constant 0 : i32
    %c0_i32_0 = arith.constant 0 : i32
    %c0_i32_1 = arith.constant 0 : i32
    return %c0_i32, %c0_i32_0 : i32, i32
  }
  func.func @transform_3(%arg0: i32) -> (i32, i32) {
    %c0_i32 = arith.constant 0 : i32
    %c0_i32_0 = arith.constant 0 : i32
    return %arg0, %c0_i32 : i32, i32
  }
}

module attributes {stable_mosaic.version = 11 : i64} {
  func.func @_matmul_bias_act_kernel(%arg0: i32, %arg1: memref<64x144xf32, #tpu.memory_space<vmem>>, %arg2: memref<144x128xf32, #tpu.memory_space<vmem>>, %arg3: memref<1x128xf32, #tpu.memory_space<vmem>>, %arg4: memref<64x128xf32, #tpu.memory_space<vmem>>) attributes {dimension_semantics = [#tpu.dimension_semantics<parallel>], iteration_bounds = array<i64: 2>, scalar_prefetch = 0 : i64, scratch_operands = 0 : i64, tpu.core_type = #tpu.core_type<tc>, window_params = [{transform_indices = @transform_0, window_bounds = array<i64: 64, 144>}, {pipeline_mode = #tpu.pipeline_mode<synchronous>, transform_indices = @transform_1, window_bounds = array<i64: 144, 128>}, {pipeline_mode = #tpu.pipeline_mode<synchronous>, transform_indices = @transform_2, window_bounds = array<i64: 1, 128>}, {transform_indices = @transform_3, window_bounds = array<i64: 64, 128>}]} {
    %c0 = arith.constant 0 : index
    %c0_0 = arith.constant 0 : index
    %0 = vector.load %arg1[%c0, %c0_0] : memref<64x144xf32, #tpu.memory_space<vmem>>, vector<64x144xf32>
    %c0_1 = arith.constant 0 : index
    %c0_2 = arith.constant 0 : index
    %1 = vector.load %arg2[%c0_1, %c0_2] : memref<144x128xf32, #tpu.memory_space<vmem>>, vector<144x128xf32>
    %cst = arith.constant dense<0.000000e+00> : vector<64x128xf32>
    %2 = tpu.matmul %0, %1, %cst {dimension_numbers = #tpu.dot_dimension_numbers<[1], [0], [0], [1], [0, 0, 1, 1], [], []>} : vector<64x144xf32>, vector<144x128xf32>, vector<64x128xf32> -> vector<64x128xf32>
    %c0_3 = arith.constant 0 : index
    %c0_4 = arith.constant 0 : index
    %3 = vector.load %arg3[%c0_3, %c0_4] : memref<1x128xf32, #tpu.memory_space<vmem>>, vector<1x128xf32>
    %4 = vector.broadcast %3 : vector<1x128xf32> to vector<64x128xf32>
    %5 = arith.addf %2, %4 : vector<64x128xf32>
    %cst_5 = arith.constant 0.000000e+00 : f32
    %6 = vector.broadcast %cst_5 : f32 to vector<64x128xf32>
    %7 = arith.maximumf %5, %6 : vector<64x128xf32>
    %c0_6 = arith.constant 0 : index
    %c0_7 = arith.constant 0 : index
    %8 = vector.load %arg4[%c0_6, %c0_7] : memref<64x128xf32, #tpu.memory_space<vmem>>, vector<64x128xf32>
    tpu.vector_store %arg4[%c0_6, %c0_7], %7 {strides = array<i32>} : memref<64x128xf32, #tpu.memory_space<vmem>>, vector<64x128xf32>,
    return
  }
  func.func @transform_0(%arg0: i32) -> (i32, i32) {
    %c0_i32 = arith.constant 0 : i32
    %c0_i32_0 = arith.constant 0 : i32
    return %arg0, %c0_i32 : i32, i32
  }
  func.func @transform_1(%arg0: i32) -> (i32, i32) {
    %c0_i32 = arith.constant 0 : i32
    %c0_i32_0 = arith.constant 0 : i32
    %c0_i32_1 = arith.constant 0 : i32
    return %c0_i32, %c0_i32_0 : i32, i32
  }
  func.func @transform_2(%arg0: i32) -> (i32, i32) {
    %c0_i32 = arith.constant 0 : i32
    %c0_i32_0 = arith.constant 0 : i32
    %c0_i32_1 = arith.constant 0 : i32
    return %c0_i32, %c0_i32_0 : i32, i32
  }
  func.func @transform_3(%arg0: i32) -> (i32, i32) {
    %c0_i32 = arith.constant 0 : i32
    %c0_i32_0 = arith.constant 0 : i32
    return %arg0, %c0_i32 : i32, i32
  }
}

module attributes {stable_mosaic.version = 11 : i64} {
  func.func @_matmul_bias_act_kernel(%arg0: i32, %arg1: memref<8x1568xf32, #tpu.memory_space<vmem>>, %arg2: memref<1568x128xf32, #tpu.memory_space<vmem>>, %arg3: memref<1x128xf32, #tpu.memory_space<vmem>>, %arg4: memref<8x128xf32, #tpu.memory_space<vmem>>) attributes {dimension_semantics = [#tpu.dimension_semantics<parallel>], iteration_bounds = array<i64: 1>, scalar_prefetch = 0 : i64, scratch_operands = 0 : i64, tpu.core_type = #tpu.core_type<tc>, window_params = [{transform_indices = @transform_0, window_bounds = array<i64: 8, 1568>}, {pipeline_mode = #tpu.pipeline_mode<synchronous>, transform_indices = @transform_1, window_bounds = array<i64: 1568, 128>}, {pipeline_mode = #tpu.pipeline_mode<synchronous>, transform_indices = @transform_2, window_bounds = array<i64: 1, 128>}, {transform_indices = @transform_3, window_bounds = array<i64: 8, 128>}]} {
    %c0 = arith.constant 0 : index
    %c0_0 = arith.constant 0 : index
    %0 = vector.load %arg1[%c0, %c0_0] : memref<8x1568xf32, #tpu.memory_space<vmem>>, vector<8x1568xf32>
    %c0_1 = arith.constant 0 : index
    %c0_2 = arith.constant 0 : index
    %1 = vector.load %arg2[%c0_1, %c0_2] : memref<1568x128xf32, #tpu.memory_space<vmem>>, vector<1568x128xf32>
    %cst = arith.constant dense<0.000000e+00> : vector<8x128xf32>
    %2 = tpu.matmul %0, %1, %cst {dimension_numbers = #tpu.dot_dimension_numbers<[1], [0], [0], [1], [0, 0, 1, 1], [], []>} : vector<8x1568xf32>, vector<1568x128xf32>, vector<8x128xf32> -> vector<8x128xf32>
    %c0_3 = arith.constant 0 : index
    %c0_4 = arith.constant 0 : index
    %3 = vector.load %arg3[%c0_3, %c0_4] : memref<1x128xf32, #tpu.memory_space<vmem>>, vector<1x128xf32>
    %4 = vector.broadcast %3 : vector<1x128xf32> to vector<8x128xf32>
    %5 = arith.addf %2, %4 : vector<8x128xf32>
    %c0_5 = arith.constant 0 : index
    %c0_6 = arith.constant 0 : index
    %6 = vector.load %arg4[%c0_5, %c0_6] : memref<8x128xf32, #tpu.memory_space<vmem>>, vector<8x128xf32>
    tpu.vector_store %arg4[%c0_5, %c0_6], %5 {strides = array<i32>} : memref<8x128xf32, #tpu.memory_space<vmem>>, vector<8x128xf32>,
    return
  }
  func.func @transform_0(%arg0: i32) -> (i32, i32) {
    %c0_i32 = arith.constant 0 : i32
    %c0_i32_0 = arith.constant 0 : i32
    return %arg0, %c0_i32 : i32, i32
  }
  func.func @transform_1(%arg0: i32) -> (i32, i32) {
    %c0_i32 = arith.constant 0 : i32
    %c0_i32_0 = arith.constant 0 : i32
    %c0_i32_1 = arith.constant 0 : i32
    return %c0_i32, %c0_i32_0 : i32, i32
  }
  func.func @transform_2(%arg0: i32) -> (i32, i32) {
    %c0_i32 = arith.constant 0 : i32
    %c0_i32_0 = arith.constant 0 : i32
    %c0_i32_1 = arith.constant 0 : i32
    return %c0_i32, %c0_i32_0 : i32, i32
  }
  func.func @transform_3(%arg0: i32) -> (i32, i32) {
    %c0_i32 = arith.constant 0 : i32
    %c0_i32_0 = arith.constant 0 : i32
    return %arg0, %c0_i32 : i32, i32
  }
}

module attributes {stable_mosaic.version = 11 : i64} {
  func.func @_matmul_bias_act_kernel(%arg0: i32, %arg1: memref<32x1024xf32, #tpu.memory_space<vmem>>, %arg2: memref<1024x128xf32, #tpu.memory_space<vmem>>, %arg3: memref<1x128xf32, #tpu.memory_space<vmem>>, %arg4: memref<32x128xf32, #tpu.memory_space<vmem>>) attributes {dimension_semantics = [#tpu.dimension_semantics<parallel>], iteration_bounds = array<i64: 2>, scalar_prefetch = 0 : i64, scratch_operands = 0 : i64, tpu.core_type = #tpu.core_type<tc>, window_params = [{transform_indices = @transform_0, window_bounds = array<i64: 32, 1024>}, {pipeline_mode = #tpu.pipeline_mode<synchronous>, transform_indices = @transform_1, window_bounds = array<i64: 1024, 128>}, {pipeline_mode = #tpu.pipeline_mode<synchronous>, transform_indices = @transform_2, window_bounds = array<i64: 1, 128>}, {transform_indices = @transform_3, window_bounds = array<i64: 32, 128>}]} {
    %c0 = arith.constant 0 : index
    %c0_0 = arith.constant 0 : index
    %0 = vector.load %arg1[%c0, %c0_0] : memref<32x1024xf32, #tpu.memory_space<vmem>>, vector<32x1024xf32>
    %c0_1 = arith.constant 0 : index
    %c0_2 = arith.constant 0 : index
    %1 = vector.load %arg2[%c0_1, %c0_2] : memref<1024x128xf32, #tpu.memory_space<vmem>>, vector<1024x128xf32>
    %cst = arith.constant dense<0.000000e+00> : vector<32x128xf32>
    %2 = tpu.matmul %0, %1, %cst {dimension_numbers = #tpu.dot_dimension_numbers<[1], [0], [0], [1], [0, 0, 1, 1], [], []>} : vector<32x1024xf32>, vector<1024x128xf32>, vector<32x128xf32> -> vector<32x128xf32>
    %c0_3 = arith.constant 0 : index
    %c0_4 = arith.constant 0 : index
    %3 = vector.load %arg3[%c0_3, %c0_4] : memref<1x128xf32, #tpu.memory_space<vmem>>, vector<1x128xf32>
    %4 = vector.broadcast %3 : vector<1x128xf32> to vector<32x128xf32>
    %5 = arith.addf %2, %4 : vector<32x128xf32>
    %cst_5 = arith.constant 0.000000e+00 : f32
    %6 = vector.broadcast %cst_5 : f32 to vector<32x128xf32>
    %7 = arith.maximumf %5, %6 : vector<32x128xf32>
    %c0_6 = arith.constant 0 : index
    %c0_7 = arith.constant 0 : index
    %8 = vector.load %arg4[%c0_6, %c0_7] : memref<32x128xf32, #tpu.memory_space<vmem>>, vector<32x128xf32>
    tpu.vector_store %arg4[%c0_6, %c0_7], %7 {strides = array<i32>} : memref<32x128xf32, #tpu.memory_space<vmem>>, vector<32x128xf32>,
    return
  }
  func.func @transform_0(%arg0: i32) -> (i32, i32) {
    %c0_i32 = arith.constant 0 : i32
    %c0_i32_0 = arith.constant 0 : i32
    return %arg0, %c0_i32 : i32, i32
  }
  func.func @transform_1(%arg0: i32) -> (i32, i32) {
    %c0_i32 = arith.constant 0 : i32
    %c0_i32_0 = arith.constant 0 : i32
    %c0_i32_1 = arith.constant 0 : i32
    return %c0_i32, %c0_i32_0 : i32, i32
  }
  func.func @transform_2(%arg0: i32) -> (i32, i32) {
    %c0_i32 = arith.constant 0 : i32
    %c0_i32_0 = arith.constant 0 : i32
    %c0_i32_1 = arith.constant 0 : i32
    return %c0_i32, %c0_i32_0 : i32, i32
  }
  func.func @transform_3(%arg0: i32) -> (i32, i32) {
    %c0_i32 = arith.constant 0 : i32
    %c0_i32_0 = arith.constant 0 : i32
    return %arg0, %c0_i32 : i32, i32
  }
}

module attributes {stable_mosaic.version = 11 : i64} {
  func.func @_matmul_bias_act_kernel(%arg0: i32, %arg1: memref<88x128xf32, #tpu.memory_space<vmem>>, %arg2: memref<128x128xf32, #tpu.memory_space<vmem>>, %arg3: memref<1x128xf32, #tpu.memory_space<vmem>>, %arg4: memref<88x128xf32, #tpu.memory_space<vmem>>) attributes {dimension_semantics = [#tpu.dimension_semantics<parallel>], iteration_bounds = array<i64: 2>, scalar_prefetch = 0 : i64, scratch_operands = 0 : i64, tpu.core_type = #tpu.core_type<tc>, window_params = [{transform_indices = @transform_0, window_bounds = array<i64: 88, 128>}, {pipeline_mode = #tpu.pipeline_mode<synchronous>, transform_indices = @transform_1, window_bounds = array<i64: 128, 128>}, {pipeline_mode = #tpu.pipeline_mode<synchronous>, transform_indices = @transform_2, window_bounds = array<i64: 1, 128>}, {transform_indices = @transform_3, window_bounds = array<i64: 88, 128>}]} {
    %c0 = arith.constant 0 : index
    %c0_0 = arith.constant 0 : index
    %0 = vector.load %arg1[%c0, %c0_0] : memref<88x128xf32, #tpu.memory_space<vmem>>, vector<88x128xf32>
    %c0_1 = arith.constant 0 : index
    %c0_2 = arith.constant 0 : index
    %1 = vector.load %arg2[%c0_1, %c0_2] : memref<128x128xf32, #tpu.memory_space<vmem>>, vector<128x128xf32>
    %cst = arith.constant dense<0.000000e+00> : vector<88x128xf32>
    %2 = tpu.matmul %0, %1, %cst {dimension_numbers = #tpu.dot_dimension_numbers<[1], [0], [0], [1], [0, 0, 1, 1], [], []>} : vector<88x128xf32>, vector<128x128xf32>, vector<88x128xf32> -> vector<88x128xf32>
    %c0_3 = arith.constant 0 : index
    %c0_4 = arith.constant 0 : index
    %3 = vector.load %arg3[%c0_3, %c0_4] : memref<1x128xf32, #tpu.memory_space<vmem>>, vector<1x128xf32>
    %4 = vector.broadcast %3 : vector<1x128xf32> to vector<88x128xf32>
    %5 = arith.addf %2, %4 : vector<88x128xf32>
    %cst_5 = arith.constant 0.000000e+00 : f32
    %6 = vector.broadcast %cst_5 : f32 to vector<88x128xf32>
    %7 = arith.maximumf %5, %6 : vector<88x128xf32>
    %c0_6 = arith.constant 0 : index
    %c0_7 = arith.constant 0 : index
    %8 = vector.load %arg4[%c0_6, %c0_7] : memref<88x128xf32, #tpu.memory_space<vmem>>, vector<88x128xf32>
    tpu.vector_store %arg4[%c0_6, %c0_7], %7 {strides = array<i32>} : memref<88x128xf32, #tpu.memory_space<vmem>>, vector<88x128xf32>,
    return
  }
  func.func @transform_0(%arg0: i32) -> (i32, i32) {
    %c0_i32 = arith.constant 0 : i32
    %c0_i32_0 = arith.constant 0 : i32
    return %arg0, %c0_i32 : i32, i32
  }
  func.func @transform_1(%arg0: i32) -> (i32, i32) {
    %c0_i32 = arith.constant 0 : i32
    %c0_i32_0 = arith.constant 0 : i32
    %c0_i32_1 = arith.constant 0 : i32
    return %c0_i32, %c0_i32_0 : i32, i32
  }
  func.func @transform_2(%arg0: i32) -> (i32, i32) {
    %c0_i32 = arith.constant 0 : i32
    %c0_i32_0 = arith.constant 0 : i32
    %c0_i32_1 = arith.constant 0 : i32
    return %c0_i32, %c0_i32_0 : i32, i32
  }
  func.func @transform_3(%arg0: i32) -> (i32, i32) {
    %c0_i32 = arith.constant 0 : i32
    %c0_i32_0 = arith.constant 0 : i32
    return %arg0, %c0_i32 : i32, i32
  }
}

module attributes {stable_mosaic.version = 11 : i64} {
  func.func @_matmul_bias_act_kernel(%arg0: i32, %arg1: memref<296x64xf32, #tpu.memory_space<vmem>>, %arg2: memref<64x128xf32, #tpu.memory_space<vmem>>, %arg3: memref<1x128xf32, #tpu.memory_space<vmem>>, %arg4: memref<296x128xf32, #tpu.memory_space<vmem>>) attributes {dimension_semantics = [#tpu.dimension_semantics<parallel>], iteration_bounds = array<i64: 2>, scalar_prefetch = 0 : i64, scratch_operands = 0 : i64, tpu.core_type = #tpu.core_type<tc>, window_params = [{transform_indices = @transform_0, window_bounds = array<i64: 296, 64>}, {pipeline_mode = #tpu.pipeline_mode<synchronous>, transform_indices = @transform_1, window_bounds = array<i64: 64, 128>}, {pipeline_mode = #tpu.pipeline_mode<synchronous>, transform_indices = @transform_2, window_bounds = array<i64: 1, 128>}, {transform_indices = @transform_3, window_bounds = array<i64: 296, 128>}]} {
    %c0 = arith.constant 0 : index
    %c0_0 = arith.constant 0 : index
    %0 = vector.load %arg1[%c0, %c0_0] : memref<296x64xf32, #tpu.memory_space<vmem>>, vector<296x64xf32>
    %c0_1 = arith.constant 0 : index
    %c0_2 = arith.constant 0 : index
    %1 = vector.load %arg2[%c0_1, %c0_2] : memref<64x128xf32, #tpu.memory_space<vmem>>, vector<64x128xf32>
    %cst = arith.constant dense<0.000000e+00> : vector<296x128xf32>
    %2 = tpu.matmul %0, %1, %cst {dimension_numbers = #tpu.dot_dimension_numbers<[1], [0], [0], [1], [0, 0, 1, 1], [], []>} : vector<296x64xf32>, vector<64x128xf32>, vector<296x128xf32> -> vector<296x128xf32>
    %c0_3 = arith.constant 0 : index
    %c0_4 = arith.constant 0 : index
    %3 = vector.load %arg3[%c0_3, %c0_4] : memref<1x128xf32, #tpu.memory_space<vmem>>, vector<1x128xf32>
    %4 = vector.broadcast %3 : vector<1x128xf32> to vector<296x128xf32>
    %5 = arith.addf %2, %4 : vector<296x128xf32>
    %6 = arith.negf %5 : vector<296x128xf32>
    %7 = math.exp %6 : vector<296x128xf32>
    %cst_5 = arith.constant 1.000000e+00 : f32
    %8 = vector.broadcast %cst_5 : f32 to vector<296x128xf32>
    %9 = arith.addf %8, %7 : vector<296x128xf32>
    %10 = arith.divf %8, %9 : vector<296x128xf32>
    %c0_6 = arith.constant 0 : index
    %c0_7 = arith.constant 0 : index
    %11 = vector.load %arg4[%c0_6, %c0_7] : memref<296x128xf32, #tpu.memory_space<vmem>>, vector<296x128xf32>
    tpu.vector_store %arg4[%c0_6, %c0_7], %10 {strides = array<i32>} : memref<296x128xf32, #tpu.memory_space<vmem>>, vector<296x128xf32>,
    return
  }
  func.func @transform_0(%arg0: i32) -> (i32, i32) {
    %c0_i32 = arith.constant 0 : i32
    %c0_i32_0 = arith.constant 0 : i32
    return %arg0, %c0_i32 : i32, i32
  }
  func.func @transform_1(%arg0: i32) -> (i32, i32) {
    %c0_i32 = arith.constant 0 : i32
    %c0_i32_0 = arith.constant 0 : i32
    %c0_i32_1 = arith.constant 0 : i32
    return %c0_i32, %c0_i32_0 : i32, i32
  }
  func.func @transform_2(%arg0: i32) -> (i32, i32) {
    %c0_i32 = arith.constant 0 : i32
    %c0_i32_0 = arith.constant 0 : i32
    %c0_i32_1 = arith.constant 0 : i32
    return %c0_i32, %c0_i32_0 : i32, i32
  }
  func.func @transform_3(%arg0: i32) -> (i32, i32) {
    %c0_i32 = arith.constant 0 : i32
    %c0_i32_0 = arith.constant 0 : i32
    return %arg0, %c0_i32 : i32, i32
  }
}

</mosaic_0001>

<llo_original>
// kernel: autoencoder_forward.9
$region0: #{autoencoder_forward.9}
  #allocation0 [shape = 'u32[]', space=smem, size = 0x4, offset = 0x4, fixed_abs, tag = 'smem constant byte address 0x4 - core index']
  #allocation1 [shape = 'u32[144,128]{1,0:T(1,128)}', space=vmem, size = 0x12000, scoped, tag = 'internal scratch']
  %s0 = inlined_call_operand.vmem [shape: f32[512,27], index: 0, kind: input, shape index: {}]
  %s1 = inlined_call_operand.vmem [shape: f32[27,128], index: 1, kind: input, shape index: {}]
  %s2 = inlined_call_operand.vmem [shape: f32[1,128], index: 2, kind: input, shape index: {}]
  %s3 = inlined_call_operand.vmem [shape: f32[512,128], index: 3, kind: output, shape index: {}]
  %s4 = sld [smem:[#allocation0]]
  $region45: #{autoencoder_forward.9} parent=0
    _
  %s6 = ssub.s32 1, %s4
  %s7 = scalar_select 0, %s6, %s4
  loop: start=0, step=1, limit=4
  $region2: #{autoencoder_forward.9} parent=0 // loop_pre_header
    _
  $region3: #{autoencoder_forward.9} parent=0 // loop_header
    %s9 = sphi 0, %s13
    %p10 = scmp.ge.s32.totalorder %s9, 4
    %s19 = sphi 0, %s21
    %s22 = sphi 0, %s19
    %s23 = sphi 0, %s22
    %s39 = sphi 0, %s23
    %s43 = sphi 0, %s43
    %s45 = sphi 0, %s43
    %s46 = sphi 0, %s45
    %s60 = sphi 0, %s46
    %s64 = sphi 0, %s64
    %s66 = sphi 0, %s64
    %s67 = sphi 0, %s66
    %s81 = sphi 0, %s67
    %s87 = sphi 0, %s89
    %s90 = sphi 0, %s87
    %s91 = sphi 0, %s90
    %s107 = sphi 0, %s91
  $region4: #{autoencoder_forward.9} parent=0 // loop_header_branch
    %12 = sbr.rel (%p10) target = $region8
  $region5: #{autoencoder_forward.9} parent=0 // loop_body
    %s14 = ssub.s32 %s9, 1
    %s15 = ssub.s32 %s9, 2
    %s16 = sadd.s32 %s9, 1
    %s17 = ssub.s32 %s9, %s16
    %p18 = scmp.eq.s32.totalorder %s17, 0
    %s20 = sadd.s32 %s19, 1
    %s21 = scalar_select %p18, %s19, %s20
    %p24 = pneg %p18
    %p25 = scmp.eq.s32.totalorder %s9, 1
    %p26 = por %p24, %p25
    %p27 = scmp.ne.s32.totalorder %s19, %s22
    %p28 = scmp.eq.s32.totalorder %s9, 0
    %p29 = por %p27, %p28
    %p30 = scmp.ne.s32.totalorder %s19, %s22
    %p31 = scmp.eq.s32.totalorder %s14, 1
    %p32 = por %p30, %p31
    %p33 = scmp.ne.s32.totalorder %s22, %s23
    %p34 = scmp.eq.s32.totalorder %s14, 0
    %p35 = por %p33, %p34
    %p36 = scmp.ne.s32.totalorder %s22, %s23
    %p37 = scmp.eq.s32.totalorder %s15, 1
    %p38 = por %p36, %p37
    %p40 = scmp.ne.s32.totalorder %s23, %s39
    %p41 = scmp.eq.s32.totalorder %s15, 0
    %p42 = por %p40, %p41
    %s44 = sadd.s32 %s43, 1
    %p47 = scmp.eq.s32.totalorder %s9, 1
    %p48 = scmp.ne.s32.totalorder %s43, %s45
    %p49 = scmp.eq.s32.totalorder %s9, 0
    %p50 = por %p48, %p49
    %p51 = scmp.ne.s32.totalorder %s43, %s45
    %p52 = scmp.eq.s32.totalorder %s14, 1
    %p53 = por %p51, %p52
    %p54 = scmp.ne.s32.totalorder %s45, %s46
    %p55 = scmp.eq.s32.totalorder %s14, 0
    %p56 = por %p54, %p55
    %p57 = scmp.ne.s32.totalorder %s45, %s46
    %p58 = scmp.eq.s32.totalorder %s15, 1
    %p59 = por %p57, %p58
    %p61 = scmp.ne.s32.totalorder %s46, %s60
    %p62 = scmp.eq.s32.totalorder %s15, 0
    %p63 = por %p61, %p62
    %s65 = sadd.s32 %s64, 1
    %p68 = scmp.eq.s32.totalorder %s9, 1
    %p69 = scmp.ne.s32.totalorder %s64, %s66
    %p70 = scmp.eq.s32.totalorder %s9, 0
    %p71 = por %p69, %p70
    %p72 = scmp.ne.s32.totalorder %s64, %s66
    %p73 = scmp.eq.s32.totalorder %s14, 1
    %p74 = por %p72, %p73
    %p75 = scmp.ne.s32.totalorder %s66, %s67
    %p76 = scmp.eq.s32.totalorder %s14, 0
    %p77 = por %p75, %p76
    %p78 = scmp.ne.s32.totalorder %s66, %s67
    %p79 = scmp.eq.s32.totalorder %s15, 1
    %p80 = por %p78, %p79
    %p82 = scmp.ne.s32.totalorder %s67, %s81
    %p83 = scmp.eq.s32.totalorder %s15, 0
    %p84 = por %p82, %p83
    %s85 = ssub.s32 %s9, %s16
    %p86 = scmp.eq.s32.totalorder %s85, 0
    %s88 = sadd.s32 %s87, 1
    %s89 = scalar_select %p86, %s87, %s88
    %p92 = pneg %p86
    %p93 = scmp.eq.s32.totalorder %s9, 1
    %p94 = por %p92, %p93
    %p95 = scmp.ne.s32.totalorder %s87, %s90
    %p96 = scmp.eq.s32.totalorder %s9, 0
    %p97 = por %p95, %p96
    %p98 = scmp.ne.s32.totalorder %s87, %s90
    %p99 = scmp.eq.s32.totalorder %s14, 1
    %p100 = por %p98, %p99
    %p101 = scmp.ne.s32.totalorder %s90, %s91
    %p102 = scmp.eq.s32.totalorder %s14, 0
    %p103 = por %p101, %p102
    %p104 = scmp.ne.s32.totalorder %s90, %s91
    %p105 = scmp.eq.s32.totalorder %s15, 1
    %p106 = por %p104, %p105
    %p108 = scmp.ne.s32.totalorder %s91, %s107
    %p109 = scmp.eq.s32.totalorder %s15, 0
    %p110 = por %p108, %p109
    %p111 = scmp.le.s32.totalorder 1, %s9
    %p112 = scmp.lt.s32.totalorder %s9, 3
    %p113 = pnand %p111, %p112
    %p114 = pneg %p113
    // Predicated region
    $region9: #{autoencoder_forward.9} parent=5 // pred_check
      _
    $region10: #{autoencoder_forward.9} parent=5 // pred_check_branch
      %116 = sbr.rel (%p113) target = $region12
    $region11: #{autoencoder_forward.9} parent=5 // pred_region
      %s117 = ssub.s32 %s9, 1
      // Predicated region
      $region13: #{autoencoder_forward.9} parent=11 // pred_check
        %p118 = pneg %p56
      $region14: #{autoencoder_forward.9} parent=11 // pred_check_branch
        %120 = sbr.rel (%p118) target = $region16
      $region15: #{autoencoder_forward.9} parent=11 // pred_region
        _
      $region16: #{autoencoder_forward.9} parent=11 // pred_fallthru
        _
      // Predicated region
      $region17: #{autoencoder_forward.9} parent=11 // pred_check
        %p121 = pneg %p77
      $region18: #{autoencoder_forward.9} parent=11 // pred_check_branch
        %123 = sbr.rel (%p121) target = $region20
      $region19: #{autoencoder_forward.9} parent=11 // pred_region
        _
      $region20: #{autoencoder_forward.9} parent=11 // pred_fallthru
        _
    $region12: #{autoencoder_forward.9} parent=5 // pred_fallthru
      _
    %p124 = scmp.lt.s32.totalorder %s9, 2
    // Predicated region
    $region21: #{autoencoder_forward.9} parent=5 // pred_check
      %p125 = pneg %p124
    $region22: #{autoencoder_forward.9} parent=5 // pred_check_branch
      %127 = sbr.rel (%p125) target = $region24
    $region23: #{autoencoder_forward.9} parent=5 // pred_region
      // Predicated region
      $region25: #{autoencoder_forward.9} parent=23 // pred_check
        %p128 = pneg %p29
      $region26: #{autoencoder_forward.9} parent=23 // pred_check_branch
        %130 = sbr.rel (%p128) target = $region28
      $region27: #{autoencoder_forward.9} parent=23 // pred_region
        %s131 = smul.u32 32, %s9
        %p132 = scmp.lt.s32.totalorder %s131, 63
        %s133 = scalar_select %p132, %s131, 63
        %s134 = smul.addr %s133, 8
        %s135 = scalar_lea.vmem %s0, %s134
        %s136 = smul.u32 32, %s9
      $region28: #{autoencoder_forward.9} parent=23 // pred_fallthru
        _
    $region24: #{autoencoder_forward.9} parent=5 // pred_fallthru
      _
    %p137 = scmp.le.s32.totalorder 1, %s9
    %p138 = scmp.lt.s32.totalorder %s9, 3
    %p139 = pnand %p137, %p138
    %p140 = pneg %p139
    // Predicated region
    $region29: #{autoencoder_forward.9} parent=5 // pred_check
      _
    $region30: #{autoencoder_forward.9} parent=5 // pred_check_branch
      %142 = sbr.rel (%p139) target = $region32
    $region31: #{autoencoder_forward.9} parent=5 // pred_region
      %s143 = ssub.s32 %s9, 1
      %s144 = smul.u32 32, %s14
      %p145 = scmp.lt.s32.totalorder %s144, 63
      %s146 = scalar_select %p145, %s144, 63
      %s147 = smul.addr %s146, 8
      %s148 = scalar_lea.vmem %s0, %s147
      %p149 = pneg %p35
      %p150 = pneg %p32
      %p151 = pneg %p56
      %p152 = pneg %p53
      %p153 = pneg %p77
      %p154 = pneg %p74
      %p155 = pneg %p103
      %p156 = pneg %p100
      %s157 = smul.u32 32, %s14
      %p158 = scmp.lt.s32.totalorder %s157, 63
      %s159 = scalar_select %p158, %s157, 63
      %s160 = smul.addr %s159, 8
      %s161 = scalar_lea.vmem %s3, %s160
      %s162 = smul.u32 32, %s14
      %p163 = scmp.lt.s32.totalorder %s162, 63
      %s164 = scalar_select %p163, %s162, 63
      %s165 = smul.addr %s164, 8
      %s166 = scalar_lea.vmem %s0, %s165
      %s167 = smul.u32 32, %s14
      %s168 = smul.u32 32, %s14
      %p169 = scmp.lt.s32.totalorder %s168, 63
      %s170 = scalar_select %p169, %s168, 63
      %s171 = smul.addr %s170, 8
      %s172 = scalar_lea.vmem %s3, %s171
      %s173 = smul.u32 32, %s14
      %v174 = vld [vmem:[%s166] sm:$0xff]
      %v175 = vld [vmem:[%s166 + $0x8] sm:$0xff]
      %v176 = vld [vmem:[%s166 + $0x10] sm:$0xff]
      %v177 = vld [vmem:[%s166 + $0x18] sm:$0xff]
      %v178 = vld [vmem:[%s166 + $0x20] sm:$0xff]
      %v179 = vld [vmem:[%s166 + $0x28] sm:$0xff]
      %v180 = vld [vmem:[%s166 + $0x30] sm:$0xff]
      %v181 = vld [vmem:[%s166 + $0x38] sm:$0xff]
      %v182 = vld [vmem:[%s166 + $0x40] sm:$0xff]
      %v183 = vld [vmem:[%s166 + $0x48] sm:$0xff]
      %v184 = vld [vmem:[%s166 + $0x50] sm:$0xff]
      %v185 = vld [vmem:[%s166 + $0x58] sm:$0xff]
      %v186 = vld [vmem:[%s166 + $0x60] sm:$0xff]
      %v187 = vld [vmem:[%s166 + $0x68] sm:$0xff]
      %v188 = vld [vmem:[%s166 + $0x70] sm:$0xff]
      %v189 = vld [vmem:[%s166 + $0x78] sm:$0xff]
      %v190 = vld [vmem:[%s166 + $0x80] sm:$0xff]
      %v191 = vld [vmem:[%s166 + $0x88] sm:$0xff]
      %v192 = vld [vmem:[%s166 + $0x90] sm:$0xff]
      %v193 = vld [vmem:[%s166 + $0x98] sm:$0xff]
      %v194 = vld [vmem:[%s166 + $0xa0] sm:$0xff]
      %v195 = vld [vmem:[%s166 + $0xa8] sm:$0xff]
      %v196 = vld [vmem:[%s166 + $0xb0] sm:$0xff]
      %v197 = vld [vmem:[%s166 + $0xb8] sm:$0xff]
      %v198 = vld [vmem:[%s166 + $0xc0] sm:$0xff]
      %v199 = vld [vmem:[%s166 + $0xc8] sm:$0xff]
      %v200 = vld [vmem:[%s166 + $0xd0] sm:$0xff]
      %v201 = vld [vmem:[%s166 + $0xd8] sm:$0xff]
      %v202 = vld [vmem:[%s166 + $0xe0] sm:$0xff]
      %v203 = vld [vmem:[%s166 + $0xe8] sm:$0xff]
      %v204 = vld [vmem:[%s166 + $0xf0] sm:$0xff]
      %v205 = vld [vmem:[%s166 + $0xf8] sm:$0xff]
      %v206 = vld [vmem:[%s1] sm:$0xff]
      %v207 = vld [vmem:[%s1 + $0x8] sm:$0xff]
      %v208 = vld [vmem:[%s1 + $0x10] sm:$0xff]
      %v209 = vld [vmem:[%s1 + $0x18] sm:$0x7]
      %v210 = vld [vmem:[%s2] sm:$0x1]
      %v212 = vlaneseq
      %v213 = vshrl.u32 %v212, 7
      %v214 = vsub.s32 0, %v213
      %v215 = vrot.slane %v210, %v214
      %vm217 = vcmask 220160
      %v219 = vsel %vm217, %v174, 0
      %v222 = vsel %vm217, %v175, 0
      %v225 = vsel %vm217, %v176, 0
      %v228 = vsel %vm217, %v177, 0
      %v231 = vsel %vm217, %v178, 0
      %v234 = vsel %vm217, %v179, 0
      %v237 = vsel %vm217, %v180, 0
      %v240 = vsel %vm217, %v181, 0
      %v243 = vsel %vm217, %v182, 0
      %v246 = vsel %vm217, %v183, 0
      %v249 = vsel %vm217, %v184, 0
      %v252 = vsel %vm217, %v185, 0
      %v255 = vsel %vm217, %v186, 0
      %v258 = vsel %vm217, %v187, 0
      %v261 = vsel %vm217, %v188, 0
      %v264 = vsel %vm217, %v189, 0
      %v267 = vsel %vm217, %v190, 0
      %v270 = vsel %vm217, %v191, 0
      %v273 = vsel %vm217, %v192, 0
      %v276 = vsel %vm217, %v193, 0
      %v279 = vsel %vm217, %v194, 0
      %v282 = vsel %vm217, %v195, 0
      %v285 = vsel %vm217, %v196, 0
      %v288 = vsel %vm217, %v197, 0
      %v291 = vsel %vm217, %v198, 0
      %v294 = vsel %vm217, %v199, 0
      %v297 = vsel %vm217, %v200, 0
      %v300 = vsel %vm217, %v201, 0
      %v303 = vsel %vm217, %v202, 0
      %v306 = vsel %vm217, %v203, 0
      %v309 = vsel %vm217, %v204, 0
      %v312 = vsel %vm217, %v205, 0
      %vm314 = vcmask 1042432
      %v316 = vsel %vm314, %v209, 0
      %318 = vmatprep.subr.mxu0 0.0
      %319 = vmatpush1.msra.mxu0 %v206
      %320 = vmatprep.subr.mxu0 0.0
      %321 = vmatpush1.msra.mxu0 %v207
      %322 = vmatprep.subr.mxu0 0.0
      %323 = vmatpush1.msra.mxu0 %v208
      %324 = vmatprep.subr.mxu0 0.0
      %325 = vmatpush1.msra.mxu0 %v316
      %326 = vmatprep.subr.mxu0 0.0
      %327 = vmatpush1.msra.mxu0 0.0
      %328 = vmatprep.subr.mxu0 0.0
      %329 = vmatpush1.msra.mxu0 0.0
      %330 = vmatprep.subr.mxu0 0.0
      %331 = vmatpush1.msra.mxu0 0.0
      %332 = vmatprep.subr.mxu0 0.0
      %333 = vmatpush1.msra.mxu0 0.0
      %334 = vmatprep.subr.mxu0 0.0
      %335 = vmatpush1.msra.mxu0 0.0
      %336 = vmatprep.subr.mxu0 0.0
      %337 = vmatpush1.msra.mxu0 0.0
      %338 = vmatprep.subr.mxu0 0.0
      %339 = vmatpush1.msra.mxu0 0.0
      %340 = vmatprep.subr.mxu0 0.0
      %341 = vmatpush1.msra.mxu0 0.0
      %342 = vmatprep.subr.mxu0 0.0
      %343 = vmatpush1.msra.mxu0 0.0
      %344 = vmatprep.subr.mxu0 0.0
      %345 = vmatpush1.msra.mxu0 0.0
      %346 = vmatprep.subr.mxu0 0.0
      %347 = vmatpush1.msra.mxu0 0.0
      %348 = vmatprep.subr.mxu0 0.0
      %349 = vmatpush1.msra.mxu0 0.0
      %350 = vmatprep.subr.mxu0 0.0
      %351 = vmatpush1.msra.mxu0 0.0
      %352 = vmatprep.subr.mxu0 0.0
      %353 = vmatpush1.msra.mxu0 0.0
      %354 = vmatprep.subr.mxu0 0.0
      %355 = vmatpush1.msra.mxu0 0.0
      %356 = vmatprep.subr.mxu0 0.0
      %357 = vmatpush1.msra.mxu0 0.0
      %358 = vmatprep.subr.mxu0 0.0
      %359 = vmatpush1.msra.mxu0 0.0
      %360 = vmatprep.subr.mxu0 0.0
      %361 = vmatpush1.msra.mxu0 0.0
      %362 = vmatprep.subr.mxu0 0.0
      %363 = vmatpush1.msra.mxu0 0.0
      %364 = vmatprep.subr.mxu0 0.0
      %365 = vmatpush1.msra.mxu0 0.0
      %366 = vmatprep.subr.mxu0 0.0
      %367 = vmatpush1.msra.mxu0 0.0
      %368 = vmatprep.subr.mxu0 0.0
      %369 = vmatpush1.msra.mxu0 0.0
      %370 = vmatprep.subr.mxu0 0.0
      %371 = vmatpush1.msra.mxu0 0.0
      %372 = vmatprep.subr.mxu0 0.0
      %373 = vmatpush1.msra.mxu0 0.0
      %374 = vmatprep.subr.mxu0 0.0
      %375 = vmatpush1.msra.mxu0 0.0
      %376 = vmatprep.subr.mxu0 0.0
      %377 = vmatpush1.msra.mxu0 0.0
      %378 = vmatprep.subr.mxu0 0.0
      %379 = vmatpush1.msra.mxu0 0.0
      %380 = vmatprep.subr.mxu0 0.0
      %381 = vmatpush1.msra.mxu0 0.0
      %382 = vmatprep.mubr.f32.mxu0 0.0
      %383 = vmatmul.mubr.f32.gmra.mrb[0].mxu0 %v219
      %v384 = vpop.f32.mrb[0].mxu0
      %v385 = vadd.f32 %v215, %v384
      %v386 = vpop.f32.mrb[0].mxu0
      %387 = vmatprep.mubr.f32.mxu0 0.0
      %388 = vmatmul.mubr.f32.gmra.mrb[0].mxu0 %v222
      %v389 = vpop.f32.mrb[0].mxu0
      %v390 = vadd.f32 %v215, %v389
      %v391 = vpop.f32.mrb[0].mxu0
      %392 = vmatprep.mubr.f32.mxu0 0.0
      %393 = vmatmul.mubr.f32.gmra.mrb[0].mxu0 %v225
      %v394 = vpop.f32.mrb[0].mxu0
      %v395 = vadd.f32 %v215, %v394
      %v396 = vpop.f32.mrb[0].mxu0
      %397 = vmatprep.mubr.f32.mxu0 0.0
      %398 = vmatmul.mubr.f32.gmra.mrb[0].mxu0 %v228
      %v399 = vpop.f32.mrb[0].mxu0
      %v400 = vadd.f32 %v215, %v399
      %v401 = vpop.f32.mrb[0].mxu0
      %402 = vmatprep.mubr.f32.mxu0 0.0
      %403 = vmatmul.mubr.f32.gmra.mrb[0].mxu0 %v231
      %v404 = vpop.f32.mrb[0].mxu0
      %v405 = vadd.f32 %v215, %v404
      %v406 = vpop.f32.mrb[0].mxu0
      %407 = vmatprep.mubr.f32.mxu0 0.0
      %408 = vmatmul.mubr.f32.gmra.mrb[0].mxu0 %v234
      %v409 = vpop.f32.mrb[0].mxu0
      %v410 = vadd.f32 %v215, %v409
      %v411 = vpop.f32.mrb[0].mxu0
      %412 = vmatprep.mubr.f32.mxu0 0.0
      %413 = vmatmul.mubr.f32.gmra.mrb[0].mxu0 %v237
      %v414 = vpop.f32.mrb[0].mxu0
      %v415 = vadd.f32 %v215, %v414
      %v416 = vpop.f32.mrb[0].mxu0
      %417 = vmatprep.mubr.f32.mxu0 0.0
      %418 = vmatmul.mubr.f32.gmra.mrb[0].mxu0 %v240
      %v419 = vpop.f32.mrb[0].mxu0
      %v420 = vadd.f32 %v215, %v419
      %v421 = vpop.f32.mrb[0].mxu0
      %422 = vmatprep.mubr.f32.mxu0 0.0
      %423 = vmatmul.mubr.f32.gmra.mrb[0].mxu0 %v243
      %v424 = vpop.f32.mrb[0].mxu0
      %v425 = vadd.f32 %v215, %v424
      %v426 = vpop.f32.mrb[0].mxu0
      %427 = vmatprep.mubr.f32.mxu0 0.0
      %428 = vmatmul.mubr.f32.gmra.mrb[0].mxu0 %v246
      %v429 = vpop.f32.mrb[0].mxu0
      %v430 = vadd.f32 %v215, %v429
      %v431 = vpop.f32.mrb[0].mxu0
      %432 = vmatprep.mubr.f32.mxu0 0.0
      %433 = vmatmul.mubr.f32.gmra.mrb[0].mxu0 %v249
      %v434 = vpop.f32.mrb[0].mxu0
      %v435 = vadd.f32 %v215, %v434
      %v436 = vpop.f32.mrb[0].mxu0
      %437 = vmatprep.mubr.f32.mxu0 0.0
      %438 = vmatmul.mubr.f32.gmra.mrb[0].mxu0 %v252
      %v439 = vpop.f32.mrb[0].mxu0
      %v440 = vadd.f32 %v215, %v439
      %v441 = vpop.f32.mrb[0].mxu0
      %442 = vmatprep.mubr.f32.mxu0 0.0
      %443 = vmatmul.mubr.f32.gmra.mrb[0].mxu0 %v255
      %v444 = vpop.f32.mrb[0].mxu0
      %v445 = vadd.f32 %v215, %v444
      %v446 = vpop.f32.mrb[0].mxu0
      %447 = vmatprep.mubr.f32.mxu0 0.0
      %448 = vmatmul.mubr.f32.gmra.mrb[0].mxu0 %v258
      %v449 = vpop.f32.mrb[0].mxu0
      %v450 = vadd.f32 %v215, %v449
      %v451 = vpop.f32.mrb[0].mxu0
      %452 = vmatprep.mubr.f32.mxu0 0.0
      %453 = vmatmul.mubr.f32.gmra.mrb[0].mxu0 %v261
      %v454 = vpop.f32.mrb[0].mxu0
      %v455 = vadd.f32 %v215, %v454
      %v456 = vpop.f32.mrb[0].mxu0
      %457 = vmatprep.mubr.f32.mxu0 0.0
      %458 = vmatmul.mubr.f32.gmra.mrb[0].mxu0 %v264
      %v459 = vpop.f32.mrb[0].mxu0
      %v460 = vadd.f32 %v215, %v459
      %v461 = vpop.f32.mrb[0].mxu0
      %462 = vmatprep.mubr.f32.mxu0 0.0
      %463 = vmatmul.mubr.f32.gmra.mrb[0].mxu0 %v267
      %v464 = vpop.f32.mrb[0].mxu0
      %v465 = vadd.f32 %v215, %v464
      %v466 = vpop.f32.mrb[0].mxu0
      %467 = vmatprep.mubr.f32.mxu0 0.0
      %468 = vmatmul.mubr.f32.gmra.mrb[0].mxu0 %v270
      %v469 = vpop.f32.mrb[0].mxu0
      %v470 = vadd.f32 %v215, %v469
      %v471 = vpop.f32.mrb[0].mxu0
      %472 = vmatprep.mubr.f32.mxu0 0.0
      %473 = vmatmul.mubr.f32.gmra.mrb[0].mxu0 %v273
      %v474 = vpop.f32.mrb[0].mxu0
      %v475 = vadd.f32 %v215, %v474
      %v476 = vpop.f32.mrb[0].mxu0
      %477 = vmatprep.mubr.f32.mxu0 0.0
      %478 = vmatmul.mubr.f32.gmra.mrb[0].mxu0 %v276
      %v479 = vpop.f32.mrb[0].mxu0
      %v480 = vadd.f32 %v215, %v479
      %v481 = vpop.f32.mrb[0].mxu0
      %482 = vmatprep.mubr.f32.mxu0 0.0
      %483 = vmatmul.mubr.f32.gmra.mrb[0].mxu0 %v279
      %v484 = vpop.f32.mrb[0].mxu0
      %v485 = vadd.f32 %v215, %v484
      %v486 = vpop.f32.mrb[0].mxu0
      %487 = vmatprep.mubr.f32.mxu0 0.0
      %488 = vmatmul.mubr.f32.gmra.mrb[0].mxu0 %v282
      %v489 = vpop.f32.mrb[0].mxu0
      %v490 = vadd.f32 %v215, %v489
      %v491 = vpop.f32.mrb[0].mxu0
      %492 = vmatprep.mubr.f32.mxu0 0.0
      %493 = vmatmul.mubr.f32.gmra.mrb[0].mxu0 %v285
      %v494 = vpop.f32.mrb[0].mxu0
      %v495 = vadd.f32 %v215, %v494
      %v496 = vpop.f32.mrb[0].mxu0
      %497 = vmatprep.mubr.f32.mxu0 0.0
      %498 = vmatmul.mubr.f32.gmra.mrb[0].mxu0 %v288
      %v499 = vpop.f32.mrb[0].mxu0
      %v500 = vadd.f32 %v215, %v499
      %v501 = vpop.f32.mrb[0].mxu0
      %502 = vmatprep.mubr.f32.mxu0 0.0
      %503 = vmatmul.mubr.f32.gmra.mrb[0].mxu0 %v291
      %v504 = vpop.f32.mrb[0].mxu0
      %v505 = vadd.f32 %v215, %v504
      %v506 = vpop.f32.mrb[0].mxu0
      %507 = vmatprep.mubr.f32.mxu0 0.0
      %508 = vmatmul.mubr.f32.gmra.mrb[0].mxu0 %v294
      %v509 = vpop.f32.mrb[0].mxu0
      %v510 = vadd.f32 %v215, %v509
      %v511 = vpop.f32.mrb[0].mxu0
      %512 = vmatprep.mubr.f32.mxu0 0.0
      %513 = vmatmul.mubr.f32.gmra.mrb[0].mxu0 %v297
      %v514 = vpop.f32.mrb[0].mxu0
      %v515 = vadd.f32 %v215, %v514
      %v516 = vpop.f32.mrb[0].mxu0
      %517 = vmatprep.mubr.f32.mxu0 0.0
      %518 = vmatmul.mubr.f32.gmra.mrb[0].mxu0 %v300
      %v519 = vpop.f32.mrb[0].mxu0
      %v520 = vadd.f32 %v215, %v519
      %v521 = vpop.f32.mrb[0].mxu0
      %522 = vmatprep.mubr.f32.mxu0 0.0
      %523 = vmatmul.mubr.f32.gmra.mrb[0].mxu0 %v303
      %v524 = vpop.f32.mrb[0].mxu0
      %v525 = vadd.f32 %v215, %v524
      %v526 = vpop.f32.mrb[0].mxu0
      %527 = vmatprep.mubr.f32.mxu0 0.0
      %528 = vmatmul.mubr.f32.gmra.mrb[0].mxu0 %v306
      %v529 = vpop.f32.mrb[0].mxu0
      %v530 = vadd.f32 %v215, %v529
      %v531 = vpop.f32.mrb[0].mxu0
      %532 = vmatprep.mubr.f32.mxu0 0.0
      %533 = vmatmul.mubr.f32.gmra.mrb[0].mxu0 %v309
      %v534 = vpop.f32.mrb[0].mxu0
      %v535 = vadd.f32 %v215, %v534
      %v536 = vpop.f32.mrb[0].mxu0
      %537 = vmatprep.mubr.f32.mxu0 0.0
      %538 = vmatmul.mubr.f32.gmra.mrb[0].mxu0 %v312
      %v539 = vpop.f32.mrb[0].mxu0
      %v540 = vadd.f32 %v215, %v539
      %v541 = vpop.f32.mrb[0].mxu0
      %542 = vdwg.mxu0
      %v543 = vmax.f32 %v385, 0.0
      %v544 = vmax.f32 %v390, 0.0
      %v545 = vmax.f32 %v395, 0.0
      %v546 = vmax.f32 %v400, 0.0
      %v547 = vmax.f32 %v405, 0.0
      %v548 = vmax.f32 %v410, 0.0
      %v549 = vmax.f32 %v415, 0.0
      %v550 = vmax.f32 %v420, 0.0
      %v551 = vmax.f32 %v425, 0.0
      %v552 = vmax.f32 %v430, 0.0
      %v553 = vmax.f32 %v435, 0.0
      %v554 = vmax.f32 %v440, 0.0
      %v555 = vmax.f32 %v445, 0.0
      %v556 = vmax.f32 %v450, 0.0
      %v557 = vmax.f32 %v455, 0.0
      %v558 = vmax.f32 %v460, 0.0
      %v559 = vmax.f32 %v465, 0.0
      %v560 = vmax.f32 %v470, 0.0
      %v561 = vmax.f32 %v475, 0.0
      %v562 = vmax.f32 %v480, 0.0
      %v563 = vmax.f32 %v485, 0.0
      %v564 = vmax.f32 %v490, 0.0
      %v565 = vmax.f32 %v495, 0.0
      %v566 = vmax.f32 %v500, 0.0
      %v567 = vmax.f32 %v505, 0.0
      %v568 = vmax.f32 %v510, 0.0
      %v569 = vmax.f32 %v515, 0.0
      %v570 = vmax.f32 %v520, 0.0
      %v571 = vmax.f32 %v525, 0.0
      %v572 = vmax.f32 %v530, 0.0
      %v573 = vmax.f32 %v535, 0.0
      %v574 = vmax.f32 %v540, 0.0
      %575 = vst [vmem:[%s172] sm:$0xff] %v543
      %576 = vst [vmem:[%s172 + $0x8] sm:$0xff] %v544
      %577 = vst [vmem:[%s172 + $0x10] sm:$0xff] %v545
      %578 = vst [vmem:[%s172 + $0x18] sm:$0xff] %v546
      %579 = vst [vmem:[%s172 + $0x20] sm:$0xff] %v547
      %580 = vst [vmem:[%s172 + $0x28] sm:$0xff] %v548
      %581 = vst [vmem:[%s172 + $0x30] sm:$0xff] %v549
      %582 = vst [vmem:[%s172 + $0x38] sm:$0xff] %v550
      %583 = vst [vmem:[%s172 + $0x40] sm:$0xff] %v551
      %584 = vst [vmem:[%s172 + $0x48] sm:$0xff] %v552
      %585 = vst [vmem:[%s172 + $0x50] sm:$0xff] %v553
      %586 = vst [vmem:[%s172 + $0x58] sm:$0xff] %v554
      %587 = vst [vmem:[%s172 + $0x60] sm:$0xff] %v555
      %588 = vst [vmem:[%s172 + $0x68] sm:$0xff] %v556
      %589 = vst [vmem:[%s172 + $0x70] sm:$0xff] %v557
      %590 = vst [vmem:[%s172 + $0x78] sm:$0xff] %v558
      %591 = vst [vmem:[%s172 + $0x80] sm:$0xff] %v559
      %592 = vst [vmem:[%s172 + $0x88] sm:$0xff] %v560
      %593 = vst [vmem:[%s172 + $0x90] sm:$0xff] %v561
      %594 = vst [vmem:[%s172 + $0x98] sm:$0xff] %v562
      %595 = vst [vmem:[%s172 + $0xa0] sm:$0xff] %v563
      %596 = vst [vmem:[%s172 + $0xa8] sm:$0xff] %v564
      %597 = vst [vmem:[%s172 + $0xb0] sm:$0xff] %v565
      %598 = vst [vmem:[%s172 + $0xb8] sm:$0xff] %v566
      %599 = vst [vmem:[%s172 + $0xc0] sm:$0xff] %v567
      %600 = vst [vmem:[%s172 + $0xc8] sm:$0xff] %v568
      %601 = vst [vmem:[%s172 + $0xd0] sm:$0xff] %v569
      %602 = vst [vmem:[%s172 + $0xd8] sm:$0xff] %v570
      %603 = vst [vmem:[%s172 + $0xe0] sm:$0xff] %v571
      %604 = vst [vmem:[%s172 + $0xe8] sm:$0xff] %v572
      %605 = vst [vmem:[%s172 + $0xf0] sm:$0xff] %v573
      %606 = vst [vmem:[%s172 + $0xf8] sm:$0xff] %v574
      %s607 = smul.u32 32, %s14
      %p608 = scmp.lt.s32.totalorder %s607, 63
      %s609 = scalar_select %p608, %s607, 63
      %s610 = smul.addr %s609, 8
      %s611 = scalar_lea.vmem %s3, %s610
      // Predicated region
      $region33: #{autoencoder_forward.9} parent=31 // pred_check
        %p612 = pneg %p100
      $region34: #{autoencoder_forward.9} parent=31 // pred_check_branch
        %614 = sbr.rel (%p612) target = $region36
      $region35: #{autoencoder_forward.9} parent=31 // pred_region
        %s615 = smul.u32 32, %s14
      $region36: #{autoencoder_forward.9} parent=31 // pred_fallthru
        _
    $region32: #{autoencoder_forward.9} parent=5 // pred_fallthru
      _
    %p616 = scmp.le.s32.totalorder 2, %s9
    // Predicated region
    $region37: #{autoencoder_forward.9} parent=5 // pred_check
      %p617 = pneg %p616
    $region38: #{autoencoder_forward.9} parent=5 // pred_check_branch
      %619 = sbr.rel (%p617) target = $region40
    $region39: #{autoencoder_forward.9} parent=5 // pred_region
      %s620 = ssub.s32 %s9, 2
      // Predicated region
      $region41: #{autoencoder_forward.9} parent=39 // pred_check
        %p621 = pneg %p106
      $region42: #{autoencoder_forward.9} parent=39 // pred_check_branch
        %623 = sbr.rel (%p621) target = $region44
      $region43: #{autoencoder_forward.9} parent=39 // pred_region
        %s624 = smul.u32 32, %s15
        %p625 = scmp.lt.s32.totalorder %s624, 63
        %s626 = scalar_select %p625, %s624, 63
        %s627 = smul.addr %s626, 8
        %s628 = scalar_lea.vmem %s3, %s627
      $region44: #{autoencoder_forward.9} parent=39 // pred_fallthru
        _
    $region40: #{autoencoder_forward.9} parent=5 // pred_fallthru
      _
  $region6: #{autoencoder_forward.9} parent=0 // loop_footer
    %s13 = sadd.s32 1, %s9
  $region7: #{autoencoder_forward.9} parent=0 // loop_footer_branch
    %8 = sbr.rel target = $region3
  $region8: #{autoencoder_forward.9} parent=0 // loop_exit
    _

// kernel: autoencoder_forward.10
$region0: #{autoencoder_forward.10}
  #allocation0 [shape = 'u32[]', space=smem, size = 0x4, offset = 0x4, fixed_abs, tag = 'smem constant byte address 0x4 - core index']
  #allocation1 [shape = 'u32[144,128]{1,0:T(1,128)}', space=vmem, size = 0x12000, scoped, tag = 'internal scratch']
  %s0 = inlined_call_operand.vmem [shape: f32[128,144], index: 0, kind: input, shape index: {}]
  %s1 = inlined_call_operand.vmem [shape: f32[144,128], index: 1, kind: input, shape index: {}]
  %s2 = inlined_call_operand.vmem [shape: f32[1,128], index: 2, kind: input, shape index: {}]
  %s3 = inlined_call_operand.vmem [shape: f32[128,128], index: 3, kind: output, shape index: {}]
  %s4 = sld [smem:[#allocation0]]
  $region45: #{autoencoder_forward.10} parent=0
    _
  %s6 = ssub.s32 1, %s4
  %s7 = scalar_select 0, %s6, %s4
  loop: start=0, step=1, limit=4
  $region2: #{autoencoder_forward.10} parent=0 // loop_pre_header
    _
  $region3: #{autoencoder_forward.10} parent=0 // loop_header
    %s9 = sphi 0, %s13
    %p10 = scmp.ge.s32.totalorder %s9, 4
    %s19 = sphi 0, %s21
    %s22 = sphi 0, %s19
    %s23 = sphi 0, %s22
    %s39 = sphi 0, %s23
    %s43 = sphi 0, %s43
    %s45 = sphi 0, %s43
    %s46 = sphi 0, %s45
    %s60 = sphi 0, %s46
    %s64 = sphi 0, %s64
    %s66 = sphi 0, %s64
    %s67 = sphi 0, %s66
    %s81 = sphi 0, %s67
    %s87 = sphi 0, %s89
    %s90 = sphi 0, %s87
    %s91 = sphi 0, %s90
    %s107 = sphi 0, %s91
  $region4: #{autoencoder_forward.10} parent=0 // loop_header_branch
    %12 = sbr.rel (%p10) target = $region8
  $region5: #{autoencoder_forward.10} parent=0 // loop_body
    %s14 = ssub.s32 %s9, 1
    %s15 = ssub.s32 %s9, 2
    %s16 = sadd.s32 %s9, 1
    %s17 = ssub.s32 %s9, %s16
    %p18 = scmp.eq.s32.totalorder %s17, 0
    %s20 = sadd.s32 %s19, 1
    %s21 = scalar_select %p18, %s19, %s20
    %p24 = pneg %p18
    %p25 = scmp.eq.s32.totalorder %s9, 1
    %p26 = por %p24, %p25
    %p27 = scmp.ne.s32.totalorder %s19, %s22
    %p28 = scmp.eq.s32.totalorder %s9, 0
    %p29 = por %p27, %p28
    %p30 = scmp.ne.s32.totalorder %s19, %s22
    %p31 = scmp.eq.s32.totalorder %s14, 1
    %p32 = por %p30, %p31
    %p33 = scmp.ne.s32.totalorder %s22, %s23
    %p34 = scmp.eq.s32.totalorder %s14, 0
    %p35 = por %p33, %p34
    %p36 = scmp.ne.s32.totalorder %s22, %s23
    %p37 = scmp.eq.s32.totalorder %s15, 1
    %p38 = por %p36, %p37
    %p40 = scmp.ne.s32.totalorder %s23, %s39
    %p41 = scmp.eq.s32.totalorder %s15, 0
    %p42 = por %p40, %p41
    %s44 = sadd.s32 %s43, 1
    %p47 = scmp.eq.s32.totalorder %s9, 1
    %p48 = scmp.ne.s32.totalorder %s43, %s45
    %p49 = scmp.eq.s32.totalorder %s9, 0
    %p50 = por %p48, %p49
    %p51 = scmp.ne.s32.totalorder %s43, %s45
    %p52 = scmp.eq.s32.totalorder %s14, 1
    %p53 = por %p51, %p52
    %p54 = scmp.ne.s32.totalorder %s45, %s46
    %p55 = scmp.eq.s32.totalorder %s14, 0
    %p56 = por %p54, %p55
    %p57 = scmp.ne.s32.totalorder %s45, %s46
    %p58 = scmp.eq.s32.totalorder %s15, 1
    %p59 = por %p57, %p58
    %p61 = scmp.ne.s32.totalorder %s46, %s60
    %p62 = scmp.eq.s32.totalorder %s15, 0
    %p63 = por %p61, %p62
    %s65 = sadd.s32 %s64, 1
    %p68 = scmp.eq.s32.totalorder %s9, 1
    %p69 = scmp.ne.s32.totalorder %s64, %s66
    %p70 = scmp.eq.s32.totalorder %s9, 0
    %p71 = por %p69, %p70
    %p72 = scmp.ne.s32.totalorder %s64, %s66
    %p73 = scmp.eq.s32.totalorder %s14, 1
    %p74 = por %p72, %p73
    %p75 = scmp.ne.s32.totalorder %s66, %s67
    %p76 = scmp.eq.s32.totalorder %s14, 0
    %p77 = por %p75, %p76
    %p78 = scmp.ne.s32.totalorder %s66, %s67
    %p79 = scmp.eq.s32.totalorder %s15, 1
    %p80 = por %p78, %p79
    %p82 = scmp.ne.s32.totalorder %s67, %s81
    %p83 = scmp.eq.s32.totalorder %s15, 0
    %p84 = por %p82, %p83
    %s85 = ssub.s32 %s9, %s16
    %p86 = scmp.eq.s32.totalorder %s85, 0
    %s88 = sadd.s32 %s87, 1
    %s89 = scalar_select %p86, %s87, %s88
    %p92 = pneg %p86
    %p93 = scmp.eq.s32.totalorder %s9, 1
    %p94 = por %p92, %p93
    %p95 = scmp.ne.s32.totalorder %s87, %s90
    %p96 = scmp.eq.s32.totalorder %s9, 0
    %p97 = por %p95, %p96
    %p98 = scmp.ne.s32.totalorder %s87, %s90
    %p99 = scmp.eq.s32.totalorder %s14, 1
    %p100 = por %p98, %p99
    %p101 = scmp.ne.s32.totalorder %s90, %s91
    %p102 = scmp.eq.s32.totalorder %s14, 0
    %p103 = por %p101, %p102
    %p104 = scmp.ne.s32.totalorder %s90, %s91
    %p105 = scmp.eq.s32.totalorder %s15, 1
    %p106 = por %p104, %p105
    %p108 = scmp.ne.s32.totalorder %s91, %s107
    %p109 = scmp.eq.s32.totalorder %s15, 0
    %p110 = por %p108, %p109
    %p111 = scmp.le.s32.totalorder 1, %s9
    %p112 = scmp.lt.s32.totalorder %s9, 3
    %p113 = pnand %p111, %p112
    %p114 = pneg %p113
    // Predicated region
    $region9: #{autoencoder_forward.10} parent=5 // pred_check
      _
    $region10: #{autoencoder_forward.10} parent=5 // pred_check_branch
      %116 = sbr.rel (%p113) target = $region12
    $region11: #{autoencoder_forward.10} parent=5 // pred_region
      %s117 = ssub.s32 %s9, 1
      // Predicated region
      $region13: #{autoencoder_forward.10} parent=11 // pred_check
        %p118 = pneg %p56
      $region14: #{autoencoder_forward.10} parent=11 // pred_check_branch
        %120 = sbr.rel (%p118) target = $region16
      $region15: #{autoencoder_forward.10} parent=11 // pred_region
        _
      $region16: #{autoencoder_forward.10} parent=11 // pred_fallthru
        _
      // Predicated region
      $region17: #{autoencoder_forward.10} parent=11 // pred_check
        %p121 = pneg %p77
      $region18: #{autoencoder_forward.10} parent=11 // pred_check_branch
        %123 = sbr.rel (%p121) target = $region20
      $region19: #{autoencoder_forward.10} parent=11 // pred_region
        _
      $region20: #{autoencoder_forward.10} parent=11 // pred_fallthru
        _
    $region12: #{autoencoder_forward.10} parent=5 // pred_fallthru
      _
    %p124 = scmp.lt.s32.totalorder %s9, 2
    // Predicated region
    $region21: #{autoencoder_forward.10} parent=5 // pred_check
      %p125 = pneg %p124
    $region22: #{autoencoder_forward.10} parent=5 // pred_check_branch
      %127 = sbr.rel (%p125) target = $region24
    $region23: #{autoencoder_forward.10} parent=5 // pred_region
      // Predicated region
      $region25: #{autoencoder_forward.10} parent=23 // pred_check
        %p128 = pneg %p29
      $region26: #{autoencoder_forward.10} parent=23 // pred_check_branch
        %130 = sbr.rel (%p128) target = $region28
      $region27: #{autoencoder_forward.10} parent=23 // pred_region
        %s131 = smul.u32 8, %s9
        %p132 = scmp.lt.s32.totalorder %s131, 15
        %s133 = scalar_select %p132, %s131, 15
        %s134 = smul.addr %s133, 2
        %s135 = smul.addr %s134, 8
        %s136 = scalar_lea.vmem %s0, %s135
        %s137 = smul.u32 8, %s9
      $region28: #{autoencoder_forward.10} parent=23 // pred_fallthru
        _
    $region24: #{autoencoder_forward.10} parent=5 // pred_fallthru
      _
    %p138 = scmp.le.s32.totalorder 1, %s9
    %p139 = scmp.lt.s32.totalorder %s9, 3
    %p140 = pnand %p138, %p139
    %p141 = pneg %p140
    // Predicated region
    $region29: #{autoencoder_forward.10} parent=5 // pred_check
      _
    $region30: #{autoencoder_forward.10} parent=5 // pred_check_branch
      %143 = sbr.rel (%p140) target = $region32
    $region31: #{autoencoder_forward.10} parent=5 // pred_region
      %s144 = ssub.s32 %s9, 1
      %s145 = smul.u32 8, %s14
      %p146 = scmp.lt.s32.totalorder %s145, 15
      %s147 = scalar_select %p146, %s145, 15
      %s148 = smul.addr %s147, 2
      %s149 = smul.addr %s148, 8
      %s150 = scalar_lea.vmem %s0, %s149
      %p151 = pneg %p35
      %p152 = pneg %p32
      %p153 = pneg %p56
      %p154 = pneg %p53
      %p155 = pneg %p77
      %p156 = pneg %p74
      %p157 = pneg %p103
      %p158 = pneg %p100
      %s159 = smul.u32 8, %s14
      %p160 = scmp.lt.s32.totalorder %s159, 15
      %s161 = scalar_select %p160, %s159, 15
      %s162 = smul.addr %s161, 8
      %s163 = scalar_lea.vmem %s3, %s162
      %s164 = smul.u32 8, %s14
      %p165 = scmp.lt.s32.totalorder %s164, 15
      %s166 = scalar_select %p165, %s164, 15
      %s167 = smul.addr %s166, 2
      %s168 = smul.addr %s167, 8
      %s169 = scalar_lea.vmem %s0, %s168
      %s170 = smul.u32 8, %s14
      %s171 = smul.u32 8, %s14
      %p172 = scmp.lt.s32.totalorder %s171, 15
      %s173 = scalar_select %p172, %s171, 15
      %s174 = smul.addr %s173, 8
      %s175 = scalar_lea.vmem %s3, %s174
      %s176 = smul.u32 8, %s14
      %v177 = vld [vmem:[%s169] sm:$0xff]
      %v178 = vld [vmem:[%s169 + $0x8] sm:$0xff]
      %v179 = vld [vmem:[%s169 + $0x10] sm:$0xff]
      %v180 = vld [vmem:[%s169 + $0x18] sm:$0xff]
      %v181 = vld [vmem:[%s169 + $0x20] sm:$0xff]
      %v182 = vld [vmem:[%s169 + $0x28] sm:$0xff]
      %v183 = vld [vmem:[%s169 + $0x30] sm:$0xff]
      %v184 = vld [vmem:[%s169 + $0x38] sm:$0xff]
      %v185 = vld [vmem:[%s169 + $0x40] sm:$0xff]
      %v186 = vld [vmem:[%s169 + $0x48] sm:$0xff]
      %v187 = vld [vmem:[%s169 + $0x50] sm:$0xff]
      %v188 = vld [vmem:[%s169 + $0x58] sm:$0xff]
      %v189 = vld [vmem:[%s169 + $0x60] sm:$0xff]
      %v190 = vld [vmem:[%s169 + $0x68] sm:$0xff]
      %v191 = vld [vmem:[%s169 + $0x70] sm:$0xff]
      %v192 = vld [vmem:[%s169 + $0x78] sm:$0xff]
      %v193 = vld [vmem:[%s1] sm:$0xff]
      %v194 = vld [vmem:[%s1 + $0x8] sm:$0xff]
      %v195 = vld [vmem:[%s1 + $0x10] sm:$0xff]
      %v196 = vld [vmem:[%s1 + $0x18] sm:$0xff]
      %v197 = vld [vmem:[%s1 + $0x20] sm:$0xff]
      %v198 = vld [vmem:[%s1 + $0x28] sm:$0xff]
      %v199 = vld [vmem:[%s1 + $0x30] sm:$0xff]
      %v200 = vld [vmem:[%s1 + $0x38] sm:$0xff]
      %v201 = vld [vmem:[%s1 + $0x40] sm:$0xff]
      %v202 = vld [vmem:[%s1 + $0x48] sm:$0xff]
      %v203 = vld [vmem:[%s1 + $0x50] sm:$0xff]
      %v204 = vld [vmem:[%s1 + $0x58] sm:$0xff]
      %v205 = vld [vmem:[%s1 + $0x60] sm:$0xff]
      %v206 = vld [vmem:[%s1 + $0x68] sm:$0xff]
      %v207 = vld [vmem:[%s1 + $0x70] sm:$0xff]
      %v208 = vld [vmem:[%s1 + $0x78] sm:$0xff]
      %v209 = vld [vmem:[%s1 + $0x80] sm:$0xff]
      %v210 = vld [vmem:[%s1 + $0x88] sm:$0xff]
      %v211 = vld [vmem:[%s2] sm:$0x1]
      %v213 = vlaneseq
      %v214 = vshrl.u32 %v213, 7
      %v215 = vsub.s32 0, %v214
      %v216 = vrot.slane %v211, %v215
      %vm218 = vcmask 130048
      %v220 = vsel %vm218, %v178, 0
      %v223 = vsel %vm218, %v180, 0
      %v226 = vsel %vm218, %v182, 0
      %v229 = vsel %vm218, %v184, 0
      %v232 = vsel %vm218, %v186, 0
      %v235 = vsel %vm218, %v188, 0
      %v238 = vsel %vm218, %v190, 0
      %v241 = vsel %vm218, %v192, 0
      %243 = vmatprep.subr.mxu0 0.0
      %244 = vmatpush1.msra.mxu0 %v193
      %245 = vmatprep.subr.mxu0 0.0
      %246 = vmatpush1.msra.mxu0 %v194
      %247 = vmatprep.subr.mxu0 0.0
      %248 = vmatpush1.msra.mxu0 %v195
      %249 = vmatprep.subr.mxu0 0.0
      %250 = vmatpush1.msra.mxu0 %v196
      %251 = vmatprep.subr.mxu0 0.0
      %252 = vmatpush1.msra.mxu0 %v197
      %253 = vmatprep.subr.mxu0 0.0
      %254 = vmatpush1.msra.mxu0 %v198
      %255 = vmatprep.subr.mxu0 0.0
      %256 = vmatpush1.msra.mxu0 %v199
      %257 = vmatprep.subr.mxu0 0.0
      %258 = vmatpush1.msra.mxu0 %v200
      %259 = vmatprep.subr.mxu0 0.0
      %260 = vmatpush1.msra.mxu0 %v201
      %261 = vmatprep.subr.mxu0 0.0
      %262 = vmatpush1.msra.mxu0 %v202
      %263 = vmatprep.subr.mxu0 0.0
      %264 = vmatpush1.msra.mxu0 %v203
      %265 = vmatprep.subr.mxu0 0.0
      %266 = vmatpush1.msra.mxu0 %v204
      %267 = vmatprep.subr.mxu0 0.0
      %268 = vmatpush1.msra.mxu0 %v205
      %269 = vmatprep.subr.mxu0 0.0
      %270 = vmatpush1.msra.mxu0 %v206
      %271 = vmatprep.subr.mxu0 0.0
      %272 = vmatpush1.msra.mxu0 %v207
      %273 = vmatprep.subr.mxu0 0.0
      %274 = vmatpush1.msra.mxu0 %v208
      %275 = vmatprep.subr.mxu0 0.0
      %276 = vmatpush1.msra.mxu0 %v209
      %277 = vmatprep.subr.mxu0 0.0
      %278 = vmatpush1.msra.mxu0 %v210
      %279 = vmatprep.subr.mxu0 0.0
      %280 = vmatpush1.msra.mxu0 0.0
      %281 = vmatprep.subr.mxu0 0.0
      %282 = vmatpush1.msra.mxu0 0.0
      %283 = vmatprep.subr.mxu0 0.0
      %284 = vmatpush1.msra.mxu0 0.0
      %285 = vmatprep.subr.mxu0 0.0
      %286 = vmatpush1.msra.mxu0 0.0
      %287 = vmatprep.subr.mxu0 0.0
      %288 = vmatpush1.msra.mxu0 0.0
      %289 = vmatprep.subr.mxu0 0.0
      %290 = vmatpush1.msra.mxu0 0.0
      %291 = vmatprep.subr.mxu0 0.0
      %292 = vmatpush1.msra.mxu0 0.0
      %293 = vmatprep.subr.mxu0 0.0
      %294 = vmatpush1.msra.mxu0 0.0
      %295 = vmatprep.subr.mxu0 0.0
      %296 = vmatpush1.msra.mxu0 0.0
      %297 = vmatprep.subr.mxu0 0.0
      %298 = vmatpush1.msra.mxu0 0.0
      %299 = vmatprep.subr.mxu0 0.0
      %300 = vmatpush1.msra.mxu0 0.0
      %301 = vmatprep.subr.mxu0 0.0
      %302 = vmatpush1.msra.mxu0 0.0
      %303 = vmatprep.subr.mxu0 0.0
      %304 = vmatpush1.msra.mxu0 0.0
      %305 = vmatprep.subr.mxu0 0.0
      %306 = vmatpush1.msra.mxu0 0.0
      %307 = vmatprep.mubr.f32.mxu0 %v220
      %308 = vmatmul.mubr.f32.gmra.mrb[0].mxu0 %v177
      %v309 = vpop.f32.mrb[0].mxu0
      %v310 = vadd.f32 %v216, %v309
      %v311 = vpop.f32.mrb[0].mxu0
      %312 = vmatprep.mubr.f32.mxu0 %v223
      %313 = vmatmul.mubr.f32.gmra.mrb[0].mxu0 %v179
      %v314 = vpop.f32.mrb[0].mxu0
      %v315 = vadd.f32 %v216, %v314
      %v316 = vpop.f32.mrb[0].mxu0
      %317 = vmatprep.mubr.f32.mxu0 %v226
      %318 = vmatmul.mubr.f32.gmra.mrb[0].mxu0 %v181
      %v319 = vpop.f32.mrb[0].mxu0
      %v320 = vadd.f32 %v216, %v319
      %v321 = vpop.f32.mrb[0].mxu0
      %322 = vmatprep.mubr.f32.mxu0 %v229
      %323 = vmatmul.mubr.f32.gmra.mrb[0].mxu0 %v183
      %v324 = vpop.f32.mrb[0].mxu0
      %v325 = vadd.f32 %v216, %v324
      %v326 = vpop.f32.mrb[0].mxu0
      %327 = vmatprep.mubr.f32.mxu0 %v232
      %328 = vmatmul.mubr.f32.gmra.mrb[0].mxu0 %v185
      %v329 = vpop.f32.mrb[0].mxu0
      %v330 = vadd.f32 %v216, %v329
      %v331 = vpop.f32.mrb[0].mxu0
      %332 = vmatprep.mubr.f32.mxu0 %v235
      %333 = vmatmul.mubr.f32.gmra.mrb[0].mxu0 %v187
      %v334 = vpop.f32.mrb[0].mxu0
      %v335 = vadd.f32 %v216, %v334
      %v336 = vpop.f32.mrb[0].mxu0
      %337 = vmatprep.mubr.f32.mxu0 %v238
      %338 = vmatmul.mubr.f32.gmra.mrb[0].mxu0 %v189
      %v339 = vpop.f32.mrb[0].mxu0
      %v340 = vadd.f32 %v216, %v339
      %v341 = vpop.f32.mrb[0].mxu0
      %342 = vmatprep.mubr.f32.mxu0 %v241
      %343 = vmatmul.mubr.f32.gmra.mrb[0].mxu0 %v191
      %v344 = vpop.f32.mrb[0].mxu0
      %v345 = vadd.f32 %v216, %v344
      %v346 = vpop.f32.mrb[0].mxu0
      %347 = vdwg.mxu0
      %v348 = vmax.f32 %v310, 0.0
      %v349 = vmax.f32 %v315, 0.0
      %v350 = vmax.f32 %v320, 0.0
      %v351 = vmax.f32 %v325, 0.0
      %v352 = vmax.f32 %v330, 0.0
      %v353 = vmax.f32 %v335, 0.0
      %v354 = vmax.f32 %v340, 0.0
      %v355 = vmax.f32 %v345, 0.0
      %356 = vst [vmem:[%s175] sm:$0xff] %v348
      %357 = vst [vmem:[%s175 + $0x8] sm:$0xff] %v349
      %358 = vst [vmem:[%s175 + $0x10] sm:$0xff] %v350
      %359 = vst [vmem:[%s175 + $0x18] sm:$0xff] %v351
      %360 = vst [vmem:[%s175 + $0x20] sm:$0xff] %v352
      %361 = vst [vmem:[%s175 + $0x28] sm:$0xff] %v353
      %362 = vst [vmem:[%s175 + $0x30] sm:$0xff] %v354
      %363 = vst [vmem:[%s175 + $0x38] sm:$0xff] %v355
      %s364 = smul.u32 8, %s14
      %p365 = scmp.lt.s32.totalorder %s364, 15
      %s366 = scalar_select %p365, %s364, 15
      %s367 = smul.addr %s366, 8
      %s368 = scalar_lea.vmem %s3, %s367
      // Predicated region
      $region33: #{autoencoder_forward.10} parent=31 // pred_check
        %p369 = pneg %p100
      $region34: #{autoencoder_forward.10} parent=31 // pred_check_branch
        %371 = sbr.rel (%p369) target = $region36
      $region35: #{autoencoder_forward.10} parent=31 // pred_region
        %s372 = smul.u32 8, %s14
      $region36: #{autoencoder_forward.10} parent=31 // pred_fallthru
        _
    $region32: #{autoencoder_forward.10} parent=5 // pred_fallthru
      _
    %p373 = scmp.le.s32.totalorder 2, %s9
    // Predicated region
    $region37: #{autoencoder_forward.10} parent=5 // pred_check
      %p374 = pneg %p373
    $region38: #{autoencoder_forward.10} parent=5 // pred_check_branch
      %376 = sbr.rel (%p374) target = $region40
    $region39: #{autoencoder_forward.10} parent=5 // pred_region
      %s377 = ssub.s32 %s9, 2
      // Predicated region
      $region41: #{autoencoder_forward.10} parent=39 // pred_check
        %p378 = pneg %p106
      $region42: #{autoencoder_forward.10} parent=39 // pred_check_branch
        %380 = sbr.rel (%p378) target = $region44
      $region43: #{autoencoder_forward.10} parent=39 // pred_region
        %s381 = smul.u32 8, %s15
        %p382 = scmp.lt.s32.totalorder %s381, 15
        %s383 = scalar_select %p382, %s381, 15
        %s384 = smul.addr %s383, 8
        %s385 = scalar_lea.vmem %s3, %s384
      $region44: #{autoencoder_forward.10} parent=39 // pred_fallthru
        _
    $region40: #{autoencoder_forward.10} parent=5 // pred_fallthru
      _
  $region6: #{autoencoder_forward.10} parent=0 // loop_footer
    %s13 = sadd.s32 1, %s9
  $region7: #{autoencoder_forward.10} parent=0 // loop_footer_branch
    %8 = sbr.rel target = $region3
  $region8: #{autoencoder_forward.10} parent=0 // loop_exit
    _

// kernel: autoencoder_forward.11
$region0: #{autoencoder_forward.11}
  #allocation0 [shape = 'u32[]', space=smem, size = 0x4, offset = 0x4, fixed_abs, tag = 'smem constant byte address 0x4 - core index']
  #allocation1 [shape = 'u32[144,128]{1,0:T(1,128)}', space=vmem, size = 0x12000, scoped, tag = 'internal scratch']
  %s0 = inlined_call_operand.vmem [shape: f32[8,1568], index: 0, kind: input, shape index: {}]
  %s1 = inlined_call_operand.vmem [shape: f32[1568,128], index: 1, kind: input, shape index: {}]
  %s2 = inlined_call_operand.vmem [shape: f32[1,128], index: 2, kind: input, shape index: {}]
  %s3 = inlined_call_operand.vmem [shape: f32[8,128], index: 3, kind: output, shape index: {}]
  %s4 = sld [smem:[#allocation0]]
  $region22: #{autoencoder_forward.11} parent=0
    _
  %s6 = ssub.s32 1, %s4
  %s7 = scalar_select 0, %s6, %s4
  // Predicated region
  $region2: #{autoencoder_forward.11} parent=0 // pred_check
    _
  $region3: #{autoencoder_forward.11} parent=0 // pred_check_branch
    %9 = sbr.rel (0) target = $region5
  $region4: #{autoencoder_forward.11} parent=0 // pred_region
    _
  $region5: #{autoencoder_forward.11} parent=0 // pred_fallthru
    _
  // Predicated region
  $region6: #{autoencoder_forward.11} parent=0 // pred_check
    _
  $region7: #{autoencoder_forward.11} parent=0 // pred_check_branch
    %11 = sbr.rel (0) target = $region9
  $region8: #{autoencoder_forward.11} parent=0 // pred_region
    _
  $region9: #{autoencoder_forward.11} parent=0 // pred_fallthru
    _
  // Predicated region
  $region10: #{autoencoder_forward.11} parent=0 // pred_check
    _
  $region11: #{autoencoder_forward.11} parent=0 // pred_check_branch
    %13 = sbr.rel (0) target = $region13
  $region12: #{autoencoder_forward.11} parent=0 // pred_region
    _
  $region13: #{autoencoder_forward.11} parent=0 // pred_fallthru
    _
  %v14 = vld [vmem:[%s0] sm:$0xff]
  %v15 = vld [vmem:[%s0 + $0x8] sm:$0xff]
  %v16 = vld [vmem:[%s0 + $0x10] sm:$0xff]
  %v17 = vld [vmem:[%s0 + $0x18] sm:$0xff]
  %v18 = vld [vmem:[%s0 + $0x20] sm:$0xff]
  %v19 = vld [vmem:[%s0 + $0x28] sm:$0xff]
  %v20 = vld [vmem:[%s0 + $0x30] sm:$0xff]
  %v21 = vld [vmem:[%s0 + $0x38] sm:$0xff]
  %v22 = vld [vmem:[%s0 + $0x40] sm:$0xff]
  %v23 = vld [vmem:[%s0 + $0x48] sm:$0xff]
  %v24 = vld [vmem:[%s0 + $0x50] sm:$0xff]
  %v25 = vld [vmem:[%s0 + $0x58] sm:$0xff]
  %v26 = vld [vmem:[%s0 + $0x60] sm:$0xff]
  %v27 = vld [vmem:[%s1] sm:$0xff]
  %v28 = vld [vmem:[%s1 + $0x8] sm:$0xff]
  %v29 = vld [vmem:[%s1 + $0x10] sm:$0xff]
  %v30 = vld [vmem:[%s1 + $0x18] sm:$0xff]
  %v31 = vld [vmem:[%s1 + $0x20] sm:$0xff]
  %v32 = vld [vmem:[%s1 + $0x28] sm:$0xff]
  %v33 = vld [vmem:[%s1 + $0x30] sm:$0xff]
  %v34 = vld [vmem:[%s1 + $0x38] sm:$0xff]
  %v35 = vld [vmem:[%s1 + $0x40] sm:$0xff]
  %v36 = vld [vmem:[%s1 + $0x48] sm:$0xff]
  %v37 = vld [vmem:[%s1 + $0x50] sm:$0xff]
  %v38 = vld [vmem:[%s1 + $0x58] sm:$0xff]
  %v39 = vld [vmem:[%s1 + $0x60] sm:$0xff]
  %v40 = vld [vmem:[%s1 + $0x68] sm:$0xff]
  %v41 = vld [vmem:[%s1 + $0x70] sm:$0xff]
  %v42 = vld [vmem:[%s1 + $0x78] sm:$0xff]
  %v43 = vld [vmem:[%s1 + $0x80] sm:$0xff]
  %v44 = vld [vmem:[%s1 + $0x88] sm:$0xff]
  %v45 = vld [vmem:[%s1 + $0x90] sm:$0xff]
  %v46 = vld [vmem:[%s1 + $0x98] sm:$0xff]
  %v47 = vld [vmem:[%s1 + $0xa0] sm:$0xff]
  %v48 = vld [vmem:[%s1 + $0xa8] sm:$0xff]
  %v49 = vld [vmem:[%s1 + $0xb0] sm:$0xff]
  %v50 = vld [vmem:[%s1 + $0xb8] sm:$0xff]
  %v51 = vld [vmem:[%s1 + $0xc0] sm:$0xff]
  %v52 = vld [vmem:[%s1 + $0xc8] sm:$0xff]
  %v53 = vld [vmem:[%s1 + $0xd0] sm:$0xff]
  %v54 = vld [vmem:[%s1 + $0xd8] sm:$0xff]
  %v55 = vld [vmem:[%s1 + $0xe0] sm:$0xff]
  %v56 = vld [vmem:[%s1 + $0xe8] sm:$0xff]
  %v57 = vld [vmem:[%s1 + $0xf0] sm:$0xff]
  %v58 = vld [vmem:[%s1 + $0xf8] sm:$0xff]
  %v59 = vld [vmem:[%s1 + $0x100] sm:$0xff]
  %v60 = vld [vmem:[%s1 + $0x108] sm:$0xff]
  %v61 = vld [vmem:[%s1 + $0x110] sm:$0xff]
  %v62 = vld [vmem:[%s1 + $0x118] sm:$0xff]
  %v63 = vld [vmem:[%s1 + $0x120] sm:$0xff]
  %v64 = vld [vmem:[%s1 + $0x128] sm:$0xff]
  %v65 = vld [vmem:[%s1 + $0x130] sm:$0xff]
  %v66 = vld [vmem:[%s1 + $0x138] sm:$0xff]
  %v67 = vld [vmem:[%s1 + $0x140] sm:$0xff]
  %v68 = vld [vmem:[%s1 + $0x148] sm:$0xff]
  %v69 = vld [vmem:[%s1 + $0x150] sm:$0xff]
  %v70 = vld [vmem:[%s1 + $0x158] sm:$0xff]
  %v71 = vld [vmem:[%s1 + $0x160] sm:$0xff]
  %v72 = vld [vmem:[%s1 + $0x168] sm:$0xff]
  %v73 = vld [vmem:[%s1 + $0x170] sm:$0xff]
  %v74 = vld [vmem:[%s1 + $0x178] sm:$0xff]
  %v75 = vld [vmem:[%s1 + $0x180] sm:$0xff]
  %v76 = vld [vmem:[%s1 + $0x188] sm:$0xff]
  %v77 = vld [vmem:[%s1 + $0x190] sm:$0xff]
  %v78 = vld [vmem:[%s1 + $0x198] sm:$0xff]
  %v79 = vld [vmem:[%s1 + $0x1a0] sm:$0xff]
  %v80 = vld [vmem:[%s1 + $0x1a8] sm:$0xff]
  %v81 = vld [vmem:[%s1 + $0x1b0] sm:$0xff]
  %v82 = vld [vmem:[%s1 + $0x1b8] sm:$0xff]
  %v83 = vld [vmem:[%s1 + $0x1c0] sm:$0xff]
  %v84 = vld [vmem:[%s1 + $0x1c8] sm:$0xff]
  %v85 = vld [vmem:[%s1 + $0x1d0] sm:$0xff]
  %v86 = vld [vmem:[%s1 + $0x1d8] sm:$0xff]
  %v87 = vld [vmem:[%s1 + $0x1e0] sm:$0xff]
  %v88 = vld [vmem:[%s1 + $0x1e8] sm:$0xff]
  %v89 = vld [vmem:[%s1 + $0x1f0] sm:$0xff]
  %v90 = vld [vmem:[%s1 + $0x1f8] sm:$0xff]
  %v91 = vld [vmem:[%s1 + $0x200] sm:$0xff]
  %v92 = vld [vmem:[%s1 + $0x208] sm:$0xff]
  %v93 = vld [vmem:[%s1 + $0x210] sm:$0xff]
  %v94 = vld [vmem:[%s1 + $0x218] sm:$0xff]
  %v95 = vld [vmem:[%s1 + $0x220] sm:$0xff]
  %v96 = vld [vmem:[%s1 + $0x228] sm:$0xff]
  %v97 = vld [vmem:[%s1 + $0x230] sm:$0xff]
  %v98 = vld [vmem:[%s1 + $0x238] sm:$0xff]
  %v99 = vld [vmem:[%s1 + $0x240] sm:$0xff]
  %v100 = vld [vmem:[%s1 + $0x248] sm:$0xff]
  %v101 = vld [vmem:[%s1 + $0x250] sm:$0xff]
  %v102 = vld [vmem:[%s1 + $0x258] sm:$0xff]
  %v103 = vld [vmem:[%s1 + $0x260] sm:$0xff]
  %v104 = vld [vmem:[%s1 + $0x268] sm:$0xff]
  %v105 = vld [vmem:[%s1 + $0x270] sm:$0xff]
  %v106 = vld [vmem:[%s1 + $0x278] sm:$0xff]
  %v107 = vld [vmem:[%s1 + $0x280] sm:$0xff]
  %v108 = vld [vmem:[%s1 + $0x288] sm:$0xff]
  %v109 = vld [vmem:[%s1 + $0x290] sm:$0xff]
  %v110 = vld [vmem:[%s1 + $0x298] sm:$0xff]
  %v111 = vld [vmem:[%s1 + $0x2a0] sm:$0xff]
  %v112 = vld [vmem:[%s1 + $0x2a8] sm:$0xff]
  %v113 = vld [vmem:[%s1 + $0x2b0] sm:$0xff]
  %v114 = vld [vmem:[%s1 + $0x2b8] sm:$0xff]
  %v115 = vld [vmem:[%s1 + $0x2c0] sm:$0xff]
  %v116 = vld [vmem:[%s1 + $0x2c8] sm:$0xff]
  %v117 = vld [vmem:[%s1 + $0x2d0] sm:$0xff]
  %v118 = vld [vmem:[%s1 + $0x2d8] sm:$0xff]
  %v119 = vld [vmem:[%s1 + $0x2e0] sm:$0xff]
  %v120 = vld [vmem:[%s1 + $0x2e8] sm:$0xff]
  %v121 = vld [vmem:[%s1 + $0x2f0] sm:$0xff]
  %v122 = vld [vmem:[%s1 + $0x2f8] sm:$0xff]
  %v123 = vld [vmem:[%s1 + $0x300] sm:$0xff]
  %v124 = vld [vmem:[%s1 + $0x308] sm:$0xff]
  %v125 = vld [vmem:[%s1 + $0x310] sm:$0xff]
  %v126 = vld [vmem:[%s1 + $0x318] sm:$0xff]
  %v127 = vld [vmem:[%s1 + $0x320] sm:$0xff]
  %v128 = vld [vmem:[%s1 + $0x328] sm:$0xff]
  %v129 = vld [vmem:[%s1 + $0x330] sm:$0xff]
  %v130 = vld [vmem:[%s1 + $0x338] sm:$0xff]
  %v131 = vld [vmem:[%s1 + $0x340] sm:$0xff]
  %v132 = vld [vmem:[%s1 + $0x348] sm:$0xff]
  %v133 = vld [vmem:[%s1 + $0x350] sm:$0xff]
  %v134 = vld [vmem:[%s1 + $0x358] sm:$0xff]
  %v135 = vld [vmem:[%s1 + $0x360] sm:$0xff]
  %v136 = vld [vmem:[%s1 + $0x368] sm:$0xff]
  %v137 = vld [vmem:[%s1 + $0x370] sm:$0xff]
  %v138 = vld [vmem:[%s1 + $0x378] sm:$0xff]
  %v139 = vld [vmem:[%s1 + $0x380] sm:$0xff]
  %v140 = vld [vmem:[%s1 + $0x388] sm:$0xff]
  %v141 = vld [vmem:[%s1 + $0x390] sm:$0xff]
  %v142 = vld [vmem:[%s1 + $0x398] sm:$0xff]
  %v143 = vld [vmem:[%s1 + $0x3a0] sm:$0xff]
  %v144 = vld [vmem:[%s1 + $0x3a8] sm:$0xff]
  %v145 = vld [vmem:[%s1 + $0x3b0] sm:$0xff]
  %v146 = vld [vmem:[%s1 + $0x3b8] sm:$0xff]
  %v147 = vld [vmem:[%s1 + $0x3c0] sm:$0xff]
  %v148 = vld [vmem:[%s1 + $0x3c8] sm:$0xff]
  %v149 = vld [vmem:[%s1 + $0x3d0] sm:$0xff]
  %v150 = vld [vmem:[%s1 + $0x3d8] sm:$0xff]
  %v151 = vld [vmem:[%s1 + $0x3e0] sm:$0xff]
  %v152 = vld [vmem:[%s1 + $0x3e8] sm:$0xff]
  %v153 = vld [vmem:[%s1 + $0x3f0] sm:$0xff]
  %v154 = vld [vmem:[%s1 + $0x3f8] sm:$0xff]
  %v155 = vld [vmem:[%s1 + $0x400] sm:$0xff]
  %v156 = vld [vmem:[%s1 + $0x408] sm:$0xff]
  %v157 = vld [vmem:[%s1 + $0x410] sm:$0xff]
  %v158 = vld [vmem:[%s1 + $0x418] sm:$0xff]
  %v159 = vld [vmem:[%s1 + $0x420] sm:$0xff]
  %v160 = vld [vmem:[%s1 + $0x428] sm:$0xff]
  %v161 = vld [vmem:[%s1 + $0x430] sm:$0xff]
  %v162 = vld [vmem:[%s1 + $0x438] sm:$0xff]
  %v163 = vld [vmem:[%s1 + $0x440] sm:$0xff]
  %v164 = vld [vmem:[%s1 + $0x448] sm:$0xff]
  %v165 = vld [vmem:[%s1 + $0x450] sm:$0xff]
  %v166 = vld [vmem:[%s1 + $0x458] sm:$0xff]
  %v167 = vld [vmem:[%s1 + $0x460] sm:$0xff]
  %v168 = vld [vmem:[%s1 + $0x468] sm:$0xff]
  %v169 = vld [vmem:[%s1 + $0x470] sm:$0xff]
  %v170 = vld [vmem:[%s1 + $0x478] sm:$0xff]
  %v171 = vld [vmem:[%s1 + $0x480] sm:$0xff]
  %v172 = vld [vmem:[%s1 + $0x488] sm:$0xff]
  %v173 = vld [vmem:[%s1 + $0x490] sm:$0xff]
  %v174 = vld [vmem:[%s1 + $0x498] sm:$0xff]
  %v175 = vld [vmem:[%s1 + $0x4a0] sm:$0xff]
  %v176 = vld [vmem:[%s1 + $0x4a8] sm:$0xff]
  %v177 = vld [vmem:[%s1 + $0x4b0] sm:$0xff]
  %v178 = vld [vmem:[%s1 + $0x4b8] sm:$0xff]
  %v179 = vld [vmem:[%s1 + $0x4c0] sm:$0xff]
  %v180 = vld [vmem:[%s1 + $0x4c8] sm:$0xff]
  %v181 = vld [vmem:[%s1 + $0x4d0] sm:$0xff]
  %v182 = vld [vmem:[%s1 + $0x4d8] sm:$0xff]
  %v183 = vld [vmem:[%s1 + $0x4e0] sm:$0xff]
  %v184 = vld [vmem:[%s1 + $0x4e8] sm:$0xff]
  %v185 = vld [vmem:[%s1 + $0x4f0] sm:$0xff]
  %v186 = vld [vmem:[%s1 + $0x4f8] sm:$0xff]
  %v187 = vld [vmem:[%s1 + $0x500] sm:$0xff]
  %v188 = vld [vmem:[%s1 + $0x508] sm:$0xff]
  %v189 = vld [vmem:[%s1 + $0x510] sm:$0xff]
  %v190 = vld [vmem:[%s1 + $0x518] sm:$0xff]
  %v191 = vld [vmem:[%s1 + $0x520] sm:$0xff]
  %v192 = vld [vmem:[%s1 + $0x528] sm:$0xff]
  %v193 = vld [vmem:[%s1 + $0x530] sm:$0xff]
  %v194 = vld [vmem:[%s1 + $0x538] sm:$0xff]
  %v195 = vld [vmem:[%s1 + $0x540] sm:$0xff]
  %v196 = vld [vmem:[%s1 + $0x548] sm:$0xff]
  %v197 = vld [vmem:[%s1 + $0x550] sm:$0xff]
  %v198 = vld [vmem:[%s1 + $0x558] sm:$0xff]
  %v199 = vld [vmem:[%s1 + $0x560] sm:$0xff]
  %v200 = vld [vmem:[%s1 + $0x568] sm:$0xff]
  %v201 = vld [vmem:[%s1 + $0x570] sm:$0xff]
  %v202 = vld [vmem:[%s1 + $0x578] sm:$0xff]
  %v203 = vld [vmem:[%s1 + $0x580] sm:$0xff]
  %v204 = vld [vmem:[%s1 + $0x588] sm:$0xff]
  %v205 = vld [vmem:[%s1 + $0x590] sm:$0xff]
  %v206 = vld [vmem:[%s1 + $0x598] sm:$0xff]
  %v207 = vld [vmem:[%s1 + $0x5a0] sm:$0xff]
  %v208 = vld [vmem:[%s1 + $0x5a8] sm:$0xff]
  %v209 = vld [vmem:[%s1 + $0x5b0] sm:$0xff]
  %v210 = vld [vmem:[%s1 + $0x5b8] sm:$0xff]
  %v211 = vld [vmem:[%s1 + $0x5c0] sm:$0xff]
  %v212 = vld [vmem:[%s1 + $0x5c8] sm:$0xff]
  %v213 = vld [vmem:[%s1 + $0x5d0] sm:$0xff]
  %v214 = vld [vmem:[%s1 + $0x5d8] sm:$0xff]
  %v215 = vld [vmem:[%s1 + $0x5e0] sm:$0xff]
  %v216 = vld [vmem:[%s1 + $0x5e8] sm:$0xff]
  %v217 = vld [vmem:[%s1 + $0x5f0] sm:$0xff]
  %v218 = vld [vmem:[%s1 + $0x5f8] sm:$0xff]
  %v219 = vld [vmem:[%s1 + $0x600] sm:$0xff]
  %v220 = vld [vmem:[%s1 + $0x608] sm:$0xff]
  %v221 = vld [vmem:[%s1 + $0x610] sm:$0xff]
  %v222 = vld [vmem:[%s1 + $0x618] sm:$0xff]
  %v223 = vld [vmem:[%s2] sm:$0x1]
  %v225 = vlaneseq
  %v226 = vshrl.u32 %v225, 7
  %v227 = vsub.s32 0, %v226
  %v228 = vrot.slane %v223, %v227
  %vm230 = vcmask 261120
  %v232 = vsel %vm230, %v26, 0
  %234 = vmatprep.subr.mxu0 0.0
  %235 = vmatpush1.msra.mxu0 %v27
  %236 = vmatprep.subr.mxu0 0.0
  %237 = vmatpush1.msra.mxu0 %v28
  %238 = vmatprep.subr.mxu0 0.0
  %239 = vmatpush1.msra.mxu0 %v29
  %240 = vmatprep.subr.mxu0 0.0
  %241 = vmatpush1.msra.mxu0 %v30
  %242 = vmatprep.subr.mxu0 0.0
  %243 = vmatpush1.msra.mxu0 %v31
  %244 = vmatprep.subr.mxu0 0.0
  %245 = vmatpush1.msra.mxu0 %v32
  %246 = vmatprep.subr.mxu0 0.0
  %247 = vmatpush1.msra.mxu0 %v33
  %248 = vmatprep.subr.mxu0 0.0
  %249 = vmatpush1.msra.mxu0 %v34
  %250 = vmatprep.subr.mxu0 0.0
  %251 = vmatpush1.msra.mxu0 %v35
  %252 = vmatprep.subr.mxu0 0.0
  %253 = vmatpush1.msra.mxu0 %v36
  %254 = vmatprep.subr.mxu0 0.0
  %255 = vmatpush1.msra.mxu0 %v37
  %256 = vmatprep.subr.mxu0 0.0
  %257 = vmatpush1.msra.mxu0 %v38
  %258 = vmatprep.subr.mxu0 0.0
  %259 = vmatpush1.msra.mxu0 %v39
  %260 = vmatprep.subr.mxu0 0.0
  %261 = vmatpush1.msra.mxu0 %v40
  %262 = vmatprep.subr.mxu0 0.0
  %263 = vmatpush1.msra.mxu0 %v41
  %264 = vmatprep.subr.mxu0 0.0
  %265 = vmatpush1.msra.mxu0 %v42
  %266 = vmatprep.subr.mxu0 0.0
  %267 = vmatpush1.msra.mxu0 %v43
  %268 = vmatprep.subr.mxu0 0.0
  %269 = vmatpush1.msra.mxu0 %v44
  %270 = vmatprep.subr.mxu0 0.0
  %271 = vmatpush1.msra.mxu0 %v45
  %272 = vmatprep.subr.mxu0 0.0
  %273 = vmatpush1.msra.mxu0 %v46
  %274 = vmatprep.subr.mxu0 0.0
  %275 = vmatpush1.msra.mxu0 %v47
  %276 = vmatprep.subr.mxu0 0.0
  %277 = vmatpush1.msra.mxu0 %v48
  %278 = vmatprep.subr.mxu0 0.0
  %279 = vmatpush1.msra.mxu0 %v49
  %280 = vmatprep.subr.mxu0 0.0
  %281 = vmatpush1.msra.mxu0 %v50
  %282 = vmatprep.subr.mxu0 0.0
  %283 = vmatpush1.msra.mxu0 %v51
  %284 = vmatprep.subr.mxu0 0.0
  %285 = vmatpush1.msra.mxu0 %v52
  %286 = vmatprep.subr.mxu0 0.0
  %287 = vmatpush1.msra.mxu0 %v53
  %288 = vmatprep.subr.mxu0 0.0
  %289 = vmatpush1.msra.mxu0 %v54
  %290 = vmatprep.subr.mxu0 0.0
  %291 = vmatpush1.msra.mxu0 %v55
  %292 = vmatprep.subr.mxu0 0.0
  %293 = vmatpush1.msra.mxu0 %v56
  %294 = vmatprep.subr.mxu0 0.0
  %295 = vmatpush1.msra.mxu0 %v57
  %296 = vmatprep.subr.mxu0 0.0
  %297 = vmatpush1.msra.mxu0 %v58
  %298 = vmatprep.mubr.f32.mxu0 %v15
  %299 = vmatmul.mubr.f32.gmra.mrb[0].mxu0 %v14
  %v300 = vpop.f32.mrb[0].mxu0
  %v301 = vadd.f32 %v228, %v300
  %v302 = vpop.f32.mrb[0].mxu0
  %303 = vdwg.mxu0
  %304 = vmatprep.subr.mxu0 0.0
  %305 = vmatpush1.msra.mxu0 %v59
  %306 = vmatprep.subr.mxu0 0.0
  %307 = vmatpush1.msra.mxu0 %v60
  %308 = vmatprep.subr.mxu0 0.0
  %309 = vmatpush1.msra.mxu0 %v61
  %310 = vmatprep.subr.mxu0 0.0
  %311 = vmatpush1.msra.mxu0 %v62
  %312 = vmatprep.subr.mxu0 0.0
  %313 = vmatpush1.msra.mxu0 %v63
  %314 = vmatprep.subr.mxu0 0.0
  %315 = vmatpush1.msra.mxu0 %v64
  %316 = vmatprep.subr.mxu0 0.0
  %317 = vmatpush1.msra.mxu0 %v65
  %318 = vmatprep.subr.mxu0 0.0
  %319 = vmatpush1.msra.mxu0 %v66
  %320 = vmatprep.subr.mxu0 0.0
  %321 = vmatpush1.msra.mxu0 %v67
  %322 = vmatprep.subr.mxu0 0.0
  %323 = vmatpush1.msra.mxu0 %v68
  %324 = vmatprep.subr.mxu0 0.0
  %325 = vmatpush1.msra.mxu0 %v69
  %326 = vmatprep.subr.mxu0 0.0
  %327 = vmatpush1.msra.mxu0 %v70
  %328 = vmatprep.subr.mxu0 0.0
  %329 = vmatpush1.msra.mxu0 %v71
  %330 = vmatprep.subr.mxu0 0.0
  %331 = vmatpush1.msra.mxu0 %v72
  %332 = vmatprep.subr.mxu0 0.0
  %333 = vmatpush1.msra.mxu0 %v73
  %334 = vmatprep.subr.mxu0 0.0
  %335 = vmatpush1.msra.mxu0 %v74
  %336 = vmatprep.subr.mxu0 0.0
  %337 = vmatpush1.msra.mxu0 %v75
  %338 = vmatprep.subr.mxu0 0.0
  %339 = vmatpush1.msra.mxu0 %v76
  %340 = vmatprep.subr.mxu0 0.0
  %341 = vmatpush1.msra.mxu0 %v77
  %342 = vmatprep.subr.mxu0 0.0
  %343 = vmatpush1.msra.mxu0 %v78
  %344 = vmatprep.subr.mxu0 0.0
  %345 = vmatpush1.msra.mxu0 %v79
  %346 = vmatprep.subr.mxu0 0.0
  %347 = vmatpush1.msra.mxu0 %v80
  %348 = vmatprep.subr.mxu0 0.0
  %349 = vmatpush1.msra.mxu0 %v81
  %350 = vmatprep.subr.mxu0 0.0
  %351 = vmatpush1.msra.mxu0 %v82
  %352 = vmatprep.subr.mxu0 0.0
  %353 = vmatpush1.msra.mxu0 %v83
  %354 = vmatprep.subr.mxu0 0.0
  %355 = vmatpush1.msra.mxu0 %v84
  %356 = vmatprep.subr.mxu0 0.0
  %357 = vmatpush1.msra.mxu0 %v85
  %358 = vmatprep.subr.mxu0 0.0
  %359 = vmatpush1.msra.mxu0 %v86
  %360 = vmatprep.subr.mxu0 0.0
  %361 = vmatpush1.msra.mxu0 %v87
  %362 = vmatprep.subr.mxu0 0.0
  %363 = vmatpush1.msra.mxu0 %v88
  %364 = vmatprep.subr.mxu0 0.0
  %365 = vmatpush1.msra.mxu0 %v89
  %366 = vmatprep.subr.mxu0 0.0
  %367 = vmatpush1.msra.mxu0 %v90
  %368 = vmatprep.mubr.f32.mxu0 %v17
  %369 = vmatmul.mubr.f32.gmra.mrb[0].mxu0 %v16
  %v370 = vpop.f32.mrb[0].mxu0
  %v371 = vadd.f32 %v301, %v370
  %v372 = vpop.f32.mrb[0].mxu0
  %373 = vdwg.mxu0
  %374 = vmatprep.subr.mxu0 0.0
  %375 = vmatpush1.msra.mxu0 %v91
  %376 = vmatprep.subr.mxu0 0.0
  %377 = vmatpush1.msra.mxu0 %v92
  %378 = vmatprep.subr.mxu0 0.0
  %379 = vmatpush1.msra.mxu0 %v93
  %380 = vmatprep.subr.mxu0 0.0
  %381 = vmatpush1.msra.mxu0 %v94
  %382 = vmatprep.subr.mxu0 0.0
  %383 = vmatpush1.msra.mxu0 %v95
  %384 = vmatprep.subr.mxu0 0.0
  %385 = vmatpush1.msra.mxu0 %v96
  %386 = vmatprep.subr.mxu0 0.0
  %387 = vmatpush1.msra.mxu0 %v97
  %388 = vmatprep.subr.mxu0 0.0
  %389 = vmatpush1.msra.mxu0 %v98
  %390 = vmatprep.subr.mxu0 0.0
  %391 = vmatpush1.msra.mxu0 %v99
  %392 = vmatprep.subr.mxu0 0.0
  %393 = vmatpush1.msra.mxu0 %v100
  %394 = vmatprep.subr.mxu0 0.0
  %395 = vmatpush1.msra.mxu0 %v101
  %396 = vmatprep.subr.mxu0 0.0
  %397 = vmatpush1.msra.mxu0 %v102
  %398 = vmatprep.subr.mxu0 0.0
  %399 = vmatpush1.msra.mxu0 %v103
  %400 = vmatprep.subr.mxu0 0.0
  %401 = vmatpush1.msra.mxu0 %v104
  %402 = vmatprep.subr.mxu0 0.0
  %403 = vmatpush1.msra.mxu0 %v105
  %404 = vmatprep.subr.mxu0 0.0
  %405 = vmatpush1.msra.mxu0 %v106
  %406 = vmatprep.subr.mxu0 0.0
  %407 = vmatpush1.msra.mxu0 %v107
  %408 = vmatprep.subr.mxu0 0.0
  %409 = vmatpush1.msra.mxu0 %v108
  %410 = vmatprep.subr.mxu0 0.0
  %411 = vmatpush1.msra.mxu0 %v109
  %412 = vmatprep.subr.mxu0 0.0
  %413 = vmatpush1.msra.mxu0 %v110
  %414 = vmatprep.subr.mxu0 0.0
  %415 = vmatpush1.msra.mxu0 %v111
  %416 = vmatprep.subr.mxu0 0.0
  %417 = vmatpush1.msra.mxu0 %v112
  %418 = vmatprep.subr.mxu0 0.0
  %419 = vmatpush1.msra.mxu0 %v113
  %420 = vmatprep.subr.mxu0 0.0
  %421 = vmatpush1.msra.mxu0 %v114
  %422 = vmatprep.subr.mxu0 0.0
  %423 = vmatpush1.msra.mxu0 %v115
  %424 = vmatprep.subr.mxu0 0.0
  %425 = vmatpush1.msra.mxu0 %v116
  %426 = vmatprep.subr.mxu0 0.0
  %427 = vmatpush1.msra.mxu0 %v117
  %428 = vmatprep.subr.mxu0 0.0
  %429 = vmatpush1.msra.mxu0 %v118
  %430 = vmatprep.subr.mxu0 0.0
  %431 = vmatpush1.msra.mxu0 %v119
  %432 = vmatprep.subr.mxu0 0.0
  %433 = vmatpush1.msra.mxu0 %v120
  %434 = vmatprep.subr.mxu0 0.0
  %435 = vmatpush1.msra.mxu0 %v121
  %436 = vmatprep.subr.mxu0 0.0
  %437 = vmatpush1.msra.mxu0 %v122
  %438 = vmatprep.mubr.f32.mxu0 %v19
  %439 = vmatmul.mubr.f32.gmra.mrb[0].mxu0 %v18
  %v440 = vpop.f32.mrb[0].mxu0
  %v441 = vadd.f32 %v371, %v440
  %v442 = vpop.f32.mrb[0].mxu0
  %443 = vdwg.mxu0
  %444 = vmatprep.subr.mxu0 0.0
  %445 = vmatpush1.msra.mxu0 %v123
  %446 = vmatprep.subr.mxu0 0.0
  %447 = vmatpush1.msra.mxu0 %v124
  %448 = vmatprep.subr.mxu0 0.0
  %449 = vmatpush1.msra.mxu0 %v125
  %450 = vmatprep.subr.mxu0 0.0
  %451 = vmatpush1.msra.mxu0 %v126
  %452 = vmatprep.subr.mxu0 0.0
  %453 = vmatpush1.msra.mxu0 %v127
  %454 = vmatprep.subr.mxu0 0.0
  %455 = vmatpush1.msra.mxu0 %v128
  %456 = vmatprep.subr.mxu0 0.0
  %457 = vmatpush1.msra.mxu0 %v129
  %458 = vmatprep.subr.mxu0 0.0
  %459 = vmatpush1.msra.mxu0 %v130
  %460 = vmatprep.subr.mxu0 0.0
  %461 = vmatpush1.msra.mxu0 %v131
  %462 = vmatprep.subr.mxu0 0.0
  %463 = vmatpush1.msra.mxu0 %v132
  %464 = vmatprep.subr.mxu0 0.0
  %465 = vmatpush1.msra.mxu0 %v133
  %466 = vmatprep.subr.mxu0 0.0
  %467 = vmatpush1.msra.mxu0 %v134
  %468 = vmatprep.subr.mxu0 0.0
  %469 = vmatpush1.msra.mxu0 %v135
  %470 = vmatprep.subr.mxu0 0.0
  %471 = vmatpush1.msra.mxu0 %v136
  %472 = vmatprep.subr.mxu0 0.0
  %473 = vmatpush1.msra.mxu0 %v137
  %474 = vmatprep.subr.mxu0 0.0
  %475 = vmatpush1.msra.mxu0 %v138
  %476 = vmatprep.subr.mxu0 0.0
  %477 = vmatpush1.msra.mxu0 %v139
  %478 = vmatprep.subr.mxu0 0.0
  %479 = vmatpush1.msra.mxu0 %v140
  %480 = vmatprep.subr.mxu0 0.0
  %481 = vmatpush1.msra.mxu0 %v141
  %482 = vmatprep.subr.mxu0 0.0
  %483 = vmatpush1.msra.mxu0 %v142
  %484 = vmatprep.subr.mxu0 0.0
  %485 = vmatpush1.msra.mxu0 %v143
  %486 = vmatprep.subr.mxu0 0.0
  %487 = vmatpush1.msra.mxu0 %v144
  %488 = vmatprep.subr.mxu0 0.0
  %489 = vmatpush1.msra.mxu0 %v145
  %490 = vmatprep.subr.mxu0 0.0
  %491 = vmatpush1.msra.mxu0 %v146
  %492 = vmatprep.subr.mxu0 0.0
  %493 = vmatpush1.msra.mxu0 %v147
  %494 = vmatprep.subr.mxu0 0.0
  %495 = vmatpush1.msra.mxu0 %v148
  %496 = vmatprep.subr.mxu0 0.0
  %497 = vmatpush1.msra.mxu0 %v149
  %498 = vmatprep.subr.mxu0 0.0
  %499 = vmatpush1.msra.mxu0 %v150
  %500 = vmatprep.subr.mxu0 0.0
  %501 = vmatpush1.msra.mxu0 %v151
  %502 = vmatprep.subr.mxu0 0.0
  %503 = vmatpush1.msra.mxu0 %v152
  %504 = vmatprep.subr.mxu0 0.0
  %505 = vmatpush1.msra.mxu0 %v153
  %506 = vmatprep.subr.mxu0 0.0
  %507 = vmatpush1.msra.mxu0 %v154
  %508 = vmatprep.mubr.f32.mxu0 %v21
  %509 = vmatmul.mubr.f32.gmra.mrb[0].mxu0 %v20
  %v510 = vpop.f32.mrb[0].mxu0
  %v511 = vadd.f32 %v441, %v510
  %v512 = vpop.f32.mrb[0].mxu0
  %513 = vdwg.mxu0
  %514 = vmatprep.subr.mxu0 0.0
  %515 = vmatpush1.msra.mxu0 %v155
  %516 = vmatprep.subr.mxu0 0.0
  %517 = vmatpush1.msra.mxu0 %v156
  %518 = vmatprep.subr.mxu0 0.0
  %519 = vmatpush1.msra.mxu0 %v157
  %520 = vmatprep.subr.mxu0 0.0
  %521 = vmatpush1.msra.mxu0 %v158
  %522 = vmatprep.subr.mxu0 0.0
  %523 = vmatpush1.msra.mxu0 %v159
  %524 = vmatprep.subr.mxu0 0.0
  %525 = vmatpush1.msra.mxu0 %v160
  %526 = vmatprep.subr.mxu0 0.0
  %527 = vmatpush1.msra.mxu0 %v161
  %528 = vmatprep.subr.mxu0 0.0
  %529 = vmatpush1.msra.mxu0 %v162
  %530 = vmatprep.subr.mxu0 0.0
  %531 = vmatpush1.msra.mxu0 %v163
  %532 = vmatprep.subr.mxu0 0.0
  %533 = vmatpush1.msra.mxu0 %v164
  %534 = vmatprep.subr.mxu0 0.0
  %535 = vmatpush1.msra.mxu0 %v165
  %536 = vmatprep.subr.mxu0 0.0
  %537 = vmatpush1.msra.mxu0 %v166
  %538 = vmatprep.subr.mxu0 0.0
  %539 = vmatpush1.msra.mxu0 %v167
  %540 = vmatprep.subr.mxu0 0.0
  %541 = vmatpush1.msra.mxu0 %v168
  %542 = vmatprep.subr.mxu0 0.0
  %543 = vmatpush1.msra.mxu0 %v169
  %544 = vmatprep.subr.mxu0 0.0
  %545 = vmatpush1.msra.mxu0 %v170
  %546 = vmatprep.subr.mxu0 0.0
  %547 = vmatpush1.msra.mxu0 %v171
  %548 = vmatprep.subr.mxu0 0.0
  %549 = vmatpush1.msra.mxu0 %v172
  %550 = vmatprep.subr.mxu0 0.0
  %551 = vmatpush1.msra.mxu0 %v173
  %552 = vmatprep.subr.mxu0 0.0
  %553 = vmatpush1.msra.mxu0 %v174
  %554 = vmatprep.subr.mxu0 0.0
  %555 = vmatpush1.msra.mxu0 %v175
  %556 = vmatprep.subr.mxu0 0.0
  %557 = vmatpush1.msra.mxu0 %v176
  %558 = vmatprep.subr.mxu0 0.0
  %559 = vmatpush1.msra.mxu0 %v177
  %560 = vmatprep.subr.mxu0 0.0
  %561 = vmatpush1.msra.mxu0 %v178
  %562 = vmatprep.subr.mxu0 0.0
  %563 = vmatpush1.msra.mxu0 %v179
  %564 = vmatprep.subr.mxu0 0.0
  %565 = vmatpush1.msra.mxu0 %v180
  %566 = vmatprep.subr.mxu0 0.0
  %567 = vmatpush1.msra.mxu0 %v181
  %568 = vmatprep.subr.mxu0 0.0
  %569 = vmatpush1.msra.mxu0 %v182
  %570 = vmatprep.subr.mxu0 0.0
  %571 = vmatpush1.msra.mxu0 %v183
  %572 = vmatprep.subr.mxu0 0.0
  %573 = vmatpush1.msra.mxu0 %v184
  %574 = vmatprep.subr.mxu0 0.0
  %575 = vmatpush1.msra.mxu0 %v185
  %576 = vmatprep.subr.mxu0 0.0
  %577 = vmatpush1.msra.mxu0 %v186
  %578 = vmatprep.mubr.f32.mxu0 %v23
  %579 = vmatmul.mubr.f32.gmra.mrb[0].mxu0 %v22
  %v580 = vpop.f32.mrb[0].mxu0
  %v581 = vadd.f32 %v511, %v580
  %v582 = vpop.f32.mrb[0].mxu0
  %583 = vdwg.mxu0
  %584 = vmatprep.subr.mxu0 0.0
  %585 = vmatpush1.msra.mxu0 %v187
  %586 = vmatprep.subr.mxu0 0.0
  %587 = vmatpush1.msra.mxu0 %v188
  %588 = vmatprep.subr.mxu0 0.0
  %589 = vmatpush1.msra.mxu0 %v189
  %590 = vmatprep.subr.mxu0 0.0
  %591 = vmatpush1.msra.mxu0 %v190
  %592 = vmatprep.subr.mxu0 0.0
  %593 = vmatpush1.msra.mxu0 %v191
  %594 = vmatprep.subr.mxu0 0.0
  %595 = vmatpush1.msra.mxu0 %v192
  %596 = vmatprep.subr.mxu0 0.0
  %597 = vmatpush1.msra.mxu0 %v193
  %598 = vmatprep.subr.mxu0 0.0
  %599 = vmatpush1.msra.mxu0 %v194
  %600 = vmatprep.subr.mxu0 0.0
  %601 = vmatpush1.msra.mxu0 %v195
  %602 = vmatprep.subr.mxu0 0.0
  %603 = vmatpush1.msra.mxu0 %v196
  %604 = vmatprep.subr.mxu0 0.0
  %605 = vmatpush1.msra.mxu0 %v197
  %606 = vmatprep.subr.mxu0 0.0
  %607 = vmatpush1.msra.mxu0 %v198
  %608 = vmatprep.subr.mxu0 0.0
  %609 = vmatpush1.msra.mxu0 %v199
  %610 = vmatprep.subr.mxu0 0.0
  %611 = vmatpush1.msra.mxu0 %v200
  %612 = vmatprep.subr.mxu0 0.0
  %613 = vmatpush1.msra.mxu0 %v201
  %614 = vmatprep.subr.mxu0 0.0
  %615 = vmatpush1.msra.mxu0 %v202
  %616 = vmatprep.subr.mxu0 0.0
  %617 = vmatpush1.msra.mxu0 %v203
  %618 = vmatprep.subr.mxu0 0.0
  %619 = vmatpush1.msra.mxu0 %v204
  %620 = vmatprep.subr.mxu0 0.0
  %621 = vmatpush1.msra.mxu0 %v205
  %622 = vmatprep.subr.mxu0 0.0
  %623 = vmatpush1.msra.mxu0 %v206
  %624 = vmatprep.subr.mxu0 0.0
  %625 = vmatpush1.msra.mxu0 %v207
  %626 = vmatprep.subr.mxu0 0.0
  %627 = vmatpush1.msra.mxu0 %v208
  %628 = vmatprep.subr.mxu0 0.0
  %629 = vmatpush1.msra.mxu0 %v209
  %630 = vmatprep.subr.mxu0 0.0
  %631 = vmatpush1.msra.mxu0 %v210
  %632 = vmatprep.subr.mxu0 0.0
  %633 = vmatpush1.msra.mxu0 %v211
  %634 = vmatprep.subr.mxu0 0.0
  %635 = vmatpush1.msra.mxu0 %v212
  %636 = vmatprep.subr.mxu0 0.0
  %637 = vmatpush1.msra.mxu0 %v213
  %638 = vmatprep.subr.mxu0 0.0
  %639 = vmatpush1.msra.mxu0 %v214
  %640 = vmatprep.subr.mxu0 0.0
  %641 = vmatpush1.msra.mxu0 %v215
  %642 = vmatprep.subr.mxu0 0.0
  %643 = vmatpush1.msra.mxu0 %v216
  %644 = vmatprep.subr.mxu0 0.0
  %645 = vmatpush1.msra.mxu0 %v217
  %646 = vmatprep.subr.mxu0 0.0
  %647 = vmatpush1.msra.mxu0 %v218
  %648 = vmatprep.mubr.f32.mxu0 %v25
  %649 = vmatmul.mubr.f32.gmra.mrb[0].mxu0 %v24
  %v650 = vpop.f32.mrb[0].mxu0
  %v651 = vadd.f32 %v581, %v650
  %v652 = vpop.f32.mrb[0].mxu0
  %653 = vdwg.mxu0
  %654 = vmatprep.subr.mxu0 0.0
  %655 = vmatpush1.msra.mxu0 %v219
  %656 = vmatprep.subr.mxu0 0.0
  %657 = vmatpush1.msra.mxu0 %v220
  %658 = vmatprep.subr.mxu0 0.0
  %659 = vmatpush1.msra.mxu0 %v221
  %660 = vmatprep.subr.mxu0 0.0
  %661 = vmatpush1.msra.mxu0 %v222
  %662 = vmatprep.subr.mxu0 0.0
  %663 = vmatpush1.msra.mxu0 0.0
  %664 = vmatprep.subr.mxu0 0.0
  %665 = vmatpush1.msra.mxu0 0.0
  %666 = vmatprep.subr.mxu0 0.0
  %667 = vmatpush1.msra.mxu0 0.0
  %668 = vmatprep.subr.mxu0 0.0
  %669 = vmatpush1.msra.mxu0 0.0
  %670 = vmatprep.subr.mxu0 0.0
  %671 = vmatpush1.msra.mxu0 0.0
  %672 = vmatprep.subr.mxu0 0.0
  %673 = vmatpush1.msra.mxu0 0.0
  %674 = vmatprep.subr.mxu0 0.0
  %675 = vmatpush1.msra.mxu0 0.0
  %676 = vmatprep.subr.mxu0 0.0
  %677 = vmatpush1.msra.mxu0 0.0
  %678 = vmatprep.subr.mxu0 0.0
  %679 = vmatpush1.msra.mxu0 0.0
  %680 = vmatprep.subr.mxu0 0.0
  %681 = vmatpush1.msra.mxu0 0.0
  %682 = vmatprep.subr.mxu0 0.0
  %683 = vmatpush1.msra.mxu0 0.0
  %684 = vmatprep.subr.mxu0 0.0
  %685 = vmatpush1.msra.mxu0 0.0
  %686 = vmatprep.subr.mxu0 0.0
  %687 = vmatpush1.msra.mxu0 0.0
  %688 = vmatprep.subr.mxu0 0.0
  %689 = vmatpush1.msra.mxu0 0.0
  %690 = vmatprep.subr.mxu0 0.0
  %691 = vmatpush1.msra.mxu0 0.0
  %692 = vmatprep.subr.mxu0 0.0
  %693 = vmatpush1.msra.mxu0 0.0
  %694 = vmatprep.subr.mxu0 0.0
  %695 = vmatpush1.msra.mxu0 0.0
  %696 = vmatprep.subr.mxu0 0.0
  %697 = vmatpush1.msra.mxu0 0.0
  %698 = vmatprep.subr.mxu0 0.0
  %699 = vmatpush1.msra.mxu0 0.0
  %700 = vmatprep.subr.mxu0 0.0
  %701 = vmatpush1.msra.mxu0 0.0
  %702 = vmatprep.subr.mxu0 0.0
  %703 = vmatpush1.msra.mxu0 0.0
  %704 = vmatprep.subr.mxu0 0.0
  %705 = vmatpush1.msra.mxu0 0.0
  %706 = vmatprep.subr.mxu0 0.0
  %707 = vmatpush1.msra.mxu0 0.0
  %708 = vmatprep.subr.mxu0 0.0
  %709 = vmatpush1.msra.mxu0 0.0
  %710 = vmatprep.subr.mxu0 0.0
  %711 = vmatpush1.msra.mxu0 0.0
  %712 = vmatprep.subr.mxu0 0.0
  %713 = vmatpush1.msra.mxu0 0.0
  %714 = vmatprep.subr.mxu0 0.0
  %715 = vmatpush1.msra.mxu0 0.0
  %716 = vmatprep.subr.mxu0 0.0
  %717 = vmatpush1.msra.mxu0 0.0
  %718 = vmatprep.mubr.f32.mxu0 0.0
  %719 = vmatmul.mubr.f32.gmra.mrb[0].mxu0 %v232
  %v720 = vpop.f32.mrb[0].mxu0
  %v721 = vadd.f32 %v651, %v720
  %v722 = vpop.f32.mrb[0].mxu0
  %723 = vdwg.mxu0
  %724 = vst [vmem:[%s3] sm:$0xff] %v721
  // Predicated region
  $region14: #{autoencoder_forward.11} parent=0 // pred_check
    _
  $region15: #{autoencoder_forward.11} parent=0 // pred_check_branch
    %726 = sbr.rel (0) target = $region17
  $region16: #{autoencoder_forward.11} parent=0 // pred_region
    _
  $region17: #{autoencoder_forward.11} parent=0 // pred_fallthru
    _
  // Predicated region
  $region18: #{autoencoder_forward.11} parent=0 // pred_check
    _
  $region19: #{autoencoder_forward.11} parent=0 // pred_check_branch
    %728 = sbr.rel (0) target = $region21
  $region20: #{autoencoder_forward.11} parent=0 // pred_region
    _
  $region21: #{autoencoder_forward.11} parent=0 // pred_fallthru
    _

// kernel: autoencoder_forward.13
$region0: #{autoencoder_forward.13}
  #allocation0 [shape = 'u32[]', space=smem, size = 0x4, offset = 0x4, fixed_abs, tag = 'smem constant byte address 0x4 - core index']
  #allocation1 [shape = 'u32[144,128]{1,0:T(1,128)}', space=vmem, size = 0x12000, scoped, tag = 'internal scratch']
  #allocation2 [shape = 'u32[2048]{0}', space=vmem, size = 0x2000, scoped, tag = 'scoped memory for autoencoder_forward.13']
  #allocation3 [shape = 'u32[2048]{0}', space=vmem, size = 0x2000, scoped, tag = 'scoped memory for autoencoder_forward.13']
  #allocation4 [shape = 'u32[2048]{0}', space=vmem, size = 0x2000, scoped, tag = 'scoped memory for autoencoder_forward.13']
  #allocation5 [shape = 'u32[2048]{0}', space=vmem, size = 0x2000, scoped, tag = 'scoped memory for autoencoder_forward.13']
  #allocation6 [shape = 'u32[2048]{0}', space=vmem, size = 0x2000, scoped, tag = 'scoped memory for autoencoder_forward.13']
  %s0 = inlined_call_operand.vmem [shape: f32[1024,128], index: 0, kind: input, shape index: {}]
  %s1 = inlined_call_operand.vmem [shape: f32[1,128], index: 1, kind: input, shape index: {}]
  %s2 = inlined_call_operand.vmem [shape: f32[50,1024], index: 2, kind: input, shape index: {}]
  %s3 = inlined_call_operand.<no memory space> [shape: f32[], index: 3, kind: input, shape index: {}]
  %s4 = inlined_call_operand.vmem [shape: f32[64,128], index: 4, kind: output, shape index: {}]
  %s5 = sld [smem:[#allocation0]]
  $region45: #{autoencoder_forward.13} parent=0
    _
  %s7 = ssub.s32 1, %s5
  %s8 = scalar_select 0, %s7, %s5
  %v9 = vstv %s3
  loop: start=0, step=1, limit=4
  $region2: #{autoencoder_forward.13} parent=0 // loop_pre_header
    _
  $region3: #{autoencoder_forward.13} parent=0 // loop_header
    %s11 = sphi 0, %s15
    %p12 = scmp.ge.s32.totalorder %s11, 4
    %s21 = sphi 0, %s23
    %s24 = sphi 0, %s21
    %s25 = sphi 0, %s24
    %s41 = sphi 0, %s25
    %s45 = sphi 0, %s45
    %s47 = sphi 0, %s45
    %s48 = sphi 0, %s47
    %s62 = sphi 0, %s48
    %s66 = sphi 0, %s66
    %s68 = sphi 0, %s66
    %s69 = sphi 0, %s68
    %s83 = sphi 0, %s69
    %s89 = sphi 0, %s91
    %s92 = sphi 0, %s89
    %s93 = sphi 0, %s92
    %s109 = sphi 0, %s93
  $region4: #{autoencoder_forward.13} parent=0 // loop_header_branch
    %14 = sbr.rel (%p12) target = $region8
  $region5: #{autoencoder_forward.13} parent=0 // loop_body
    %s16 = ssub.s32 %s11, 1
    %s17 = ssub.s32 %s11, 2
    %s18 = sadd.s32 %s11, 1
    %s19 = ssub.s32 %s11, %s18
    %p20 = scmp.eq.s32.totalorder %s19, 0
    %s22 = sadd.s32 %s21, 1
    %s23 = scalar_select %p20, %s21, %s22
    %p26 = pneg %p20
    %p27 = scmp.eq.s32.totalorder %s11, 1
    %p28 = por %p26, %p27
    %p29 = scmp.ne.s32.totalorder %s21, %s24
    %p30 = scmp.eq.s32.totalorder %s11, 0
    %p31 = por %p29, %p30
    %p32 = scmp.ne.s32.totalorder %s21, %s24
    %p33 = scmp.eq.s32.totalorder %s16, 1
    %p34 = por %p32, %p33
    %p35 = scmp.ne.s32.totalorder %s24, %s25
    %p36 = scmp.eq.s32.totalorder %s16, 0
    %p37 = por %p35, %p36
    %p38 = scmp.ne.s32.totalorder %s24, %s25
    %p39 = scmp.eq.s32.totalorder %s17, 1
    %p40 = por %p38, %p39
    %p42 = scmp.ne.s32.totalorder %s25, %s41
    %p43 = scmp.eq.s32.totalorder %s17, 0
    %p44 = por %p42, %p43
    %s46 = sadd.s32 %s45, 1
    %p49 = scmp.eq.s32.totalorder %s11, 1
    %p50 = scmp.ne.s32.totalorder %s45, %s47
    %p51 = scmp.eq.s32.totalorder %s11, 0
    %p52 = por %p50, %p51
    %p53 = scmp.ne.s32.totalorder %s45, %s47
    %p54 = scmp.eq.s32.totalorder %s16, 1
    %p55 = por %p53, %p54
    %p56 = scmp.ne.s32.totalorder %s47, %s48
    %p57 = scmp.eq.s32.totalorder %s16, 0
    %p58 = por %p56, %p57
    %p59 = scmp.ne.s32.totalorder %s47, %s48
    %p60 = scmp.eq.s32.totalorder %s17, 1
    %p61 = por %p59, %p60
    %p63 = scmp.ne.s32.totalorder %s48, %s62
    %p64 = scmp.eq.s32.totalorder %s17, 0
    %p65 = por %p63, %p64
    %s67 = sadd.s32 %s66, 1
    %p70 = scmp.eq.s32.totalorder %s11, 1
    %p71 = scmp.ne.s32.totalorder %s66, %s68
    %p72 = scmp.eq.s32.totalorder %s11, 0
    %p73 = por %p71, %p72
    %p74 = scmp.ne.s32.totalorder %s66, %s68
    %p75 = scmp.eq.s32.totalorder %s16, 1
    %p76 = por %p74, %p75
    %p77 = scmp.ne.s32.totalorder %s68, %s69
    %p78 = scmp.eq.s32.totalorder %s16, 0
    %p79 = por %p77, %p78
    %p80 = scmp.ne.s32.totalorder %s68, %s69
    %p81 = scmp.eq.s32.totalorder %s17, 1
    %p82 = por %p80, %p81
    %p84 = scmp.ne.s32.totalorder %s69, %s83
    %p85 = scmp.eq.s32.totalorder %s17, 0
    %p86 = por %p84, %p85
    %s87 = ssub.s32 %s11, %s18
    %p88 = scmp.eq.s32.totalorder %s87, 0
    %s90 = sadd.s32 %s89, 1
    %s91 = scalar_select %p88, %s89, %s90
    %p94 = pneg %p88
    %p95 = scmp.eq.s32.totalorder %s11, 1
    %p96 = por %p94, %p95
    %p97 = scmp.ne.s32.totalorder %s89, %s92
    %p98 = scmp.eq.s32.totalorder %s11, 0
    %p99 = por %p97, %p98
    %p100 = scmp.ne.s32.totalorder %s89, %s92
    %p101 = scmp.eq.s32.totalorder %s16, 1
    %p102 = por %p100, %p101
    %p103 = scmp.ne.s32.totalorder %s92, %s93
    %p104 = scmp.eq.s32.totalorder %s16, 0
    %p105 = por %p103, %p104
    %p106 = scmp.ne.s32.totalorder %s92, %s93
    %p107 = scmp.eq.s32.totalorder %s17, 1
    %p108 = por %p106, %p107
    %p110 = scmp.ne.s32.totalorder %s93, %s109
    %p111 = scmp.eq.s32.totalorder %s17, 0
    %p112 = por %p110, %p111
    %p113 = scmp.le.s32.totalorder 1, %s11
    %p114 = scmp.lt.s32.totalorder %s11, 3
    %p115 = pnand %p113, %p114
    %p116 = pneg %p115
    // Predicated region
    $region9: #{autoencoder_forward.13} parent=5 // pred_check
      _
    $region10: #{autoencoder_forward.13} parent=5 // pred_check_branch
      %118 = sbr.rel (%p115) target = $region12
    $region11: #{autoencoder_forward.13} parent=5 // pred_region
      %s119 = ssub.s32 %s11, 1
      // Predicated region
      $region13: #{autoencoder_forward.13} parent=11 // pred_check
        %p120 = pneg %p58
      $region14: #{autoencoder_forward.13} parent=11 // pred_check_branch
        %122 = sbr.rel (%p120) target = $region16
      $region15: #{autoencoder_forward.13} parent=11 // pred_region
        _
      $region16: #{autoencoder_forward.13} parent=11 // pred_fallthru
        _
      // Predicated region
      $region17: #{autoencoder_forward.13} parent=11 // pred_check
        %p123 = pneg %p79
      $region18: #{autoencoder_forward.13} parent=11 // pred_check_branch
        %125 = sbr.rel (%p123) target = $region20
      $region19: #{autoencoder_forward.13} parent=11 // pred_region
        _
      $region20: #{autoencoder_forward.13} parent=11 // pred_fallthru
        _
    $region12: #{autoencoder_forward.13} parent=5 // pred_fallthru
      _
    %p126 = scmp.lt.s32.totalorder %s11, 2
    // Predicated region
    $region21: #{autoencoder_forward.13} parent=5 // pred_check
      %p127 = pneg %p126
    $region22: #{autoencoder_forward.13} parent=5 // pred_check_branch
      %129 = sbr.rel (%p127) target = $region24
    $region23: #{autoencoder_forward.13} parent=5 // pred_region
      // Predicated region
      $region25: #{autoencoder_forward.13} parent=23 // pred_check
        %p130 = pneg %p31
      $region26: #{autoencoder_forward.13} parent=23 // pred_check_branch
        %132 = sbr.rel (%p130) target = $region28
      $region27: #{autoencoder_forward.13} parent=23 // pred_region
        %s133 = smul.u32 4, %s11
        %s134 = ssub.s32 7, %s133
        %p135 = scmp.lt.s32.totalorder %s134, 4
        %s136 = scalar_select %p135, %s134, 4
        %s137 = smul.u32 128, %s136
        %s138 = smul.u32 %s137, 8
        %p139 = scmp.lt.s32.totalorder %s133, 6
        %s140 = scalar_select %p139, %s133, 6
        %s141 = smul.addr %s140, 8
        %s142 = smul.addr %s141, 8
        %s143 = scalar_lea.vmem %s2, %s142
        %s144 = smul.u32 4, %s11
        %s145 = ssub.s32 7, %s144
        %p146 = scmp.lt.s32.totalorder %s145, 4
        %s147 = scalar_select %p146, %s145, 4
        %s148 = smul.u32 128, %s147
        %s149 = smul.u32 %s148, 8
      $region28: #{autoencoder_forward.13} parent=23 // pred_fallthru
        _
    $region24: #{autoencoder_forward.13} parent=5 // pred_fallthru
      _
    %p150 = scmp.le.s32.totalorder 1, %s11
    %p151 = scmp.lt.s32.totalorder %s11, 3
    %p152 = pnand %p150, %p151
    %p153 = pneg %p152
    // Predicated region
    $region29: #{autoencoder_forward.13} parent=5 // pred_check
      _
    $region30: #{autoencoder_forward.13} parent=5 // pred_check_branch
      %155 = sbr.rel (%p152) target = $region32
    $region31: #{autoencoder_forward.13} parent=5 // pred_region
      #allocation7 [shape = 'u8[131072]{0}', space=vmem, size = 0x20000, dematerialized = true, scoped, tag = 'FusionAdapter Buffer %fusion.3 = f32[64,1024]{1,0:T(8,128)} fusion(%param_2.10, %param_3.5), kind=kLoop, calls=%fused_computation.30.clone, metadata={op_name="jit(autoencoder_forward)/jit(_pad)/pad" stack_frame_id=52}']
      %s156 = ssub.s32 %s11, 1
      %s157 = smul.u32 4, %s16
      %s158 = ssub.s32 7, %s157
      %p159 = scmp.lt.s32.totalorder %s158, 4
      %s160 = scalar_select %p159, %s158, 4
      %s161 = smul.u32 128, %s160
      %s162 = smul.u32 %s161, 8
      %p163 = scmp.lt.s32.totalorder %s157, 6
      %s164 = scalar_select %p163, %s157, 6
      %s165 = smul.addr %s164, 8
      %s166 = smul.addr %s165, 8
      %s167 = scalar_lea.vmem %s2, %s166
      %p168 = pneg %p37
      %p169 = pneg %p34
      %p170 = pneg %p58
      %p171 = pneg %p55
      %p172 = pneg %p79
      %p173 = pneg %p76
      %p174 = pneg %p105
      %p175 = pneg %p102
      %s176 = smul.u32 4, %s16
      %p177 = scmp.lt.s32.totalorder %s176, 7
      %s178 = scalar_select %p177, %s176, 7
      %s179 = smul.addr %s178, 8
      %s180 = scalar_lea.vmem %s4, %s179
      %s181 = smul.u32 4, %s16
      %s182 = ssub.s32 7, %s181
      %p183 = scmp.lt.s32.totalorder %s182, 4
      %s184 = scalar_select %p183, %s182, 4
      %s185 = smul.u32 128, %s184
      %s186 = smul.u32 %s185, 8
      %p187 = scmp.lt.s32.totalorder %s181, 6
      %s188 = scalar_select %p187, %s181, 6
      %s189 = smul.addr %s188, 8
      %s190 = smul.addr %s189, 8
      %s191 = scalar_lea.vmem %s2, %s190
      %s192 = smul.u32 4, %s16
      %s193 = ssub.s32 7, %s192
      %p194 = scmp.lt.s32.totalorder %s193, 4
      %s195 = scalar_select %p194, %s193, 4
      %s196 = smul.u32 128, %s195
      %s197 = smul.u32 %s196, 8
      %s198 = smul.u32 4, %s16
      %p199 = scmp.lt.s32.totalorder %s198, 7
      %s200 = scalar_select %p199, %s198, 7
      %s201 = smul.addr %s200, 8
      %s202 = scalar_lea.vmem %s4, %s201
      %s203 = smul.u32 4, %s16
      %v204 = vld [vmem:[%s191] sm:$0xff]
      %s205 = smul.addr %s192, 8
      %v206 = vlaneseq
      %v207 = vshrl.u32 %v206, 7
      %v208 = vstv %s205
      %v209 = vadd.s32 %v207, %v208
      %vm210 = vcmp.lt.s32.totalorder %v209, 50
      %v211 = vsel %vm210, %v204, %v9
      %213 = vst [vmem:[#allocation7] sm:$0xff] %v211
      %s214 = scalar_lea.vmem %s191, 8
      %v215 = vld [vmem:[%s214] sm:$0xff]
      %s216 = smul.addr %s192, 8
      %v217 = vlaneseq
      %v218 = vshrl.u32 %v217, 7
      %v219 = vstv %s216
      %v220 = vadd.s32 %v218, %v219
      %vm221 = vcmp.lt.s32.totalorder %v220, 50
      %v222 = vsel %vm221, %v215, %v9
      %s223 = scalar_lea.vmem [#allocation7], 8
      %225 = vst [vmem:[%s223] sm:$0xff] %v222
      %s226 = scalar_lea.vmem %s191, 16
      %v227 = vld [vmem:[%s226] sm:$0xff]
      %s228 = smul.addr %s192, 8
      %v229 = vlaneseq
      %v230 = vshrl.u32 %v229, 7
      %v231 = vstv %s228
      %v232 = vadd.s32 %v230, %v231
      %vm233 = vcmp.lt.s32.totalorder %v232, 50
      %v234 = vsel %vm233, %v227, %v9
      %s235 = scalar_lea.vmem [#allocation7], 16
      %237 = vst [vmem:[%s235] sm:$0xff] %v234
      %s238 = scalar_lea.vmem %s191, 24
      %v239 = vld [vmem:[%s238] sm:$0xff]
      %s240 = smul.addr %s192, 8
      %v241 = vlaneseq
      %v242 = vshrl.u32 %v241, 7
      %v243 = vstv %s240
      %v244 = vadd.s32 %v242, %v243
      %vm245 = vcmp.lt.s32.totalorder %v244, 50
      %v246 = vsel %vm245, %v239, %v9
      %s247 = scalar_lea.vmem [#allocation7], 24
      %249 = vst [vmem:[%s247] sm:$0xff] %v246
      %s250 = scalar_lea.vmem %s191, 32
      %v251 = vld [vmem:[%s250] sm:$0xff]
      %s252 = smul.addr %s192, 8
      %v253 = vlaneseq
      %v254 = vshrl.u32 %v253, 7
      %v255 = vstv %s252
      %v256 = vadd.s32 %v254, %v255
      %vm257 = vcmp.lt.s32.totalorder %v256, 50
      %v258 = vsel %vm257, %v251, %v9
      %s259 = scalar_lea.vmem [#allocation7], 32
      %261 = vst [vmem:[%s259] sm:$0xff] %v258
      %s262 = scalar_lea.vmem %s191, 40
      %v263 = vld [vmem:[%s262] sm:$0xff]
      %s264 = smul.addr %s192, 8
      %v265 = vlaneseq
      %v266 = vshrl.u32 %v265, 7
      %v267 = vstv %s264
      %v268 = vadd.s32 %v266, %v267
      %vm269 = vcmp.lt.s32.totalorder %v268, 50
      %v270 = vsel %vm269, %v263, %v9
      %s271 = scalar_lea.vmem [#allocation7], 40
      %273 = vst [vmem:[%s271] sm:$0xff] %v270
      %s274 = scalar_lea.vmem %s191, 48
      %v275 = vld [vmem:[%s274] sm:$0xff]
      %s276 = smul.addr %s192, 8
      %v277 = vlaneseq
      %v278 = vshrl.u32 %v277, 7
      %v279 = vstv %s276
      %v280 = vadd.s32 %v278, %v279
      %vm281 = vcmp.lt.s32.totalorder %v280, 50
      %v282 = vsel %vm281, %v275, %v9
      %s283 = scalar_lea.vmem [#allocation7], 48
      %285 = vst [vmem:[%s283] sm:$0xff] %v282
      %s286 = scalar_lea.vmem %s191, 56
      %v287 = vld [vmem:[%s286] sm:$0xff]
      %s288 = smul.addr %s192, 8
      %v289 = vlaneseq
      %v290 = vshrl.u32 %v289, 7
      %v291 = vstv %s288
      %v292 = vadd.s32 %v290, %v291
      %vm293 = vcmp.lt.s32.totalorder %v292, 50
      %v294 = vsel %vm293, %v287, %v9
      %s295 = scalar_lea.vmem [#allocation7], 56
      %297 = vst [vmem:[%s295] sm:$0xff] %v294
      %s298 = scalar_lea.vmem %s191, 64
      %v299 = vld [vmem:[%s298] sm:$0xff]
      %s300 = sadd.s32 %s192, 1
      %s301 = smul.addr %s300, 8
      %v302 = vlaneseq
      %v303 = vshrl.u32 %v302, 7
      %v304 = vstv %s301
      %v305 = vadd.s32 %v303, %v304
      %vm306 = vcmp.lt.s32.totalorder %v305, 50
      %v307 = vsel %vm306, %v299, %v9
      %s308 = scalar_lea.vmem [#allocation7], 64
      %310 = vst [vmem:[%s308] sm:$0xff] %v307
      %s311 = scalar_lea.vmem %s191, 72
      %v312 = vld [vmem:[%s311] sm:$0xff]
      %s313 = sadd.s32 %s192, 1
      %s314 = smul.addr %s313, 8
      %v315 = vlaneseq
      %v316 = vshrl.u32 %v315, 7
      %v317 = vstv %s314
      %v318 = vadd.s32 %v316, %v317
      %vm319 = vcmp.lt.s32.totalorder %v318, 50
      %v320 = vsel %vm319, %v312, %v9
      %s321 = scalar_lea.vmem [#allocation7], 72
      %323 = vst [vmem:[%s321] sm:$0xff] %v320
      %s324 = scalar_lea.vmem %s191, 80
      %v325 = vld [vmem:[%s324] sm:$0xff]
      %s326 = sadd.s32 %s192, 1
      %s327 = smul.addr %s326, 8
      %v328 = vlaneseq
      %v329 = vshrl.u32 %v328, 7
      %v330 = vstv %s327
      %v331 = vadd.s32 %v329, %v330
      %vm332 = vcmp.lt.s32.totalorder %v331, 50
      %v333 = vsel %vm332, %v325, %v9
      %s334 = scalar_lea.vmem [#allocation7], 80
      %336 = vst [vmem:[%s334] sm:$0xff] %v333
      %s337 = scalar_lea.vmem %s191, 88
      %v338 = vld [vmem:[%s337] sm:$0xff]
      %s339 = sadd.s32 %s192, 1
      %s340 = smul.addr %s339, 8
      %v341 = vlaneseq
      %v342 = vshrl.u32 %v341, 7
      %v343 = vstv %s340
      %v344 = vadd.s32 %v342, %v343
      %vm345 = vcmp.lt.s32.totalorder %v344, 50
      %v346 = vsel %vm345, %v338, %v9
      %s347 = scalar_lea.vmem [#allocation7], 88
      %349 = vst [vmem:[%s347] sm:$0xff] %v346
      %s350 = scalar_lea.vmem %s191, 96
      %v351 = vld [vmem:[%s350] sm:$0xff]
      %s352 = sadd.s32 %s192, 1
      %s353 = smul.addr %s352, 8
      %v354 = vlaneseq
      %v355 = vshrl.u32 %v354, 7
      %v356 = vstv %s353
      %v357 = vadd.s32 %v355, %v356
      %vm358 = vcmp.lt.s32.totalorder %v357, 50
      %v359 = vsel %vm358, %v351, %v9
      %s360 = scalar_lea.vmem [#allocation7], 96
      %362 = vst [vmem:[%s360] sm:$0xff] %v359
      %s363 = scalar_lea.vmem %s191, 104
      %v364 = vld [vmem:[%s363] sm:$0xff]
      %s365 = sadd.s32 %s192, 1
      %s366 = smul.addr %s365, 8
      %v367 = vlaneseq
      %v368 = vshrl.u32 %v367, 7
      %v369 = vstv %s366
      %v370 = vadd.s32 %v368, %v369
      %vm371 = vcmp.lt.s32.totalorder %v370, 50
      %v372 = vsel %vm371, %v364, %v9
      %s373 = scalar_lea.vmem [#allocation7], 104
      %375 = vst [vmem:[%s373] sm:$0xff] %v372
      %s376 = scalar_lea.vmem %s191, 112
      %v377 = vld [vmem:[%s376] sm:$0xff]
      %s378 = sadd.s32 %s192, 1
      %s379 = smul.addr %s378, 8
      %v380 = vlaneseq
      %v381 = vshrl.u32 %v380, 7
      %v382 = vstv %s379
      %v383 = vadd.s32 %v381, %v382
      %vm384 = vcmp.lt.s32.totalorder %v383, 50
      %v385 = vsel %vm384, %v377, %v9
      %s386 = scalar_lea.vmem [#allocation7], 112
      %388 = vst [vmem:[%s386] sm:$0xff] %v385
      %s389 = scalar_lea.vmem %s191, 120
      %v390 = vld [vmem:[%s389] sm:$0xff]
      %s391 = sadd.s32 %s192, 1
      %s392 = smul.addr %s391, 8
      %v393 = vlaneseq
      %v394 = vshrl.u32 %v393, 7
      %v395 = vstv %s392
      %v396 = vadd.s32 %v394, %v395
      %vm397 = vcmp.lt.s32.totalorder %v396, 50
      %v398 = vsel %vm397, %v390, %v9
      %s399 = scalar_lea.vmem [#allocation7], 120
      %401 = vst [vmem:[%s399] sm:$0xff] %v398
      %s402 = scalar_lea.vmem %s191, 128
      %s403 = sadd.s32 %s192, 2
      %s404 = ssub.s32 6, %s403
      %p405 = scmp.lt.s32.totalorder %s404, 0
      %s406 = scalar_select %p405, 0, 255
      %v407 = vld [vmem:[%s402] sm:%s406]
      %s408 = sadd.s32 %s192, 2
      %s409 = ssub.s32 6, %s408
      %v410 = vstv %s409
      %vm411 = vcmp.lt.s32.totalorder %v410, 0
      %v412 = vsel %vm411, %v9, %v407
      %s413 = sadd.s32 %s192, 2
      %s414 = smul.addr %s413, 8
      %v415 = vlaneseq
      %v416 = vshrl.u32 %v415, 7
      %v417 = vstv %s414
      %v418 = vadd.s32 %v416, %v417
      %vm419 = vcmp.lt.s32.totalorder %v418, 50
      %v420 = vsel %vm419, %v412, %v9
      %s421 = scalar_lea.vmem [#allocation7], 128
      %423 = vst [vmem:[%s421] sm:$0xff] %v420
      %s424 = scalar_lea.vmem %s191, 136
      %s425 = sadd.s32 %s192, 2
      %s426 = ssub.s32 6, %s425
      %p427 = scmp.lt.s32.totalorder %s426, 0
      %s428 = scalar_select %p427, 0, 255
      %v429 = vld [vmem:[%s424] sm:%s428]
      %s430 = sadd.s32 %s192, 2
      %s431 = ssub.s32 6, %s430
      %v432 = vstv %s431
      %vm433 = vcmp.lt.s32.totalorder %v432, 0
      %v434 = vsel %vm433, %v9, %v429
      %s435 = sadd.s32 %s192, 2
      %s436 = smul.addr %s435, 8
      %v437 = vlaneseq
      %v438 = vshrl.u32 %v437, 7
      %v439 = vstv %s436
      %v440 = vadd.s32 %v438, %v439
      %vm441 = vcmp.lt.s32.totalorder %v440, 50
      %v442 = vsel %vm441, %v434, %v9
      %s443 = scalar_lea.vmem [#allocation7], 136
      %445 = vst [vmem:[%s443] sm:$0xff] %v442
      %s446 = scalar_lea.vmem %s191, 144
      %s447 = sadd.s32 %s192, 2
      %s448 = ssub.s32 6, %s447
      %p449 = scmp.lt.s32.totalorder %s448, 0
      %s450 = scalar_select %p449, 0, 255
      %v451 = vld [vmem:[%s446] sm:%s450]
      %s452 = sadd.s32 %s192, 2
      %s453 = ssub.s32 6, %s452
      %v454 = vstv %s453
      %vm455 = vcmp.lt.s32.totalorder %v454, 0
      %v456 = vsel %vm455, %v9, %v451
      %s457 = sadd.s32 %s192, 2
      %s458 = smul.addr %s457, 8
      %v459 = vlaneseq
      %v460 = vshrl.u32 %v459, 7
      %v461 = vstv %s458
      %v462 = vadd.s32 %v460, %v461
      %vm463 = vcmp.lt.s32.totalorder %v462, 50
      %v464 = vsel %vm463, %v456, %v9
      %s465 = scalar_lea.vmem [#allocation7], 144
      %467 = vst [vmem:[%s465] sm:$0xff] %v464
      %s468 = scalar_lea.vmem %s191, 152
      %s469 = sadd.s32 %s192, 2
      %s470 = ssub.s32 6, %s469
      %p471 = scmp.lt.s32.totalorder %s470, 0
      %s472 = scalar_select %p471, 0, 255
      %v473 = vld [vmem:[%s468] sm:%s472]
      %s474 = sadd.s32 %s192, 2
      %s475 = ssub.s32 6, %s474
      %v476 = vstv %s475
      %vm477 = vcmp.lt.s32.totalorder %v476, 0
      %v478 = vsel %vm477, %v9, %v473
      %s479 = sadd.s32 %s192, 2
      %s480 = smul.addr %s479, 8
      %v481 = vlaneseq
      %v482 = vshrl.u32 %v481, 7
      %v483 = vstv %s480
      %v484 = vadd.s32 %v482, %v483
      %vm485 = vcmp.lt.s32.totalorder %v484, 50
      %v486 = vsel %vm485, %v478, %v9
      %s487 = scalar_lea.vmem [#allocation7], 152
      %489 = vst [vmem:[%s487] sm:$0xff] %v486
      %s490 = scalar_lea.vmem %s191, 160
      %s491 = sadd.s32 %s192, 2
      %s492 = ssub.s32 6, %s491
      %p493 = scmp.lt.s32.totalorder %s492, 0
      %s494 = scalar_select %p493, 0, 255
      %v495 = vld [vmem:[%s490] sm:%s494]
      %s496 = sadd.s32 %s192, 2
      %s497 = ssub.s32 6, %s496
      %v498 = vstv %s497
      %vm499 = vcmp.lt.s32.totalorder %v498, 0
      %v500 = vsel %vm499, %v9, %v495
      %s501 = sadd.s32 %s192, 2
      %s502 = smul.addr %s501, 8
      %v503 = vlaneseq
      %v504 = vshrl.u32 %v503, 7
      %v505 = vstv %s502
      %v506 = vadd.s32 %v504, %v505
      %vm507 = vcmp.lt.s32.totalorder %v506, 50
      %v508 = vsel %vm507, %v500, %v9
      %s509 = scalar_lea.vmem [#allocation7], 160
      %511 = vst [vmem:[%s509] sm:$0xff] %v508
      %s512 = scalar_lea.vmem %s191, 168
      %s513 = sadd.s32 %s192, 2
      %s514 = ssub.s32 6, %s513
      %p515 = scmp.lt.s32.totalorder %s514, 0
      %s516 = scalar_select %p515, 0, 255
      %v517 = vld [vmem:[%s512] sm:%s516]
      %s518 = sadd.s32 %s192, 2
      %s519 = ssub.s32 6, %s518
      %v520 = vstv %s519
      %vm521 = vcmp.lt.s32.totalorder %v520, 0
      %v522 = vsel %vm521, %v9, %v517
      %s523 = sadd.s32 %s192, 2
      %s524 = smul.addr %s523, 8
      %v525 = vlaneseq
      %v526 = vshrl.u32 %v525, 7
      %v527 = vstv %s524
      %v528 = vadd.s32 %v526, %v527
      %vm529 = vcmp.lt.s32.totalorder %v528, 50
      %v530 = vsel %vm529, %v522, %v9
      %s531 = scalar_lea.vmem [#allocation7], 168
      %533 = vst [vmem:[%s531] sm:$0xff] %v530
      %s534 = scalar_lea.vmem %s191, 176
      %s535 = sadd.s32 %s192, 2
      %s536 = ssub.s32 6, %s535
      %p537 = scmp.lt.s32.totalorder %s536, 0
      %s538 = scalar_select %p537, 0, 255
      %v539 = vld [vmem:[%s534] sm:%s538]
      %s540 = sadd.s32 %s192, 2
      %s541 = ssub.s32 6, %s540
      %v542 = vstv %s541
      %vm543 = vcmp.lt.s32.totalorder %v542, 0
      %v544 = vsel %vm543, %v9, %v539
      %s545 = sadd.s32 %s192, 2
      %s546 = smul.addr %s545, 8
      %v547 = vlaneseq
      %v548 = vshrl.u32 %v547, 7
      %v549 = vstv %s546
      %v550 = vadd.s32 %v548, %v549
      %vm551 = vcmp.lt.s32.totalorder %v550, 50
      %v552 = vsel %vm551, %v544, %v9
      %s553 = scalar_lea.vmem [#allocation7], 176
      %555 = vst [vmem:[%s553] sm:$0xff] %v552
      %s556 = scalar_lea.vmem %s191, 184
      %s557 = sadd.s32 %s192, 2
      %s558 = ssub.s32 6, %s557
      %p559 = scmp.lt.s32.totalorder %s558, 0
      %s560 = scalar_select %p559, 0, 255
      %v561 = vld [vmem:[%s556] sm:%s560]
      %s562 = sadd.s32 %s192, 2
      %s563 = ssub.s32 6, %s562
      %v564 = vstv %s563
      %vm565 = vcmp.lt.s32.totalorder %v564, 0
      %v566 = vsel %vm565, %v9, %v561
      %s567 = sadd.s32 %s192, 2
      %s568 = smul.addr %s567, 8
      %v569 = vlaneseq
      %v570 = vshrl.u32 %v569, 7
      %v571 = vstv %s568
      %v572 = vadd.s32 %v570, %v571
      %vm573 = vcmp.lt.s32.totalorder %v572, 50
      %v574 = vsel %vm573, %v566, %v9
      %s575 = scalar_lea.vmem [#allocation7], 184
      %577 = vst [vmem:[%s575] sm:$0xff] %v574
      %s578 = scalar_lea.vmem %s191, 192
      %s579 = sadd.s32 %s192, 3
      %s580 = ssub.s32 6, %s579
      %p581 = scmp.lt.s32.totalorder %s580, 0
      %s582 = scalar_select %p581, 0, 255
      %v583 = vld [vmem:[%s578] sm:%s582]
      %s584 = sadd.s32 %s192, 3
      %s585 = ssub.s32 6, %s584
      %v586 = vstv %s585
      %vm587 = vcmp.lt.s32.totalorder %v586, 0
      %v588 = vsel %vm587, %v9, %v583
      %s589 = sadd.s32 %s192, 3
      %s590 = smul.addr %s589, 8
      %v591 = vlaneseq
      %v592 = vshrl.u32 %v591, 7
      %v593 = vstv %s590
      %v594 = vadd.s32 %v592, %v593
      %vm595 = vcmp.lt.s32.totalorder %v594, 50
      %v596 = vsel %vm595, %v588, %v9
      %s597 = scalar_lea.vmem [#allocation7], 192
      %599 = vst [vmem:[%s597] sm:$0xff] %v596
      %s600 = scalar_lea.vmem %s191, 200
      %s601 = sadd.s32 %s192, 3
      %s602 = ssub.s32 6, %s601
      %p603 = scmp.lt.s32.totalorder %s602, 0
      %s604 = scalar_select %p603, 0, 255
      %v605 = vld [vmem:[%s600] sm:%s604]
      %s606 = sadd.s32 %s192, 3
      %s607 = ssub.s32 6, %s606
      %v608 = vstv %s607
      %vm609 = vcmp.lt.s32.totalorder %v608, 0
      %v610 = vsel %vm609, %v9, %v605
      %s611 = sadd.s32 %s192, 3
      %s612 = smul.addr %s611, 8
      %v613 = vlaneseq
      %v614 = vshrl.u32 %v613, 7
      %v615 = vstv %s612
      %v616 = vadd.s32 %v614, %v615
      %vm617 = vcmp.lt.s32.totalorder %v616, 50
      %v618 = vsel %vm617, %v610, %v9
      %s619 = scalar_lea.vmem [#allocation7], 200
      %621 = vst [vmem:[%s619] sm:$0xff] %v618
      %s622 = scalar_lea.vmem %s191, 208
      %s623 = sadd.s32 %s192, 3
      %s624 = ssub.s32 6, %s623
      %p625 = scmp.lt.s32.totalorder %s624, 0
      %s626 = scalar_select %p625, 0, 255
      %v627 = vld [vmem:[%s622] sm:%s626]
      %s628 = sadd.s32 %s192, 3
      %s629 = ssub.s32 6, %s628
      %v630 = vstv %s629
      %vm631 = vcmp.lt.s32.totalorder %v630, 0
      %v632 = vsel %vm631, %v9, %v627
      %s633 = sadd.s32 %s192, 3
      %s634 = smul.addr %s633, 8
      %v635 = vlaneseq
      %v636 = vshrl.u32 %v635, 7
      %v637 = vstv %s634
      %v638 = vadd.s32 %v636, %v637
      %vm639 = vcmp.lt.s32.totalorder %v638, 50
      %v640 = vsel %vm639, %v632, %v9
      %s641 = scalar_lea.vmem [#allocation7], 208
      %643 = vst [vmem:[%s641] sm:$0xff] %v640
      %s644 = scalar_lea.vmem %s191, 216
      %s645 = sadd.s32 %s192, 3
      %s646 = ssub.s32 6, %s645
      %p647 = scmp.lt.s32.totalorder %s646, 0
      %s648 = scalar_select %p647, 0, 255
      %v649 = vld [vmem:[%s644] sm:%s648]
      %s650 = sadd.s32 %s192, 3
      %s651 = ssub.s32 6, %s650
      %v652 = vstv %s651
      %vm653 = vcmp.lt.s32.totalorder %v652, 0
      %v654 = vsel %vm653, %v9, %v649
      %s655 = sadd.s32 %s192, 3
      %s656 = smul.addr %s655, 8
      %v657 = vlaneseq
      %v658 = vshrl.u32 %v657, 7
      %v659 = vstv %s656
      %v660 = vadd.s32 %v658, %v659
      %vm661 = vcmp.lt.s32.totalorder %v660, 50
      %v662 = vsel %vm661, %v654, %v9
      %s663 = scalar_lea.vmem [#allocation7], 216
      %665 = vst [vmem:[%s663] sm:$0xff] %v662
      %s666 = scalar_lea.vmem %s191, 224
      %s667 = sadd.s32 %s192, 3
      %s668 = ssub.s32 6, %s667
      %p669 = scmp.lt.s32.totalorder %s668, 0
      %s670 = scalar_select %p669, 0, 255
      %v671 = vld [vmem:[%s666] sm:%s670]
      %s672 = sadd.s32 %s192, 3
      %s673 = ssub.s32 6, %s672
      %v674 = vstv %s673
      %vm675 = vcmp.lt.s32.totalorder %v674, 0
      %v676 = vsel %vm675, %v9, %v671
      %s677 = sadd.s32 %s192, 3
      %s678 = smul.addr %s677, 8
      %v679 = vlaneseq
      %v680 = vshrl.u32 %v679, 7
      %v681 = vstv %s678
      %v682 = vadd.s32 %v680, %v681
      %vm683 = vcmp.lt.s32.totalorder %v682, 50
      %v684 = vsel %vm683, %v676, %v9
      %s685 = scalar_lea.vmem [#allocation7], 224
      %687 = vst [vmem:[%s685] sm:$0xff] %v684
      %s688 = scalar_lea.vmem %s191, 232
      %s689 = sadd.s32 %s192, 3
      %s690 = ssub.s32 6, %s689
      %p691 = scmp.lt.s32.totalorder %s690, 0
      %s692 = scalar_select %p691, 0, 255
      %v693 = vld [vmem:[%s688] sm:%s692]
      %s694 = sadd.s32 %s192, 3
      %s695 = ssub.s32 6, %s694
      %v696 = vstv %s695
      %vm697 = vcmp.lt.s32.totalorder %v696, 0
      %v698 = vsel %vm697, %v9, %v693
      %s699 = sadd.s32 %s192, 3
      %s700 = smul.addr %s699, 8
      %v701 = vlaneseq
      %v702 = vshrl.u32 %v701, 7
      %v703 = vstv %s700
      %v704 = vadd.s32 %v702, %v703
      %vm705 = vcmp.lt.s32.totalorder %v704, 50
      %v706 = vsel %vm705, %v698, %v9
      %s707 = scalar_lea.vmem [#allocation7], 232
      %709 = vst [vmem:[%s707] sm:$0xff] %v706
      %s710 = scalar_lea.vmem %s191, 240
      %s711 = sadd.s32 %s192, 3
      %s712 = ssub.s32 6, %s711
      %p713 = scmp.lt.s32.totalorder %s712, 0
      %s714 = scalar_select %p713, 0, 255
      %v715 = vld [vmem:[%s710] sm:%s714]
      %s716 = sadd.s32 %s192, 3
      %s717 = ssub.s32 6, %s716
      %v718 = vstv %s717
      %vm719 = vcmp.lt.s32.totalorder %v718, 0
      %v720 = vsel %vm719, %v9, %v715
      %s721 = sadd.s32 %s192, 3
      %s722 = smul.addr %s721, 8
      %v723 = vlaneseq
      %v724 = vshrl.u32 %v723, 7
      %v725 = vstv %s722
      %v726 = vadd.s32 %v724, %v725
      %vm727 = vcmp.lt.s32.totalorder %v726, 50
      %v728 = vsel %vm727, %v720, %v9
      %s729 = scalar_lea.vmem [#allocation7], 240
      %731 = vst [vmem:[%s729] sm:$0xff] %v728
      %s732 = scalar_lea.vmem %s191, 248
      %s733 = sadd.s32 %s192, 3
      %s734 = ssub.s32 6, %s733
      %p735 = scmp.lt.s32.totalorder %s734, 0
      %s736 = scalar_select %p735, 0, 255
      %v737 = vld [vmem:[%s732] sm:%s736]
      %s738 = sadd.s32 %s192, 3
      %s739 = ssub.s32 6, %s738
      %v740 = vstv %s739
      %vm741 = vcmp.lt.s32.totalorder %v740, 0
      %v742 = vsel %vm741, %v9, %v737
      %s743 = sadd.s32 %s192, 3
      %s744 = smul.addr %s743, 8
      %v745 = vlaneseq
      %v746 = vshrl.u32 %v745, 7
      %v747 = vstv %s744
      %v748 = vadd.s32 %v746, %v747
      %vm749 = vcmp.lt.s32.totalorder %v748, 50
      %v750 = vsel %vm749, %v742, %v9
      %s751 = scalar_lea.vmem [#allocation7], 248
      %753 = vst [vmem:[%s751] sm:$0xff] %v750
      %v754 = vld [vmem:[#allocation7] sm:$0xff]
      %v755 = vld [vmem:[#allocation7 + $0x8] sm:$0xff]
      %v756 = vld [vmem:[#allocation7 + $0x10] sm:$0xff]
      %v757 = vld [vmem:[#allocation7 + $0x18] sm:$0xff]
      %v758 = vld [vmem:[#allocation7 + $0x20] sm:$0xff]
      %v759 = vld [vmem:[#allocation7 + $0x28] sm:$0xff]
      %v760 = vld [vmem:[#allocation7 + $0x30] sm:$0xff]
      %v761 = vld [vmem:[#allocation7 + $0x38] sm:$0xff]
      %v762 = vld [vmem:[#allocation7 + $0x40] sm:$0xff]
      %v763 = vld [vmem:[#allocation7 + $0x48] sm:$0xff]
      %v764 = vld [vmem:[#allocation7 + $0x50] sm:$0xff]
      %v765 = vld [vmem:[#allocation7 + $0x58] sm:$0xff]
      %v766 = vld [vmem:[#allocation7 + $0x60] sm:$0xff]
      %v767 = vld [vmem:[#allocation7 + $0x68] sm:$0xff]
      %v768 = vld [vmem:[#allocation7 + $0x70] sm:$0xff]
      %v769 = vld [vmem:[#allocation7 + $0x78] sm:$0xff]
      %v770 = vld [vmem:[#allocation7 + $0x80] sm:$0xff]
      %v771 = vld [vmem:[#allocation7 + $0x88] sm:$0xff]
      %v772 = vld [vmem:[#allocation7 + $0x90] sm:$0xff]
      %v773 = vld [vmem:[#allocation7 + $0x98] sm:$0xff]
      %v774 = vld [vmem:[#allocation7 + $0xa0] sm:$0xff]
      %v775 = vld [vmem:[#allocation7 + $0xa8] sm:$0xff]
      %v776 = vld [vmem:[#allocation7 + $0xb0] sm:$0xff]
      %v777 = vld [vmem:[#allocation7 + $0xb8] sm:$0xff]
      %v778 = vld [vmem:[#allocation7 + $0xc0] sm:$0xff]
      %v779 = vld [vmem:[#allocation7 + $0xc8] sm:$0xff]
      %v780 = vld [vmem:[#allocation7 + $0xd0] sm:$0xff]
      %v781 = vld [vmem:[#allocation7 + $0xd8] sm:$0xff]
      %v782 = vld [vmem:[#allocation7 + $0xe0] sm:$0xff]
      %v783 = vld [vmem:[#allocation7 + $0xe8] sm:$0xff]
      %v784 = vld [vmem:[#allocation7 + $0xf0] sm:$0xff]
      %v785 = vld [vmem:[#allocation7 + $0xf8] sm:$0xff]
      %v786 = vld [vmem:[%s0] sm:$0xff]
      %v787 = vld [vmem:[%s0 + $0x8] sm:$0xff]
      %v788 = vld [vmem:[%s0 + $0x10] sm:$0xff]
      %v789 = vld [vmem:[%s0 + $0x18] sm:$0xff]
      %v790 = vld [vmem:[%s0 + $0x20] sm:$0xff]
      %v791 = vld [vmem:[%s0 + $0x28] sm:$0xff]
      %v792 = vld [vmem:[%s0 + $0x30] sm:$0xff]
      %v793 = vld [vmem:[%s0 + $0x38] sm:$0xff]
      %v794 = vld [vmem:[%s0 + $0x40] sm:$0xff]
      %v795 = vld [vmem:[%s0 + $0x48] sm:$0xff]
      %v796 = vld [vmem:[%s0 + $0x50] sm:$0xff]
      %v797 = vld [vmem:[%s0 + $0x58] sm:$0xff]
      %v798 = vld [vmem:[%s0 + $0x60] sm:$0xff]
      %v799 = vld [vmem:[%s0 + $0x68] sm:$0xff]
      %v800 = vld [vmem:[%s0 + $0x70] sm:$0xff]
      %v801 = vld [vmem:[%s0 + $0x78] sm:$0xff]
      %v802 = vld [vmem:[%s0 + $0x80] sm:$0xff]
      %v803 = vld [vmem:[%s0 + $0x88] sm:$0xff]
      %v804 = vld [vmem:[%s0 + $0x90] sm:$0xff]
      %v805 = vld [vmem:[%s0 + $0x98] sm:$0xff]
      %v806 = vld [vmem:[%s0 + $0xa0] sm:$0xff]
      %v807 = vld [vmem:[%s0 + $0xa8] sm:$0xff]
      %v808 = vld [vmem:[%s0 + $0xb0] sm:$0xff]
      %v809 = vld [vmem:[%s0 + $0xb8] sm:$0xff]
      %v810 = vld [vmem:[%s0 + $0xc0] sm:$0xff]
      %v811 = vld [vmem:[%s0 + $0xc8] sm:$0xff]
      %v812 = vld [vmem:[%s0 + $0xd0] sm:$0xff]
      %v813 = vld [vmem:[%s0 + $0xd8] sm:$0xff]
      %v814 = vld [vmem:[%s0 + $0xe0] sm:$0xff]
      %v815 = vld [vmem:[%s0 + $0xe8] sm:$0xff]
      %v816 = vld [vmem:[%s0 + $0xf0] sm:$0xff]
      %v817 = vld [vmem:[%s0 + $0xf8] sm:$0xff]
      %v818 = vld [vmem:[%s0 + $0x100] sm:$0xff]
      %v819 = vld [vmem:[%s0 + $0x108] sm:$0xff]
      %v820 = vld [vmem:[%s0 + $0x110] sm:$0xff]
      %v821 = vld [vmem:[%s0 + $0x118] sm:$0xff]
      %v822 = vld [vmem:[%s0 + $0x120] sm:$0xff]
      %v823 = vld [vmem:[%s0 + $0x128] sm:$0xff]
      %v824 = vld [vmem:[%s0 + $0x130] sm:$0xff]
      %v825 = vld [vmem:[%s0 + $0x138] sm:$0xff]
      %v826 = vld [vmem:[%s0 + $0x140] sm:$0xff]
      %v827 = vld [vmem:[%s0 + $0x148] sm:$0xff]
      %v828 = vld [vmem:[%s0 + $0x150] sm:$0xff]
      %v829 = vld [vmem:[%s0 + $0x158] sm:$0xff]
      %v830 = vld [vmem:[%s0 + $0x160] sm:$0xff]
      %v831 = vld [vmem:[%s0 + $0x168] sm:$0xff]
      %v832 = vld [vmem:[%s0 + $0x170] sm:$0xff]
      %v833 = vld [vmem:[%s0 + $0x178] sm:$0xff]
      %v834 = vld [vmem:[%s0 + $0x180] sm:$0xff]
      %v835 = vld [vmem:[%s0 + $0x188] sm:$0xff]
      %v836 = vld [vmem:[%s0 + $0x190] sm:$0xff]
      %v837 = vld [vmem:[%s0 + $0x198] sm:$0xff]
      %v838 = vld [vmem:[%s0 + $0x1a0] sm:$0xff]
      %v839 = vld [vmem:[%s0 + $0x1a8] sm:$0xff]
      %v840 = vld [vmem:[%s0 + $0x1b0] sm:$0xff]
      %v841 = vld [vmem:[%s0 + $0x1b8] sm:$0xff]
      %v842 = vld [vmem:[%s0 + $0x1c0] sm:$0xff]
      %v843 = vld [vmem:[%s0 + $0x1c8] sm:$0xff]
      %v844 = vld [vmem:[%s0 + $0x1d0] sm:$0xff]
      %v845 = vld [vmem:[%s0 + $0x1d8] sm:$0xff]
      %v846 = vld [vmem:[%s0 + $0x1e0] sm:$0xff]
      %v847 = vld [vmem:[%s0 + $0x1e8] sm:$0xff]
      %v848 = vld [vmem:[%s0 + $0x1f0] sm:$0xff]
      %v849 = vld [vmem:[%s0 + $0x1f8] sm:$0xff]
      %v850 = vld [vmem:[%s0 + $0x200] sm:$0xff]
      %v851 = vld [vmem:[%s0 + $0x208] sm:$0xff]
      %v852 = vld [vmem:[%s0 + $0x210] sm:$0xff]
      %v853 = vld [vmem:[%s0 + $0x218] sm:$0xff]
      %v854 = vld [vmem:[%s0 + $0x220] sm:$0xff]
      %v855 = vld [vmem:[%s0 + $0x228] sm:$0xff]
      %v856 = vld [vmem:[%s0 + $0x230] sm:$0xff]
      %v857 = vld [vmem:[%s0 + $0x238] sm:$0xff]
      %v858 = vld [vmem:[%s0 + $0x240] sm:$0xff]
      %v859 = vld [vmem:[%s0 + $0x248] sm:$0xff]
      %v860 = vld [vmem:[%s0 + $0x250] sm:$0xff]
      %v861 = vld [vmem:[%s0 + $0x258] sm:$0xff]
      %v862 = vld [vmem:[%s0 + $0x260] sm:$0xff]
      %v863 = vld [vmem:[%s0 + $0x268] sm:$0xff]
      %v864 = vld [vmem:[%s0 + $0x270] sm:$0xff]
      %v865 = vld [vmem:[%s0 + $0x278] sm:$0xff]
      %v866 = vld [vmem:[%s0 + $0x280] sm:$0xff]
      %v867 = vld [vmem:[%s0 + $0x288] sm:$0xff]
      %v868 = vld [vmem:[%s0 + $0x290] sm:$0xff]
      %v869 = vld [vmem:[%s0 + $0x298] sm:$0xff]
      %v870 = vld [vmem:[%s0 + $0x2a0] sm:$0xff]
      %v871 = vld [vmem:[%s0 + $0x2a8] sm:$0xff]
      %v872 = vld [vmem:[%s0 + $0x2b0] sm:$0xff]
      %v873 = vld [vmem:[%s0 + $0x2b8] sm:$0xff]
      %v874 = vld [vmem:[%s0 + $0x2c0] sm:$0xff]
      %v875 = vld [vmem:[%s0 + $0x2c8] sm:$0xff]
      %v876 = vld [vmem:[%s0 + $0x2d0] sm:$0xff]
      %v877 = vld [vmem:[%s0 + $0x2d8] sm:$0xff]
      %v878 = vld [vmem:[%s0 + $0x2e0] sm:$0xff]
      %v879 = vld [vmem:[%s0 + $0x2e8] sm:$0xff]
      %v880 = vld [vmem:[%s0 + $0x2f0] sm:$0xff]
      %v881 = vld [vmem:[%s0 + $0x2f8] sm:$0xff]
      %v882 = vld [vmem:[%s0 + $0x300] sm:$0xff]
      %v883 = vld [vmem:[%s0 + $0x308] sm:$0xff]
      %v884 = vld [vmem:[%s0 + $0x310] sm:$0xff]
      %v885 = vld [vmem:[%s0 + $0x318] sm:$0xff]
      %v886 = vld [vmem:[%s0 + $0x320] sm:$0xff]
      %v887 = vld [vmem:[%s0 + $0x328] sm:$0xff]
      %v888 = vld [vmem:[%s0 + $0x330] sm:$0xff]
      %v889 = vld [vmem:[%s0 + $0x338] sm:$0xff]
      %v890 = vld [vmem:[%s0 + $0x340] sm:$0xff]
      %v891 = vld [vmem:[%s0 + $0x348] sm:$0xff]
      %v892 = vld [vmem:[%s0 + $0x350] sm:$0xff]
      %v893 = vld [vmem:[%s0 + $0x358] sm:$0xff]
      %v894 = vld [vmem:[%s0 + $0x360] sm:$0xff]
      %v895 = vld [vmem:[%s0 + $0x368] sm:$0xff]
      %v896 = vld [vmem:[%s0 + $0x370] sm:$0xff]
      %v897 = vld [vmem:[%s0 + $0x378] sm:$0xff]
      %v898 = vld [vmem:[%s0 + $0x380] sm:$0xff]
      %v899 = vld [vmem:[%s0 + $0x388] sm:$0xff]
      %v900 = vld [vmem:[%s0 + $0x390] sm:$0xff]
      %v901 = vld [vmem:[%s0 + $0x398] sm:$0xff]
      %v902 = vld [vmem:[%s0 + $0x3a0] sm:$0xff]
      %v903 = vld [vmem:[%s0 + $0x3a8] sm:$0xff]
      %v904 = vld [vmem:[%s0 + $0x3b0] sm:$0xff]
      %v905 = vld [vmem:[%s0 + $0x3b8] sm:$0xff]
      %v906 = vld [vmem:[%s0 + $0x3c0] sm:$0xff]
      %v907 = vld [vmem:[%s0 + $0x3c8] sm:$0xff]
      %v908 = vld [vmem:[%s0 + $0x3d0] sm:$0xff]
      %v909 = vld [vmem:[%s0 + $0x3d8] sm:$0xff]
      %v910 = vld [vmem:[%s0 + $0x3e0] sm:$0xff]
      %v911 = vld [vmem:[%s0 + $0x3e8] sm:$0xff]
      %v912 = vld [vmem:[%s0 + $0x3f0] sm:$0xff]
      %v913 = vld [vmem:[%s0 + $0x3f8] sm:$0xff]
      %v914 = vld [vmem:[%s1] sm:$0x1]
      %v916 = vlaneseq
      %v917 = vshrl.u32 %v916, 7
      %v918 = vsub.s32 0, %v917
      %v919 = vrot.slane %v914, %v918
      %921 = vmatprep.subr.mxu0 0.0
      %922 = vmatpush1.msra.mxu0 %v786
      %923 = vmatprep.subr.mxu0 0.0
      %924 = vmatpush1.msra.mxu0 %v787
      %925 = vmatprep.subr.mxu0 0.0
      %926 = vmatpush1.msra.mxu0 %v788
      %927 = vmatprep.subr.mxu0 0.0
      %928 = vmatpush1.msra.mxu0 %v789
      %929 = vmatprep.subr.mxu0 0.0
      %930 = vmatpush1.msra.mxu0 %v790
      %931 = vmatprep.subr.mxu0 0.0
      %932 = vmatpush1.msra.mxu0 %v791
      %933 = vmatprep.subr.mxu0 0.0
      %934 = vmatpush1.msra.mxu0 %v792
      %935 = vmatprep.subr.mxu0 0.0
      %936 = vmatpush1.msra.mxu0 %v793
      %937 = vmatprep.subr.mxu0 0.0
      %938 = vmatpush1.msra.mxu0 %v794
      %939 = vmatprep.subr.mxu0 0.0
      %940 = vmatpush1.msra.mxu0 %v795
      %941 = vmatprep.subr.mxu0 0.0
      %942 = vmatpush1.msra.mxu0 %v796
      %943 = vmatprep.subr.mxu0 0.0
      %944 = vmatpush1.msra.mxu0 %v797
      %945 = vmatprep.subr.mxu0 0.0
      %946 = vmatpush1.msra.mxu0 %v798
      %947 = vmatprep.subr.mxu0 0.0
      %948 = vmatpush1.msra.mxu0 %v799
      %949 = vmatprep.subr.mxu0 0.0
      %950 = vmatpush1.msra.mxu0 %v800
      %951 = vmatprep.subr.mxu0 0.0
      %952 = vmatpush1.msra.mxu0 %v801
      %953 = vmatprep.subr.mxu0 0.0
      %954 = vmatpush1.msra.mxu0 %v802
      %955 = vmatprep.subr.mxu0 0.0
      %956 = vmatpush1.msra.mxu0 %v803
      %957 = vmatprep.subr.mxu0 0.0
      %958 = vmatpush1.msra.mxu0 %v804
      %959 = vmatprep.subr.mxu0 0.0
      %960 = vmatpush1.msra.mxu0 %v805
      %961 = vmatprep.subr.mxu0 0.0
      %962 = vmatpush1.msra.mxu0 %v806
      %963 = vmatprep.subr.mxu0 0.0
      %964 = vmatpush1.msra.mxu0 %v807
      %965 = vmatprep.subr.mxu0 0.0
      %966 = vmatpush1.msra.mxu0 %v808
      %967 = vmatprep.subr.mxu0 0.0
      %968 = vmatpush1.msra.mxu0 %v809
      %969 = vmatprep.subr.mxu0 0.0
      %970 = vmatpush1.msra.mxu0 %v810
      %971 = vmatprep.subr.mxu0 0.0
      %972 = vmatpush1.msra.mxu0 %v811
      %973 = vmatprep.subr.mxu0 0.0
      %974 = vmatpush1.msra.mxu0 %v812
      %975 = vmatprep.subr.mxu0 0.0
      %976 = vmatpush1.msra.mxu0 %v813
      %977 = vmatprep.subr.mxu0 0.0
      %978 = vmatpush1.msra.mxu0 %v814
      %979 = vmatprep.subr.mxu0 0.0
      %980 = vmatpush1.msra.mxu0 %v815
      %981 = vmatprep.subr.mxu0 0.0
      %982 = vmatpush1.msra.mxu0 %v816
      %983 = vmatprep.subr.mxu0 0.0
      %984 = vmatpush1.msra.mxu0 %v817
      %985 = vmatprep.mubr.f32.mxu0 %v755
      %986 = vmatmul.mubr.f32.gmra.mrb[0].mxu0 %v754
      %v987 = vpop.f32.mrb[0].mxu0
      %v988 = vadd.f32 %v919, %v987
      %v989 = vpop.f32.mrb[0].mxu0
      %990 = vmatprep.mubr.f32.mxu0 %v763
      %991 = vmatmul.mubr.f32.gmra.mrb[0].mxu0 %v762
      %v992 = vpop.f32.mrb[0].mxu0
      %v993 = vadd.f32 %v919, %v992
      %v994 = vpop.f32.mrb[0].mxu0
      %995 = vmatprep.mubr.f32.mxu0 %v771
      %996 = vmatmul.mubr.f32.gmra.mrb[0].mxu0 %v770
      %v997 = vpop.f32.mrb[0].mxu0
      %v998 = vadd.f32 %v919, %v997
      %v999 = vpop.f32.mrb[0].mxu0
      %1000 = vmatprep.mubr.f32.mxu0 %v779
      %1001 = vmatmul.mubr.f32.gmra.mrb[0].mxu0 %v778
      %v1002 = vpop.f32.mrb[0].mxu0
      %v1003 = vadd.f32 %v919, %v1002
      %v1004 = vpop.f32.mrb[0].mxu0
      %1005 = vdwg.mxu0
      %1006 = vmatprep.subr.mxu0 0.0
      %1007 = vmatpush1.msra.mxu0 %v818
      %1008 = vmatprep.subr.mxu0 0.0
      %1009 = vmatpush1.msra.mxu0 %v819
      %1010 = vmatprep.subr.mxu0 0.0
      %1011 = vmatpush1.msra.mxu0 %v820
      %1012 = vmatprep.subr.mxu0 0.0
      %1013 = vmatpush1.msra.mxu0 %v821
      %1014 = vmatprep.subr.mxu0 0.0
      %1015 = vmatpush1.msra.mxu0 %v822
      %1016 = vmatprep.subr.mxu0 0.0
      %1017 = vmatpush1.msra.mxu0 %v823
      %1018 = vmatprep.subr.mxu0 0.0
      %1019 = vmatpush1.msra.mxu0 %v824
      %1020 = vmatprep.subr.mxu0 0.0
      %1021 = vmatpush1.msra.mxu0 %v825
      %1022 = vmatprep.subr.mxu0 0.0
      %1023 = vmatpush1.msra.mxu0 %v826
      %1024 = vmatprep.subr.mxu0 0.0
      %1025 = vmatpush1.msra.mxu0 %v827
      %1026 = vmatprep.subr.mxu0 0.0
      %1027 = vmatpush1.msra.mxu0 %v828
      %1028 = vmatprep.subr.mxu0 0.0
      %1029 = vmatpush1.msra.mxu0 %v829
      %1030 = vmatprep.subr.mxu0 0.0
      %1031 = vmatpush1.msra.mxu0 %v830
      %1032 = vmatprep.subr.mxu0 0.0
      %1033 = vmatpush1.msra.mxu0 %v831
      %1034 = vmatprep.subr.mxu0 0.0
      %1035 = vmatpush1.msra.mxu0 %v832
      %1036 = vmatprep.subr.mxu0 0.0
      %1037 = vmatpush1.msra.mxu0 %v833
      %1038 = vmatprep.subr.mxu0 0.0
      %1039 = vmatpush1.msra.mxu0 %v834
      %1040 = vmatprep.subr.mxu0 0.0
      %1041 = vmatpush1.msra.mxu0 %v835
      %1042 = vmatprep.subr.mxu0 0.0
      %1043 = vmatpush1.msra.mxu0 %v836
      %1044 = vmatprep.subr.mxu0 0.0
      %1045 = vmatpush1.msra.mxu0 %v837
      %1046 = vmatprep.subr.mxu0 0.0
      %1047 = vmatpush1.msra.mxu0 %v838
      %1048 = vmatprep.subr.mxu0 0.0
      %1049 = vmatpush1.msra.mxu0 %v839
      %1050 = vmatprep.subr.mxu0 0.0
      %1051 = vmatpush1.msra.mxu0 %v840
      %1052 = vmatprep.subr.mxu0 0.0
      %1053 = vmatpush1.msra.mxu0 %v841
      %1054 = vmatprep.subr.mxu0 0.0
      %1055 = vmatpush1.msra.mxu0 %v842
      %1056 = vmatprep.subr.mxu0 0.0
      %1057 = vmatpush1.msra.mxu0 %v843
      %1058 = vmatprep.subr.mxu0 0.0
      %1059 = vmatpush1.msra.mxu0 %v844
      %1060 = vmatprep.subr.mxu0 0.0
      %1061 = vmatpush1.msra.mxu0 %v845
      %1062 = vmatprep.subr.mxu0 0.0
      %1063 = vmatpush1.msra.mxu0 %v846
      %1064 = vmatprep.subr.mxu0 0.0
      %1065 = vmatpush1.msra.mxu0 %v847
      %1066 = vmatprep.subr.mxu0 0.0
      %1067 = vmatpush1.msra.mxu0 %v848
      %1068 = vmatprep.subr.mxu0 0.0
      %1069 = vmatpush1.msra.mxu0 %v849
      %1070 = vmatprep.mubr.f32.mxu0 %v757
      %1071 = vmatmul.mubr.f32.gmra.mrb[0].mxu0 %v756
      %v1072 = vpop.f32.mrb[0].mxu0
      %v1073 = vadd.f32 %v988, %v1072
      %v1074 = vpop.f32.mrb[0].mxu0
      %1075 = vmatprep.mubr.f32.mxu0 %v765
      %1076 = vmatmul.mubr.f32.gmra.mrb[0].mxu0 %v764
      %v1077 = vpop.f32.mrb[0].mxu0
      %v1078 = vadd.f32 %v993, %v1077
      %v1079 = vpop.f32.mrb[0].mxu0
      %1080 = vmatprep.mubr.f32.mxu0 %v773
      %1081 = vmatmul.mubr.f32.gmra.mrb[0].mxu0 %v772
      %v1082 = vpop.f32.mrb[0].mxu0
      %v1083 = vadd.f32 %v998, %v1082
      %v1084 = vpop.f32.mrb[0].mxu0
      %1085 = vmatprep.mubr.f32.mxu0 %v781
      %1086 = vmatmul.mubr.f32.gmra.mrb[0].mxu0 %v780
      %v1087 = vpop.f32.mrb[0].mxu0
      %v1088 = vadd.f32 %v1003, %v1087
      %v1089 = vpop.f32.mrb[0].mxu0
      %1090 = vdwg.mxu0
      %1091 = vmatprep.subr.mxu0 0.0
      %1092 = vmatpush1.msra.mxu0 %v850
      %1093 = vmatprep.subr.mxu0 0.0
      %1094 = vmatpush1.msra.mxu0 %v851
      %1095 = vmatprep.subr.mxu0 0.0
      %1096 = vmatpush1.msra.mxu0 %v852
      %1097 = vmatprep.subr.mxu0 0.0
      %1098 = vmatpush1.msra.mxu0 %v853
      %1099 = vmatprep.subr.mxu0 0.0
      %1100 = vmatpush1.msra.mxu0 %v854
      %1101 = vmatprep.subr.mxu0 0.0
      %1102 = vmatpush1.msra.mxu0 %v855
      %1103 = vmatprep.subr.mxu0 0.0
      %1104 = vmatpush1.msra.mxu0 %v856
      %1105 = vmatprep.subr.mxu0 0.0
      %1106 = vmatpush1.msra.mxu0 %v857
      %1107 = vmatprep.subr.mxu0 0.0
      %1108 = vmatpush1.msra.mxu0 %v858
      %1109 = vmatprep.subr.mxu0 0.0
      %1110 = vmatpush1.msra.mxu0 %v859
      %1111 = vmatprep.subr.mxu0 0.0
      %1112 = vmatpush1.msra.mxu0 %v860
      %1113 = vmatprep.subr.mxu0 0.0
      %1114 = vmatpush1.msra.mxu0 %v861
      %1115 = vmatprep.subr.mxu0 0.0
      %1116 = vmatpush1.msra.mxu0 %v862
      %1117 = vmatprep.subr.mxu0 0.0
      %1118 = vmatpush1.msra.mxu0 %v863
      %1119 = vmatprep.subr.mxu0 0.0
      %1120 = vmatpush1.msra.mxu0 %v864
      %1121 = vmatprep.subr.mxu0 0.0
      %1122 = vmatpush1.msra.mxu0 %v865
      %1123 = vmatprep.subr.mxu0 0.0
      %1124 = vmatpush1.msra.mxu0 %v866
      %1125 = vmatprep.subr.mxu0 0.0
      %1126 = vmatpush1.msra.mxu0 %v867
      %1127 = vmatprep.subr.mxu0 0.0
      %1128 = vmatpush1.msra.mxu0 %v868
      %1129 = vmatprep.subr.mxu0 0.0
      %1130 = vmatpush1.msra.mxu0 %v869
      %1131 = vmatprep.subr.mxu0 0.0
      %1132 = vmatpush1.msra.mxu0 %v870
      %1133 = vmatprep.subr.mxu0 0.0
      %1134 = vmatpush1.msra.mxu0 %v871
      %1135 = vmatprep.subr.mxu0 0.0
      %1136 = vmatpush1.msra.mxu0 %v872
      %1137 = vmatprep.subr.mxu0 0.0
      %1138 = vmatpush1.msra.mxu0 %v873
      %1139 = vmatprep.subr.mxu0 0.0
      %1140 = vmatpush1.msra.mxu0 %v874
      %1141 = vmatprep.subr.mxu0 0.0
      %1142 = vmatpush1.msra.mxu0 %v875
      %1143 = vmatprep.subr.mxu0 0.0
      %1144 = vmatpush1.msra.mxu0 %v876
      %1145 = vmatprep.subr.mxu0 0.0
      %1146 = vmatpush1.msra.mxu0 %v877
      %1147 = vmatprep.subr.mxu0 0.0
      %1148 = vmatpush1.msra.mxu0 %v878
      %1149 = vmatprep.subr.mxu0 0.0
      %1150 = vmatpush1.msra.mxu0 %v879
      %1151 = vmatprep.subr.mxu0 0.0
      %1152 = vmatpush1.msra.mxu0 %v880
      %1153 = vmatprep.subr.mxu0 0.0
      %1154 = vmatpush1.msra.mxu0 %v881
      %1155 = vmatprep.mubr.f32.mxu0 %v759
      %1156 = vmatmul.mubr.f32.gmra.mrb[0].mxu0 %v758
      %v1157 = vpop.f32.mrb[0].mxu0
      %v1158 = vadd.f32 %v1073, %v1157
      %v1159 = vpop.f32.mrb[0].mxu0
      %1160 = vmatprep.mubr.f32.mxu0 %v767
      %1161 = vmatmul.mubr.f32.gmra.mrb[0].mxu0 %v766
      %v1162 = vpop.f32.mrb[0].mxu0
      %v1163 = vadd.f32 %v1078, %v1162
      %v1164 = vpop.f32.mrb[0].mxu0
      %1165 = vmatprep.mubr.f32.mxu0 %v775
      %1166 = vmatmul.mubr.f32.gmra.mrb[0].mxu0 %v774
      %v1167 = vpop.f32.mrb[0].mxu0
      %v1168 = vadd.f32 %v1083, %v1167
      %v1169 = vpop.f32.mrb[0].mxu0
      %1170 = vmatprep.mubr.f32.mxu0 %v783
      %1171 = vmatmul.mubr.f32.gmra.mrb[0].mxu0 %v782
      %v1172 = vpop.f32.mrb[0].mxu0
      %v1173 = vadd.f32 %v1088, %v1172
      %v1174 = vpop.f32.mrb[0].mxu0
      %1175 = vdwg.mxu0
      %1176 = vmatprep.subr.mxu0 0.0
      %1177 = vmatpush1.msra.mxu0 %v882
      %1178 = vmatprep.subr.mxu0 0.0
      %1179 = vmatpush1.msra.mxu0 %v883
      %1180 = vmatprep.subr.mxu0 0.0
      %1181 = vmatpush1.msra.mxu0 %v884
      %1182 = vmatprep.subr.mxu0 0.0
      %1183 = vmatpush1.msra.mxu0 %v885
      %1184 = vmatprep.subr.mxu0 0.0
      %1185 = vmatpush1.msra.mxu0 %v886
      %1186 = vmatprep.subr.mxu0 0.0
      %1187 = vmatpush1.msra.mxu0 %v887
      %1188 = vmatprep.subr.mxu0 0.0
      %1189 = vmatpush1.msra.mxu0 %v888
      %1190 = vmatprep.subr.mxu0 0.0
      %1191 = vmatpush1.msra.mxu0 %v889
      %1192 = vmatprep.subr.mxu0 0.0
      %1193 = vmatpush1.msra.mxu0 %v890
      %1194 = vmatprep.subr.mxu0 0.0
      %1195 = vmatpush1.msra.mxu0 %v891
      %1196 = vmatprep.subr.mxu0 0.0
      %1197 = vmatpush1.msra.mxu0 %v892
      %1198 = vmatprep.subr.mxu0 0.0
      %1199 = vmatpush1.msra.mxu0 %v893
      %1200 = vmatprep.subr.mxu0 0.0
      %1201 = vmatpush1.msra.mxu0 %v894
      %1202 = vmatprep.subr.mxu0 0.0
      %1203 = vmatpush1.msra.mxu0 %v895
      %1204 = vmatprep.subr.mxu0 0.0
      %1205 = vmatpush1.msra.mxu0 %v896
      %1206 = vmatprep.subr.mxu0 0.0
      %1207 = vmatpush1.msra.mxu0 %v897
      %1208 = vmatprep.subr.mxu0 0.0
      %1209 = vmatpush1.msra.mxu0 %v898
      %1210 = vmatprep.subr.mxu0 0.0
      %1211 = vmatpush1.msra.mxu0 %v899
      %1212 = vmatprep.subr.mxu0 0.0
      %1213 = vmatpush1.msra.mxu0 %v900
      %1214 = vmatprep.subr.mxu0 0.0
      %1215 = vmatpush1.msra.mxu0 %v901
      %1216 = vmatprep.subr.mxu0 0.0
      %1217 = vmatpush1.msra.mxu0 %v902
      %1218 = vmatprep.subr.mxu0 0.0
      %1219 = vmatpush1.msra.mxu0 %v903
      %1220 = vmatprep.subr.mxu0 0.0
      %1221 = vmatpush1.msra.mxu0 %v904
      %1222 = vmatprep.subr.mxu0 0.0
      %1223 = vmatpush1.msra.mxu0 %v905
      %1224 = vmatprep.subr.mxu0 0.0
      %1225 = vmatpush1.msra.mxu0 %v906
      %1226 = vmatprep.subr.mxu0 0.0
      %1227 = vmatpush1.msra.mxu0 %v907
      %1228 = vmatprep.subr.mxu0 0.0
      %1229 = vmatpush1.msra.mxu0 %v908
      %1230 = vmatprep.subr.mxu0 0.0
      %1231 = vmatpush1.msra.mxu0 %v909
      %1232 = vmatprep.subr.mxu0 0.0
      %1233 = vmatpush1.msra.mxu0 %v910
      %1234 = vmatprep.subr.mxu0 0.0
      %1235 = vmatpush1.msra.mxu0 %v911
      %1236 = vmatprep.subr.mxu0 0.0
      %1237 = vmatpush1.msra.mxu0 %v912
      %1238 = vmatprep.subr.mxu0 0.0
      %1239 = vmatpush1.msra.mxu0 %v913
      %1240 = vmatprep.mubr.f32.mxu0 %v761
      %1241 = vmatmul.mubr.f32.gmra.mrb[0].mxu0 %v760
      %v1242 = vpop.f32.mrb[0].mxu0
      %v1243 = vadd.f32 %v1158, %v1242
      %v1244 = vpop.f32.mrb[0].mxu0
      %1245 = vmatprep.mubr.f32.mxu0 %v769
      %1246 = vmatmul.mubr.f32.gmra.mrb[0].mxu0 %v768
      %v1247 = vpop.f32.mrb[0].mxu0
      %v1248 = vadd.f32 %v1163, %v1247
      %v1249 = vpop.f32.mrb[0].mxu0
      %1250 = vmatprep.mubr.f32.mxu0 %v777
      %1251 = vmatmul.mubr.f32.gmra.mrb[0].mxu0 %v776
      %v1252 = vpop.f32.mrb[0].mxu0
      %v1253 = vadd.f32 %v1168, %v1252
      %v1254 = vpop.f32.mrb[0].mxu0
      %1255 = vmatprep.mubr.f32.mxu0 %v785
      %1256 = vmatmul.mubr.f32.gmra.mrb[0].mxu0 %v784
      %v1257 = vpop.f32.mrb[0].mxu0
      %v1258 = vadd.f32 %v1173, %v1257
      %v1259 = vpop.f32.mrb[0].mxu0
      %1260 = vdwg.mxu0
      %v1261 = vmax.f32 %v1243, 0.0
      %v1262 = vmax.f32 %v1248, 0.0
      %v1263 = vmax.f32 %v1253, 0.0
      %v1264 = vmax.f32 %v1258, 0.0
      %1265 = vst [vmem:[%s202] sm:$0xff] %v1261
      %1266 = vst [vmem:[%s202 + $0x8] sm:$0xff] %v1262
      %1267 = vst [vmem:[%s202 + $0x10] sm:$0xff] %v1263
      %1268 = vst [vmem:[%s202 + $0x18] sm:$0xff] %v1264
      %s1269 = smul.u32 4, %s16
      %p1270 = scmp.lt.s32.totalorder %s1269, 7
      %s1271 = scalar_select %p1270, %s1269, 7
      %s1272 = smul.addr %s1271, 8
      %s1273 = scalar_lea.vmem %s4, %s1272
      // Predicated region
      $region33: #{autoencoder_forward.13} parent=31 // pred_check
        %p1274 = pneg %p102
      $region34: #{autoencoder_forward.13} parent=31 // pred_check_branch
        %1276 = sbr.rel (%p1274) target = $region36
      $region35: #{autoencoder_forward.13} parent=31 // pred_region
        %s1277 = smul.u32 4, %s16
      $region36: #{autoencoder_forward.13} parent=31 // pred_fallthru
        _
    $region32: #{autoencoder_forward.13} parent=5 // pred_fallthru
      _
    %p1278 = scmp.le.s32.totalorder 2, %s11
    // Predicated region
    $region37: #{autoencoder_forward.13} parent=5 // pred_check
      %p1279 = pneg %p1278
    $region38: #{autoencoder_forward.13} parent=5 // pred_check_branch
      %1281 = sbr.rel (%p1279) target = $region40
    $region39: #{autoencoder_forward.13} parent=5 // pred_region
      %s1282 = ssub.s32 %s11, 2
      // Predicated region
      $region41: #{autoencoder_forward.13} parent=39 // pred_check
        %p1283 = pneg %p108
      $region42: #{autoencoder_forward.13} parent=39 // pred_check_branch
        %1285 = sbr.rel (%p1283) target = $region44
      $region43: #{autoencoder_forward.13} parent=39 // pred_region
        %s1286 = smul.u32 4, %s17
        %p1287 = scmp.lt.s32.totalorder %s1286, 7
        %s1288 = scalar_select %p1287, %s1286, 7
        %s1289 = smul.addr %s1288, 8
        %s1290 = scalar_lea.vmem %s4, %s1289
      $region44: #{autoencoder_forward.13} parent=39 // pred_fallthru
        _
    $region40: #{autoencoder_forward.13} parent=5 // pred_fallthru
      _
  $region6: #{autoencoder_forward.13} parent=0 // loop_footer
    %s15 = sadd.s32 1, %s11
  $region7: #{autoencoder_forward.13} parent=0 // loop_footer_branch
    %10 = sbr.rel target = $region3
  $region8: #{autoencoder_forward.13} parent=0 // loop_exit
    _

// kernel: autoencoder_forward.14
$region0: #{autoencoder_forward.14}
  #allocation0 [shape = 'u32[]', space=smem, size = 0x4, offset = 0x4, fixed_abs, tag = 'smem constant byte address 0x4 - core index']
  #allocation1 [shape = 'u32[144,128]{1,0:T(1,128)}', space=vmem, size = 0x12000, scoped, tag = 'internal scratch']
  #allocation2 [shape = 'u32[2048]{0}', space=vmem, size = 0x2000, scoped, tag = 'scoped memory for autoencoder_forward.14']
  #allocation3 [shape = 'u32[2048]{0}', space=vmem, size = 0x2000, scoped, tag = 'scoped memory for autoencoder_forward.14']
  #allocation4 [shape = 'u32[2048]{0}', space=vmem, size = 0x2000, scoped, tag = 'scoped memory for autoencoder_forward.14']
  #allocation5 [shape = 'u32[2048]{0}', space=vmem, size = 0x2000, scoped, tag = 'scoped memory for autoencoder_forward.14']
  #allocation6 [shape = 'u32[2048]{0}', space=vmem, size = 0x2000, scoped, tag = 'scoped memory for autoencoder_forward.14']
  %s0 = inlined_call_operand.vmem [shape: f32[128,128], index: 0, kind: input, shape index: {}]
  %s1 = inlined_call_operand.vmem [shape: f32[1,128], index: 1, kind: input, shape index: {}]
  %s2 = inlined_call_operand.vmem [shape: f32[162,128], index: 2, kind: input, shape index: {}]
  %s3 = inlined_call_operand.<no memory space> [shape: f32[], index: 3, kind: input, shape index: {}]
  %s4 = inlined_call_operand.vmem [shape: f32[176,128], index: 4, kind: output, shape index: {}]
  %s5 = sld [smem:[#allocation0]]
  $region45: #{autoencoder_forward.14} parent=0
    _
  %s7 = ssub.s32 1, %s5
  %s8 = scalar_select 0, %s7, %s5
  %v9 = vstv %s3
  loop: start=0, step=1, limit=4
  $region2: #{autoencoder_forward.14} parent=0 // loop_pre_header
    _
  $region3: #{autoencoder_forward.14} parent=0 // loop_header
    %s11 = sphi 0, %s15
    %p12 = scmp.ge.s32.totalorder %s11, 4
    %s21 = sphi 0, %s23
    %s24 = sphi 0, %s21
    %s25 = sphi 0, %s24
    %s41 = sphi 0, %s25
    %s45 = sphi 0, %s45
    %s47 = sphi 0, %s45
    %s48 = sphi 0, %s47
    %s62 = sphi 0, %s48
    %s66 = sphi 0, %s66
    %s68 = sphi 0, %s66
    %s69 = sphi 0, %s68
    %s83 = sphi 0, %s69
    %s89 = sphi 0, %s91
    %s92 = sphi 0, %s89
    %s93 = sphi 0, %s92
    %s109 = sphi 0, %s93
  $region4: #{autoencoder_forward.14} parent=0 // loop_header_branch
    %14 = sbr.rel (%p12) target = $region8
  $region5: #{autoencoder_forward.14} parent=0 // loop_body
    %s16 = ssub.s32 %s11, 1
    %s17 = ssub.s32 %s11, 2
    %s18 = sadd.s32 %s11, 1
    %s19 = ssub.s32 %s11, %s18
    %p20 = scmp.eq.s32.totalorder %s19, 0
    %s22 = sadd.s32 %s21, 1
    %s23 = scalar_select %p20, %s21, %s22
    %p26 = pneg %p20
    %p27 = scmp.eq.s32.totalorder %s11, 1
    %p28 = por %p26, %p27
    %p29 = scmp.ne.s32.totalorder %s21, %s24
    %p30 = scmp.eq.s32.totalorder %s11, 0
    %p31 = por %p29, %p30
    %p32 = scmp.ne.s32.totalorder %s21, %s24
    %p33 = scmp.eq.s32.totalorder %s16, 1
    %p34 = por %p32, %p33
    %p35 = scmp.ne.s32.totalorder %s24, %s25
    %p36 = scmp.eq.s32.totalorder %s16, 0
    %p37 = por %p35, %p36
    %p38 = scmp.ne.s32.totalorder %s24, %s25
    %p39 = scmp.eq.s32.totalorder %s17, 1
    %p40 = por %p38, %p39
    %p42 = scmp.ne.s32.totalorder %s25, %s41
    %p43 = scmp.eq.s32.totalorder %s17, 0
    %p44 = por %p42, %p43
    %s46 = sadd.s32 %s45, 1
    %p49 = scmp.eq.s32.totalorder %s11, 1
    %p50 = scmp.ne.s32.totalorder %s45, %s47
    %p51 = scmp.eq.s32.totalorder %s11, 0
    %p52 = por %p50, %p51
    %p53 = scmp.ne.s32.totalorder %s45, %s47
    %p54 = scmp.eq.s32.totalorder %s16, 1
    %p55 = por %p53, %p54
    %p56 = scmp.ne.s32.totalorder %s47, %s48
    %p57 = scmp.eq.s32.totalorder %s16, 0
    %p58 = por %p56, %p57
    %p59 = scmp.ne.s32.totalorder %s47, %s48
    %p60 = scmp.eq.s32.totalorder %s17, 1
    %p61 = por %p59, %p60
    %p63 = scmp.ne.s32.totalorder %s48, %s62
    %p64 = scmp.eq.s32.totalorder %s17, 0
    %p65 = por %p63, %p64
    %s67 = sadd.s32 %s66, 1
    %p70 = scmp.eq.s32.totalorder %s11, 1
    %p71 = scmp.ne.s32.totalorder %s66, %s68
    %p72 = scmp.eq.s32.totalorder %s11, 0
    %p73 = por %p71, %p72
    %p74 = scmp.ne.s32.totalorder %s66, %s68
    %p75 = scmp.eq.s32.totalorder %s16, 1
    %p76 = por %p74, %p75
    %p77 = scmp.ne.s32.totalorder %s68, %s69
    %p78 = scmp.eq.s32.totalorder %s16, 0
    %p79 = por %p77, %p78
    %p80 = scmp.ne.s32.totalorder %s68, %s69
    %p81 = scmp.eq.s32.totalorder %s17, 1
    %p82 = por %p80, %p81
    %p84 = scmp.ne.s32.totalorder %s69, %s83
    %p85 = scmp.eq.s32.totalorder %s17, 0
    %p86 = por %p84, %p85
    %s87 = ssub.s32 %s11, %s18
    %p88 = scmp.eq.s32.totalorder %s87, 0
    %s90 = sadd.s32 %s89, 1
    %s91 = scalar_select %p88, %s89, %s90
    %p94 = pneg %p88
    %p95 = scmp.eq.s32.totalorder %s11, 1
    %p96 = por %p94, %p95
    %p97 = scmp.ne.s32.totalorder %s89, %s92
    %p98 = scmp.eq.s32.totalorder %s11, 0
    %p99 = por %p97, %p98
    %p100 = scmp.ne.s32.totalorder %s89, %s92
    %p101 = scmp.eq.s32.totalorder %s16, 1
    %p102 = por %p100, %p101
    %p103 = scmp.ne.s32.totalorder %s92, %s93
    %p104 = scmp.eq.s32.totalorder %s16, 0
    %p105 = por %p103, %p104
    %p106 = scmp.ne.s32.totalorder %s92, %s93
    %p107 = scmp.eq.s32.totalorder %s17, 1
    %p108 = por %p106, %p107
    %p110 = scmp.ne.s32.totalorder %s93, %s109
    %p111 = scmp.eq.s32.totalorder %s17, 0
    %p112 = por %p110, %p111
    %p113 = scmp.le.s32.totalorder 1, %s11
    %p114 = scmp.lt.s32.totalorder %s11, 3
    %p115 = pnand %p113, %p114
    %p116 = pneg %p115
    // Predicated region
    $region9: #{autoencoder_forward.14} parent=5 // pred_check
      _
    $region10: #{autoencoder_forward.14} parent=5 // pred_check_branch
      %118 = sbr.rel (%p115) target = $region12
    $region11: #{autoencoder_forward.14} parent=5 // pred_region
      %s119 = ssub.s32 %s11, 1
      // Predicated region
      $region13: #{autoencoder_forward.14} parent=11 // pred_check
        %p120 = pneg %p58
      $region14: #{autoencoder_forward.14} parent=11 // pred_check_branch
        %122 = sbr.rel (%p120) target = $region16
      $region15: #{autoencoder_forward.14} parent=11 // pred_region
        _
      $region16: #{autoencoder_forward.14} parent=11 // pred_fallthru
        _
      // Predicated region
      $region17: #{autoencoder_forward.14} parent=11 // pred_check
        %p123 = pneg %p79
      $region18: #{autoencoder_forward.14} parent=11 // pred_check_branch
        %125 = sbr.rel (%p123) target = $region20
      $region19: #{autoencoder_forward.14} parent=11 // pred_region
        _
      $region20: #{autoencoder_forward.14} parent=11 // pred_fallthru
        _
    $region12: #{autoencoder_forward.14} parent=5 // pred_fallthru
      _
    %p126 = scmp.lt.s32.totalorder %s11, 2
    // Predicated region
    $region21: #{autoencoder_forward.14} parent=5 // pred_check
      %p127 = pneg %p126
    $region22: #{autoencoder_forward.14} parent=5 // pred_check_branch
      %129 = sbr.rel (%p127) target = $region24
    $region23: #{autoencoder_forward.14} parent=5 // pred_region
      // Predicated region
      $region25: #{autoencoder_forward.14} parent=23 // pred_check
        %p130 = pneg %p31
      $region26: #{autoencoder_forward.14} parent=23 // pred_check_branch
        %132 = sbr.rel (%p130) target = $region28
      $region27: #{autoencoder_forward.14} parent=23 // pred_region
        %s133 = smul.u32 11, %s11
        %s134 = ssub.s32 21, %s133
        %p135 = scmp.lt.s32.totalorder %s134, 11
        %s136 = scalar_select %p135, %s134, 11
        %s137 = smul.u32 128, %s136
        %p138 = scmp.lt.s32.totalorder %s133, 20
        %s139 = scalar_select %p138, %s133, 20
        %s140 = smul.addr %s139, 8
        %s141 = scalar_lea.vmem %s2, %s140
        %s142 = smul.u32 11, %s11
        %s143 = ssub.s32 21, %s142
        %p144 = scmp.lt.s32.totalorder %s143, 11
        %s145 = scalar_select %p144, %s143, 11
        %s146 = smul.u32 128, %s145
      $region28: #{autoencoder_forward.14} parent=23 // pred_fallthru
        _
    $region24: #{autoencoder_forward.14} parent=5 // pred_fallthru
      _
    %p147 = scmp.le.s32.totalorder 1, %s11
    %p148 = scmp.lt.s32.totalorder %s11, 3
    %p149 = pnand %p147, %p148
    %p150 = pneg %p149
    // Predicated region
    $region29: #{autoencoder_forward.14} parent=5 // pred_check
      _
    $region30: #{autoencoder_forward.14} parent=5 // pred_check_branch
      %152 = sbr.rel (%p149) target = $region32
    $region31: #{autoencoder_forward.14} parent=5 // pred_region
      #allocation7 [shape = 'u8[45056]{0}', space=vmem, size = 0xb000, dematerialized = true, scoped, tag = 'FusionAdapter Buffer %fusion.5 = f32[176,128]{1,0:T(8,128)} fusion(%param_2.19, %param_3.10), kind=kLoop, calls=%fused_computation.39.clone, metadata={op_name="jit(autoencoder_forward)/jit(_pad)/pad" stack_frame_id=74}']
      %s153 = ssub.s32 %s11, 1
      %s154 = smul.u32 11, %s16
      %s155 = ssub.s32 21, %s154
      %p156 = scmp.lt.s32.totalorder %s155, 11
      %s157 = scalar_select %p156, %s155, 11
      %s158 = smul.u32 128, %s157
      %p159 = scmp.lt.s32.totalorder %s154, 20
      %s160 = scalar_select %p159, %s154, 20
      %s161 = smul.addr %s160, 8
      %s162 = scalar_lea.vmem %s2, %s161
      %p163 = pneg %p37
      %p164 = pneg %p34
      %p165 = pneg %p58
      %p166 = pneg %p55
      %p167 = pneg %p79
      %p168 = pneg %p76
      %p169 = pneg %p105
      %p170 = pneg %p102
      %s171 = smul.u32 11, %s16
      %p172 = scmp.lt.s32.totalorder %s171, 21
      %s173 = scalar_select %p172, %s171, 21
      %s174 = smul.addr %s173, 8
      %s175 = scalar_lea.vmem %s4, %s174
      %s176 = smul.u32 11, %s16
      %s177 = ssub.s32 21, %s176
      %p178 = scmp.lt.s32.totalorder %s177, 11
      %s179 = scalar_select %p178, %s177, 11
      %s180 = smul.u32 128, %s179
      %p181 = scmp.lt.s32.totalorder %s176, 20
      %s182 = scalar_select %p181, %s176, 20
      %s183 = smul.addr %s182, 8
      %s184 = scalar_lea.vmem %s2, %s183
      %s185 = smul.u32 11, %s16
      %s186 = ssub.s32 21, %s185
      %p187 = scmp.lt.s32.totalorder %s186, 11
      %s188 = scalar_select %p187, %s186, 11
      %s189 = smul.u32 128, %s188
      %s190 = smul.u32 11, %s16
      %p191 = scmp.lt.s32.totalorder %s190, 21
      %s192 = scalar_select %p191, %s190, 21
      %s193 = smul.addr %s192, 8
      %s194 = scalar_lea.vmem %s4, %s193
      %s195 = smul.u32 11, %s16
      %v196 = vld [vmem:[%s184] sm:$0xff]
      %s197 = smul.addr %s185, 8
      %v198 = vlaneseq
      %v199 = vshrl.u32 %v198, 7
      %v200 = vstv %s197
      %v201 = vadd.s32 %v199, %v200
      %vm202 = vcmp.lt.s32.totalorder %v201, 162
      %v203 = vsel %vm202, %v196, %v9
      %205 = vst [vmem:[#allocation7] sm:$0xff] %v203
      %s206 = scalar_lea.vmem %s184, 8
      %v207 = vld [vmem:[%s206] sm:$0xff]
      %s208 = sadd.s32 %s185, 1
      %s209 = smul.addr %s208, 8
      %v210 = vlaneseq
      %v211 = vshrl.u32 %v210, 7
      %v212 = vstv %s209
      %v213 = vadd.s32 %v211, %v212
      %vm214 = vcmp.lt.s32.totalorder %v213, 162
      %v215 = vsel %vm214, %v207, %v9
      %s216 = scalar_lea.vmem [#allocation7], 8
      %218 = vst [vmem:[%s216] sm:$0xff] %v215
      %s219 = scalar_lea.vmem %s184, 16
      %v220 = vld [vmem:[%s219] sm:$0xff]
      %s221 = sadd.s32 %s185, 2
      %s222 = smul.addr %s221, 8
      %v223 = vlaneseq
      %v224 = vshrl.u32 %v223, 7
      %v225 = vstv %s222
      %v226 = vadd.s32 %v224, %v225
      %vm227 = vcmp.lt.s32.totalorder %v226, 162
      %v228 = vsel %vm227, %v220, %v9
      %s229 = scalar_lea.vmem [#allocation7], 16
      %231 = vst [vmem:[%s229] sm:$0xff] %v228
      %s232 = scalar_lea.vmem %s184, 24
      %v233 = vld [vmem:[%s232] sm:$0xff]
      %s234 = sadd.s32 %s185, 3
      %s235 = smul.addr %s234, 8
      %v236 = vlaneseq
      %v237 = vshrl.u32 %v236, 7
      %v238 = vstv %s235
      %v239 = vadd.s32 %v237, %v238
      %vm240 = vcmp.lt.s32.totalorder %v239, 162
      %v241 = vsel %vm240, %v233, %v9
      %s242 = scalar_lea.vmem [#allocation7], 24
      %244 = vst [vmem:[%s242] sm:$0xff] %v241
      %s245 = scalar_lea.vmem %s184, 32
      %v246 = vld [vmem:[%s245] sm:$0xff]
      %s247 = sadd.s32 %s185, 4
      %s248 = smul.addr %s247, 8
      %v249 = vlaneseq
      %v250 = vshrl.u32 %v249, 7
      %v251 = vstv %s248
      %v252 = vadd.s32 %v250, %v251
      %vm253 = vcmp.lt.s32.totalorder %v252, 162
      %v254 = vsel %vm253, %v246, %v9
      %s255 = scalar_lea.vmem [#allocation7], 32
      %257 = vst [vmem:[%s255] sm:$0xff] %v254
      %s258 = scalar_lea.vmem %s184, 40
      %v259 = vld [vmem:[%s258] sm:$0xff]
      %s260 = sadd.s32 %s185, 5
      %s261 = smul.addr %s260, 8
      %v262 = vlaneseq
      %v263 = vshrl.u32 %v262, 7
      %v264 = vstv %s261
      %v265 = vadd.s32 %v263, %v264
      %vm266 = vcmp.lt.s32.totalorder %v265, 162
      %v267 = vsel %vm266, %v259, %v9
      %s268 = scalar_lea.vmem [#allocation7], 40
      %270 = vst [vmem:[%s268] sm:$0xff] %v267
      %s271 = scalar_lea.vmem %s184, 48
      %v272 = vld [vmem:[%s271] sm:$0xff]
      %s273 = sadd.s32 %s185, 6
      %s274 = smul.addr %s273, 8
      %v275 = vlaneseq
      %v276 = vshrl.u32 %v275, 7
      %v277 = vstv %s274
      %v278 = vadd.s32 %v276, %v277
      %vm279 = vcmp.lt.s32.totalorder %v278, 162
      %v280 = vsel %vm279, %v272, %v9
      %s281 = scalar_lea.vmem [#allocation7], 48
      %283 = vst [vmem:[%s281] sm:$0xff] %v280
      %s284 = scalar_lea.vmem %s184, 56
      %v285 = vld [vmem:[%s284] sm:$0xff]
      %s286 = sadd.s32 %s185, 7
      %s287 = smul.addr %s286, 8
      %v288 = vlaneseq
      %v289 = vshrl.u32 %v288, 7
      %v290 = vstv %s287
      %v291 = vadd.s32 %v289, %v290
      %vm292 = vcmp.lt.s32.totalorder %v291, 162
      %v293 = vsel %vm292, %v285, %v9
      %s294 = scalar_lea.vmem [#allocation7], 56
      %296 = vst [vmem:[%s294] sm:$0xff] %v293
      %s297 = scalar_lea.vmem %s184, 64
      %v298 = vld [vmem:[%s297] sm:$0xff]
      %s299 = sadd.s32 %s185, 8
      %s300 = smul.addr %s299, 8
      %v301 = vlaneseq
      %v302 = vshrl.u32 %v301, 7
      %v303 = vstv %s300
      %v304 = vadd.s32 %v302, %v303
      %vm305 = vcmp.lt.s32.totalorder %v304, 162
      %v306 = vsel %vm305, %v298, %v9
      %s307 = scalar_lea.vmem [#allocation7], 64
      %309 = vst [vmem:[%s307] sm:$0xff] %v306
      %s310 = scalar_lea.vmem %s184, 72
      %s311 = sadd.s32 %s185, 9
      %s312 = ssub.s32 20, %s311
      %p313 = scmp.lt.s32.totalorder %s312, 0
      %s314 = scalar_select %p313, 0, 255
      %v315 = vld [vmem:[%s310] sm:%s314]
      %s316 = sadd.s32 %s185, 9
      %s317 = ssub.s32 20, %s316
      %v318 = vstv %s317
      %vm319 = vcmp.lt.s32.totalorder %v318, 0
      %v320 = vsel %vm319, %v9, %v315
      %s321 = sadd.s32 %s185, 9
      %s322 = smul.addr %s321, 8
      %v323 = vlaneseq
      %v324 = vshrl.u32 %v323, 7
      %v325 = vstv %s322
      %v326 = vadd.s32 %v324, %v325
      %vm327 = vcmp.lt.s32.totalorder %v326, 162
      %v328 = vsel %vm327, %v320, %v9
      %s329 = scalar_lea.vmem [#allocation7], 72
      %331 = vst [vmem:[%s329] sm:$0xff] %v328
      %s332 = scalar_lea.vmem %s184, 80
      %s333 = sadd.s32 %s185, 10
      %s334 = ssub.s32 20, %s333
      %p335 = scmp.lt.s32.totalorder %s334, 0
      %s336 = scalar_select %p335, 0, 255
      %v337 = vld [vmem:[%s332] sm:%s336]
      %s338 = sadd.s32 %s185, 10
      %s339 = ssub.s32 20, %s338
      %v340 = vstv %s339
      %vm341 = vcmp.lt.s32.totalorder %v340, 0
      %v342 = vsel %vm341, %v9, %v337
      %s343 = sadd.s32 %s185, 10
      %s344 = smul.addr %s343, 8
      %v345 = vlaneseq
      %v346 = vshrl.u32 %v345, 7
      %v347 = vstv %s344
      %v348 = vadd.s32 %v346, %v347
      %vm349 = vcmp.lt.s32.totalorder %v348, 162
      %v350 = vsel %vm349, %v342, %v9
      %s351 = scalar_lea.vmem [#allocation7], 80
      %353 = vst [vmem:[%s351] sm:$0xff] %v350
      %v354 = vld [vmem:[#allocation7] sm:$0xff]
      %v355 = vld [vmem:[#allocation7 + $0x8] sm:$0xff]
      %v356 = vld [vmem:[#allocation7 + $0x10] sm:$0xff]
      %v357 = vld [vmem:[#allocation7 + $0x18] sm:$0xff]
      %v358 = vld [vmem:[#allocation7 + $0x20] sm:$0xff]
      %v359 = vld [vmem:[#allocation7 + $0x28] sm:$0xff]
      %v360 = vld [vmem:[#allocation7 + $0x30] sm:$0xff]
      %v361 = vld [vmem:[#allocation7 + $0x38] sm:$0xff]
      %v362 = vld [vmem:[#allocation7 + $0x40] sm:$0xff]
      %v363 = vld [vmem:[#allocation7 + $0x48] sm:$0xff]
      %v364 = vld [vmem:[#allocation7 + $0x50] sm:$0xff]
      %v365 = vld [vmem:[%s0] sm:$0xff]
      %v366 = vld [vmem:[%s0 + $0x8] sm:$0xff]
      %v367 = vld [vmem:[%s0 + $0x10] sm:$0xff]
      %v368 = vld [vmem:[%s0 + $0x18] sm:$0xff]
      %v369 = vld [vmem:[%s0 + $0x20] sm:$0xff]
      %v370 = vld [vmem:[%s0 + $0x28] sm:$0xff]
      %v371 = vld [vmem:[%s0 + $0x30] sm:$0xff]
      %v372 = vld [vmem:[%s0 + $0x38] sm:$0xff]
      %v373 = vld [vmem:[%s0 + $0x40] sm:$0xff]
      %v374 = vld [vmem:[%s0 + $0x48] sm:$0xff]
      %v375 = vld [vmem:[%s0 + $0x50] sm:$0xff]
      %v376 = vld [vmem:[%s0 + $0x58] sm:$0xff]
      %v377 = vld [vmem:[%s0 + $0x60] sm:$0xff]
      %v378 = vld [vmem:[%s0 + $0x68] sm:$0xff]
      %v379 = vld [vmem:[%s0 + $0x70] sm:$0xff]
      %v380 = vld [vmem:[%s0 + $0x78] sm:$0xff]
      %v381 = vld [vmem:[%s1] sm:$0x1]
      %v383 = vlaneseq
      %v384 = vshrl.u32 %v383, 7
      %v385 = vsub.s32 0, %v384
      %v386 = vrot.slane %v381, %v385
      %388 = vmatprep.subr.mxu0 0.0
      %389 = vmatpush1.msra.mxu0 %v365
      %390 = vmatprep.subr.mxu0 0.0
      %391 = vmatpush1.msra.mxu0 %v366
      %392 = vmatprep.subr.mxu0 0.0
      %393 = vmatpush1.msra.mxu0 %v367
      %394 = vmatprep.subr.mxu0 0.0
      %395 = vmatpush1.msra.mxu0 %v368
      %396 = vmatprep.subr.mxu0 0.0
      %397 = vmatpush1.msra.mxu0 %v369
      %398 = vmatprep.subr.mxu0 0.0
      %399 = vmatpush1.msra.mxu0 %v370
      %400 = vmatprep.subr.mxu0 0.0
      %401 = vmatpush1.msra.mxu0 %v371
      %402 = vmatprep.subr.mxu0 0.0
      %403 = vmatpush1.msra.mxu0 %v372
      %404 = vmatprep.subr.mxu0 0.0
      %405 = vmatpush1.msra.mxu0 %v373
      %406 = vmatprep.subr.mxu0 0.0
      %407 = vmatpush1.msra.mxu0 %v374
      %408 = vmatprep.subr.mxu0 0.0
      %409 = vmatpush1.msra.mxu0 %v375
      %410 = vmatprep.subr.mxu0 0.0
      %411 = vmatpush1.msra.mxu0 %v376
      %412 = vmatprep.subr.mxu0 0.0
      %413 = vmatpush1.msra.mxu0 %v377
      %414 = vmatprep.subr.mxu0 0.0
      %415 = vmatpush1.msra.mxu0 %v378
      %416 = vmatprep.subr.mxu0 0.0
      %417 = vmatpush1.msra.mxu0 %v379
      %418 = vmatprep.subr.mxu0 0.0
      %419 = vmatpush1.msra.mxu0 %v380
      %420 = vmatprep.subr.mxu0 0.0
      %421 = vmatpush1.msra.mxu0 0.0
      %422 = vmatprep.subr.mxu0 0.0
      %423 = vmatpush1.msra.mxu0 0.0
      %424 = vmatprep.subr.mxu0 0.0
      %425 = vmatpush1.msra.mxu0 0.0
      %426 = vmatprep.subr.mxu0 0.0
      %427 = vmatpush1.msra.mxu0 0.0
      %428 = vmatprep.subr.mxu0 0.0
      %429 = vmatpush1.msra.mxu0 0.0
      %430 = vmatprep.subr.mxu0 0.0
      %431 = vmatpush1.msra.mxu0 0.0
      %432 = vmatprep.subr.mxu0 0.0
      %433 = vmatpush1.msra.mxu0 0.0
      %434 = vmatprep.subr.mxu0 0.0
      %435 = vmatpush1.msra.mxu0 0.0
      %436 = vmatprep.subr.mxu0 0.0
      %437 = vmatpush1.msra.mxu0 0.0
      %438 = vmatprep.subr.mxu0 0.0
      %439 = vmatpush1.msra.mxu0 0.0
      %440 = vmatprep.subr.mxu0 0.0
      %441 = vmatpush1.msra.mxu0 0.0
      %442 = vmatprep.subr.mxu0 0.0
      %443 = vmatpush1.msra.mxu0 0.0
      %444 = vmatprep.subr.mxu0 0.0
      %445 = vmatpush1.msra.mxu0 0.0
      %446 = vmatprep.subr.mxu0 0.0
      %447 = vmatpush1.msra.mxu0 0.0
      %448 = vmatprep.subr.mxu0 0.0
      %449 = vmatpush1.msra.mxu0 0.0
      %450 = vmatprep.subr.mxu0 0.0
      %451 = vmatpush1.msra.mxu0 0.0
      %452 = vmatprep.mubr.f32.mxu0 0.0
      %453 = vmatmul.mubr.f32.gmra.mrb[0].mxu0 %v354
      %v454 = vpop.f32.mrb[0].mxu0
      %v455 = vadd.f32 %v386, %v454
      %v456 = vpop.f32.mrb[0].mxu0
      %457 = vmatprep.mubr.f32.mxu0 0.0
      %458 = vmatmul.mubr.f32.gmra.mrb[0].mxu0 %v355
      %v459 = vpop.f32.mrb[0].mxu0
      %v460 = vadd.f32 %v386, %v459
      %v461 = vpop.f32.mrb[0].mxu0
      %462 = vmatprep.mubr.f32.mxu0 0.0
      %463 = vmatmul.mubr.f32.gmra.mrb[0].mxu0 %v356
      %v464 = vpop.f32.mrb[0].mxu0
      %v465 = vadd.f32 %v386, %v464
      %v466 = vpop.f32.mrb[0].mxu0
      %467 = vmatprep.mubr.f32.mxu0 0.0
      %468 = vmatmul.mubr.f32.gmra.mrb[0].mxu0 %v357
      %v469 = vpop.f32.mrb[0].mxu0
      %v470 = vadd.f32 %v386, %v469
      %v471 = vpop.f32.mrb[0].mxu0
      %472 = vmatprep.mubr.f32.mxu0 0.0
      %473 = vmatmul.mubr.f32.gmra.mrb[0].mxu0 %v358
      %v474 = vpop.f32.mrb[0].mxu0
      %v475 = vadd.f32 %v386, %v474
      %v476 = vpop.f32.mrb[0].mxu0
      %477 = vmatprep.mubr.f32.mxu0 0.0
      %478 = vmatmul.mubr.f32.gmra.mrb[0].mxu0 %v359
      %v479 = vpop.f32.mrb[0].mxu0
      %v480 = vadd.f32 %v386, %v479
      %v481 = vpop.f32.mrb[0].mxu0
      %482 = vmatprep.mubr.f32.mxu0 0.0
      %483 = vmatmul.mubr.f32.gmra.mrb[0].mxu0 %v360
      %v484 = vpop.f32.mrb[0].mxu0
      %v485 = vadd.f32 %v386, %v484
      %v486 = vpop.f32.mrb[0].mxu0
      %487 = vmatprep.mubr.f32.mxu0 0.0
      %488 = vmatmul.mubr.f32.gmra.mrb[0].mxu0 %v361
      %v489 = vpop.f32.mrb[0].mxu0
      %v490 = vadd.f32 %v386, %v489
      %v491 = vpop.f32.mrb[0].mxu0
      %492 = vmatprep.mubr.f32.mxu0 0.0
      %493 = vmatmul.mubr.f32.gmra.mrb[0].mxu0 %v362
      %v494 = vpop.f32.mrb[0].mxu0
      %v495 = vadd.f32 %v386, %v494
      %v496 = vpop.f32.mrb[0].mxu0
      %497 = vmatprep.mubr.f32.mxu0 0.0
      %498 = vmatmul.mubr.f32.gmra.mrb[0].mxu0 %v363
      %v499 = vpop.f32.mrb[0].mxu0
      %v500 = vadd.f32 %v386, %v499
      %v501 = vpop.f32.mrb[0].mxu0
      %502 = vmatprep.mubr.f32.mxu0 0.0
      %503 = vmatmul.mubr.f32.gmra.mrb[0].mxu0 %v364
      %v504 = vpop.f32.mrb[0].mxu0
      %v505 = vadd.f32 %v386, %v504
      %v506 = vpop.f32.mrb[0].mxu0
      %507 = vdwg.mxu0
      %v508 = vmax.f32 %v455, 0.0
      %v509 = vmax.f32 %v460, 0.0
      %v510 = vmax.f32 %v465, 0.0
      %v511 = vmax.f32 %v470, 0.0
      %v512 = vmax.f32 %v475, 0.0
      %v513 = vmax.f32 %v480, 0.0
      %v514 = vmax.f32 %v485, 0.0
      %v515 = vmax.f32 %v490, 0.0
      %v516 = vmax.f32 %v495, 0.0
      %v517 = vmax.f32 %v500, 0.0
      %v518 = vmax.f32 %v505, 0.0
      %519 = vst [vmem:[%s194] sm:$0xff] %v508
      %520 = vst [vmem:[%s194 + $0x8] sm:$0xff] %v509
      %521 = vst [vmem:[%s194 + $0x10] sm:$0xff] %v510
      %522 = vst [vmem:[%s194 + $0x18] sm:$0xff] %v511
      %523 = vst [vmem:[%s194 + $0x20] sm:$0xff] %v512
      %524 = vst [vmem:[%s194 + $0x28] sm:$0xff] %v513
      %525 = vst [vmem:[%s194 + $0x30] sm:$0xff] %v514
      %526 = vst [vmem:[%s194 + $0x38] sm:$0xff] %v515
      %527 = vst [vmem:[%s194 + $0x40] sm:$0xff] %v516
      %528 = vst [vmem:[%s194 + $0x48] sm:$0xff] %v517
      %529 = vst [vmem:[%s194 + $0x50] sm:$0xff] %v518
      %s530 = smul.u32 11, %s16
      %p531 = scmp.lt.s32.totalorder %s530, 21
      %s532 = scalar_select %p531, %s530, 21
      %s533 = smul.addr %s532, 8
      %s534 = scalar_lea.vmem %s4, %s533
      // Predicated region
      $region33: #{autoencoder_forward.14} parent=31 // pred_check
        %p535 = pneg %p102
      $region34: #{autoencoder_forward.14} parent=31 // pred_check_branch
        %537 = sbr.rel (%p535) target = $region36
      $region35: #{autoencoder_forward.14} parent=31 // pred_region
        %s538 = smul.u32 11, %s16
      $region36: #{autoencoder_forward.14} parent=31 // pred_fallthru
        _
    $region32: #{autoencoder_forward.14} parent=5 // pred_fallthru
      _
    %p539 = scmp.le.s32.totalorder 2, %s11
    // Predicated region
    $region37: #{autoencoder_forward.14} parent=5 // pred_check
      %p540 = pneg %p539
    $region38: #{autoencoder_forward.14} parent=5 // pred_check_branch
      %542 = sbr.rel (%p540) target = $region40
    $region39: #{autoencoder_forward.14} parent=5 // pred_region
      %s543 = ssub.s32 %s11, 2
      // Predicated region
      $region41: #{autoencoder_forward.14} parent=39 // pred_check
        %p544 = pneg %p108
      $region42: #{autoencoder_forward.14} parent=39 // pred_check_branch
        %546 = sbr.rel (%p544) target = $region44
      $region43: #{autoencoder_forward.14} parent=39 // pred_region
        %s547 = smul.u32 11, %s17
        %p548 = scmp.lt.s32.totalorder %s547, 21
        %s549 = scalar_select %p548, %s547, 21
        %s550 = smul.addr %s549, 8
        %s551 = scalar_lea.vmem %s4, %s550
      $region44: #{autoencoder_forward.14} parent=39 // pred_fallthru
        _
    $region40: #{autoencoder_forward.14} parent=5 // pred_fallthru
      _
  $region6: #{autoencoder_forward.14} parent=0 // loop_footer
    %s15 = sadd.s32 1, %s11
  $region7: #{autoencoder_forward.14} parent=0 // loop_footer_branch
    %10 = sbr.rel target = $region3
  $region8: #{autoencoder_forward.14} parent=0 // loop_exit
    _

// kernel: autoencoder_forward.12
$region0: #{autoencoder_forward.12}
  #allocation0 [shape = 'u32[]', space=smem, size = 0x4, offset = 0x4, fixed_abs, tag = 'smem constant byte address 0x4 - core index']
  #allocation1 [shape = 'u32[144,128]{1,0:T(1,128)}', space=vmem, size = 0x12000, scoped, tag = 'internal scratch']
  #allocation2 [shape = 'u32[2048]{0}', space=vmem, size = 0x2000, scoped, tag = 'scoped memory for autoencoder_forward.12']
  #allocation3 [shape = 'u32[2048]{0}', space=vmem, size = 0x2000, scoped, tag = 'scoped memory for autoencoder_forward.12']
  #allocation4 [shape = 'u32[2048]{0}', space=vmem, size = 0x2000, scoped, tag = 'scoped memory for autoencoder_forward.12']
  #allocation5 [shape = 'u32[2048]{0}', space=vmem, size = 0x2000, scoped, tag = 'scoped memory for autoencoder_forward.12']
  #allocation6 [shape = 'u32[2048]{0}', space=vmem, size = 0x2000, scoped, tag = 'scoped memory for autoencoder_forward.12']
  %s0 = inlined_call_operand.vmem [shape: f32[64,128], index: 0, kind: input, shape index: {}]
  %s1 = inlined_call_operand.vmem [shape: f32[1,128], index: 1, kind: input, shape index: {}]
  %s2 = inlined_call_operand.vmem [shape: f32[578,64], index: 2, kind: input, shape index: {}]
  %s3 = inlined_call_operand.<no memory space> [shape: f32[], index: 3, kind: input, shape index: {}]
  %s4 = inlined_call_operand.vmem [shape: f32[592,128], index: 4, kind: output, shape index: {}]
  %s5 = sld [smem:[#allocation0]]
  $region45: #{autoencoder_forward.12} parent=0
    _
  %s7 = ssub.s32 1, %s5
  %s8 = scalar_select 0, %s7, %s5
  %v9 = vstv %s3
  loop: start=0, step=1, limit=4
  $region2: #{autoencoder_forward.12} parent=0 // loop_pre_header
    _
  $region3: #{autoencoder_forward.12} parent=0 // loop_header
    %s11 = sphi 0, %s15
    %p12 = scmp.ge.s32.totalorder %s11, 4
    %s21 = sphi 0, %s23
    %s24 = sphi 0, %s21
    %s25 = sphi 0, %s24
    %s41 = sphi 0, %s25
    %s45 = sphi 0, %s45
    %s47 = sphi 0, %s45
    %s48 = sphi 0, %s47
    %s62 = sphi 0, %s48
    %s66 = sphi 0, %s66
    %s68 = sphi 0, %s66
    %s69 = sphi 0, %s68
    %s83 = sphi 0, %s69
    %s89 = sphi 0, %s91
    %s92 = sphi 0, %s89
    %s93 = sphi 0, %s92
    %s109 = sphi 0, %s93
  $region4: #{autoencoder_forward.12} parent=0 // loop_header_branch
    %14 = sbr.rel (%p12) target = $region8
  $region5: #{autoencoder_forward.12} parent=0 // loop_body
    %s16 = ssub.s32 %s11, 1
    %s17 = ssub.s32 %s11, 2
    %s18 = sadd.s32 %s11, 1
    %s19 = ssub.s32 %s11, %s18
    %p20 = scmp.eq.s32.totalorder %s19, 0
    %s22 = sadd.s32 %s21, 1
    %s23 = scalar_select %p20, %s21, %s22
    %p26 = pneg %p20
    %p27 = scmp.eq.s32.totalorder %s11, 1
    %p28 = por %p26, %p27
    %p29 = scmp.ne.s32.totalorder %s21, %s24
    %p30 = scmp.eq.s32.totalorder %s11, 0
    %p31 = por %p29, %p30
    %p32 = scmp.ne.s32.totalorder %s21, %s24
    %p33 = scmp.eq.s32.totalorder %s16, 1
    %p34 = por %p32, %p33
    %p35 = scmp.ne.s32.totalorder %s24, %s25
    %p36 = scmp.eq.s32.totalorder %s16, 0
    %p37 = por %p35, %p36
    %p38 = scmp.ne.s32.totalorder %s24, %s25
    %p39 = scmp.eq.s32.totalorder %s17, 1
    %p40 = por %p38, %p39
    %p42 = scmp.ne.s32.totalorder %s25, %s41
    %p43 = scmp.eq.s32.totalorder %s17, 0
    %p44 = por %p42, %p43
    %s46 = sadd.s32 %s45, 1
    %p49 = scmp.eq.s32.totalorder %s11, 1
    %p50 = scmp.ne.s32.totalorder %s45, %s47
    %p51 = scmp.eq.s32.totalorder %s11, 0
    %p52 = por %p50, %p51
    %p53 = scmp.ne.s32.totalorder %s45, %s47
    %p54 = scmp.eq.s32.totalorder %s16, 1
    %p55 = por %p53, %p54
    %p56 = scmp.ne.s32.totalorder %s47, %s48
    %p57 = scmp.eq.s32.totalorder %s16, 0
    %p58 = por %p56, %p57
    %p59 = scmp.ne.s32.totalorder %s47, %s48
    %p60 = scmp.eq.s32.totalorder %s17, 1
    %p61 = por %p59, %p60
    %p63 = scmp.ne.s32.totalorder %s48, %s62
    %p64 = scmp.eq.s32.totalorder %s17, 0
    %p65 = por %p63, %p64
    %s67 = sadd.s32 %s66, 1
    %p70 = scmp.eq.s32.totalorder %s11, 1
    %p71 = scmp.ne.s32.totalorder %s66, %s68
    %p72 = scmp.eq.s32.totalorder %s11, 0
    %p73 = por %p71, %p72
    %p74 = scmp.ne.s32.totalorder %s66, %s68
    %p75 = scmp.eq.s32.totalorder %s16, 1
    %p76 = por %p74, %p75
    %p77 = scmp.ne.s32.totalorder %s68, %s69
    %p78 = scmp.eq.s32.totalorder %s16, 0
    %p79 = por %p77, %p78
    %p80 = scmp.ne.s32.totalorder %s68, %s69
    %p81 = scmp.eq.s32.totalorder %s17, 1
    %p82 = por %p80, %p81
    %p84 = scmp.ne.s32.totalorder %s69, %s83
    %p85 = scmp.eq.s32.totalorder %s17, 0
    %p86 = por %p84, %p85
    %s87 = ssub.s32 %s11, %s18
    %p88 = scmp.eq.s32.totalorder %s87, 0
    %s90 = sadd.s32 %s89, 1
    %s91 = scalar_select %p88, %s89, %s90
    %p94 = pneg %p88
    %p95 = scmp.eq.s32.totalorder %s11, 1
    %p96 = por %p94, %p95
    %p97 = scmp.ne.s32.totalorder %s89, %s92
    %p98 = scmp.eq.s32.totalorder %s11, 0
    %p99 = por %p97, %p98
    %p100 = scmp.ne.s32.totalorder %s89, %s92
    %p101 = scmp.eq.s32.totalorder %s16, 1
    %p102 = por %p100, %p101
    %p103 = scmp.ne.s32.totalorder %s92, %s93
    %p104 = scmp.eq.s32.totalorder %s16, 0
    %p105 = por %p103, %p104
    %p106 = scmp.ne.s32.totalorder %s92, %s93
    %p107 = scmp.eq.s32.totalorder %s17, 1
    %p108 = por %p106, %p107
    %p110 = scmp.ne.s32.totalorder %s93, %s109
    %p111 = scmp.eq.s32.totalorder %s17, 0
    %p112 = por %p110, %p111
    %p113 = scmp.le.s32.totalorder 1, %s11
    %p114 = scmp.lt.s32.totalorder %s11, 3
    %p115 = pnand %p113, %p114
    %p116 = pneg %p115
    // Predicated region
    $region9: #{autoencoder_forward.12} parent=5 // pred_check
      _
    $region10: #{autoencoder_forward.12} parent=5 // pred_check_branch
      %118 = sbr.rel (%p115) target = $region12
    $region11: #{autoencoder_forward.12} parent=5 // pred_region
      %s119 = ssub.s32 %s11, 1
      // Predicated region
      $region13: #{autoencoder_forward.12} parent=11 // pred_check
        %p120 = pneg %p58
      $region14: #{autoencoder_forward.12} parent=11 // pred_check_branch
        %122 = sbr.rel (%p120) target = $region16
      $region15: #{autoencoder_forward.12} parent=11 // pred_region
        _
      $region16: #{autoencoder_forward.12} parent=11 // pred_fallthru
        _
      // Predicated region
      $region17: #{autoencoder_forward.12} parent=11 // pred_check
        %p123 = pneg %p79
      $region18: #{autoencoder_forward.12} parent=11 // pred_check_branch
        %125 = sbr.rel (%p123) target = $region20
      $region19: #{autoencoder_forward.12} parent=11 // pred_region
        _
      $region20: #{autoencoder_forward.12} parent=11 // pred_fallthru
        _
    $region12: #{autoencoder_forward.12} parent=5 // pred_fallthru
      _
    %p126 = scmp.lt.s32.totalorder %s11, 2
    // Predicated region
    $region21: #{autoencoder_forward.12} parent=5 // pred_check
      %p127 = pneg %p126
    $region22: #{autoencoder_forward.12} parent=5 // pred_check_branch
      %129 = sbr.rel (%p127) target = $region24
    $region23: #{autoencoder_forward.12} parent=5 // pred_region
      // Predicated region
      $region25: #{autoencoder_forward.12} parent=23 // pred_check
        %p130 = pneg %p31
      $region26: #{autoencoder_forward.12} parent=23 // pred_check_branch
        %132 = sbr.rel (%p130) target = $region28
      $region27: #{autoencoder_forward.12} parent=23 // pred_region
        %s133 = smul.u32 37, %s11
        %s134 = ssub.s32 73, %s133
        %p135 = scmp.lt.s32.totalorder %s134, 37
        %s136 = scalar_select %p135, %s134, 37
        %s137 = smul.u32 128, %s136
        %p138 = scmp.lt.s32.totalorder %s133, 72
        %s139 = scalar_select %p138, %s133, 72
        %s140 = smul.addr %s139, 8
        %s141 = scalar_lea.vmem %s2, %s140
        %s142 = smul.u32 37, %s11
        %s143 = ssub.s32 73, %s142
        %p144 = scmp.lt.s32.totalorder %s143, 37
        %s145 = scalar_select %p144, %s143, 37
        %s146 = smul.u32 128, %s145
      $region28: #{autoencoder_forward.12} parent=23 // pred_fallthru
        _
    $region24: #{autoencoder_forward.12} parent=5 // pred_fallthru
      _
    %p147 = scmp.le.s32.totalorder 1, %s11
    %p148 = scmp.lt.s32.totalorder %s11, 3
    %p149 = pnand %p147, %p148
    %p150 = pneg %p149
    // Predicated region
    $region29: #{autoencoder_forward.12} parent=5 // pred_check
      _
    $region30: #{autoencoder_forward.12} parent=5 // pred_check_branch
      %152 = sbr.rel (%p149) target = $region32
    $region31: #{autoencoder_forward.12} parent=5 // pred_region
      #allocation7 [shape = 'u8[151552]{0}', space=vmem, size = 0x25000, dematerialized = true, scoped, tag = 'FusionAdapter Buffer %fusion.1 = f32[592,64]{1,0:T(8,128)} fusion(%param_2.4, %param_3.4), kind=kLoop, calls=%fused_computation.22.clone, metadata={op_name="jit(autoencoder_forward)/jit(_pad)/pad" stack_frame_id=96}']
      %s153 = ssub.s32 %s11, 1
      %s154 = smul.u32 37, %s16
      %s155 = ssub.s32 73, %s154
      %p156 = scmp.lt.s32.totalorder %s155, 37
      %s157 = scalar_select %p156, %s155, 37
      %s158 = smul.u32 128, %s157
      %p159 = scmp.lt.s32.totalorder %s154, 72
      %s160 = scalar_select %p159, %s154, 72
      %s161 = smul.addr %s160, 8
      %s162 = scalar_lea.vmem %s2, %s161
      %p163 = pneg %p37
      %p164 = pneg %p34
      %p165 = pneg %p58
      %p166 = pneg %p55
      %p167 = pneg %p79
      %p168 = pneg %p76
      %p169 = pneg %p105
      %p170 = pneg %p102
      %s171 = smul.u32 37, %s16
      %p172 = scmp.lt.s32.totalorder %s171, 73
      %s173 = scalar_select %p172, %s171, 73
      %s174 = smul.addr %s173, 8
      %s175 = scalar_lea.vmem %s4, %s174
      %s176 = smul.u32 37, %s16
      %s177 = ssub.s32 73, %s176
      %p178 = scmp.lt.s32.totalorder %s177, 37
      %s179 = scalar_select %p178, %s177, 37
      %s180 = smul.u32 128, %s179
      %p181 = scmp.lt.s32.totalorder %s176, 72
      %s182 = scalar_select %p181, %s176, 72
      %s183 = smul.addr %s182, 8
      %s184 = scalar_lea.vmem %s2, %s183
      %s185 = smul.u32 37, %s16
      %s186 = ssub.s32 73, %s185
      %p187 = scmp.lt.s32.totalorder %s186, 37
      %s188 = scalar_select %p187, %s186, 37
      %s189 = smul.u32 128, %s188
      %s190 = smul.u32 37, %s16
      %p191 = scmp.lt.s32.totalorder %s190, 73
      %s192 = scalar_select %p191, %s190, 73
      %s193 = smul.addr %s192, 8
      %s194 = scalar_lea.vmem %s4, %s193
      %s195 = smul.u32 37, %s16
      %v196 = vld [vmem:[%s184] sm:$0xff]
      %s197 = smul.addr %s185, 8
      %v198 = vlaneseq
      %v199 = vshrl.u32 %v198, 7
      %v200 = vstv %s197
      %v201 = vadd.s32 %v199, %v200
      %vm202 = vcmp.lt.s32.totalorder %v201, 578
      %v203 = vsel %vm202, %v196, %v9
      %v204 = vlaneseq
      %v205 = vand.u32 %v204, 127
      %vm207 = vcmp.lt.s32.totalorder %v205, 64
      %v208 = vsel %vm207, %v203, %v9
      %210 = vst [vmem:[#allocation7] sm:$0xff] %v208
      %s211 = scalar_lea.vmem %s184, 8
      %v212 = vld [vmem:[%s211] sm:$0xff]
      %s213 = sadd.s32 %s185, 1
      %s214 = smul.addr %s213, 8
      %v215 = vlaneseq
      %v216 = vshrl.u32 %v215, 7
      %v217 = vstv %s214
      %v218 = vadd.s32 %v216, %v217
      %vm219 = vcmp.lt.s32.totalorder %v218, 578
      %v220 = vsel %vm219, %v212, %v9
      %v221 = vlaneseq
      %v222 = vand.u32 %v221, 127
      %vm224 = vcmp.lt.s32.totalorder %v222, 64
      %v225 = vsel %vm224, %v220, %v9
      %s226 = scalar_lea.vmem [#allocation7], 8
      %228 = vst [vmem:[%s226] sm:$0xff] %v225
      %s229 = scalar_lea.vmem %s184, 16
      %v230 = vld [vmem:[%s229] sm:$0xff]
      %s231 = sadd.s32 %s185, 2
      %s232 = smul.addr %s231, 8
      %v233 = vlaneseq
      %v234 = vshrl.u32 %v233, 7
      %v235 = vstv %s232
      %v236 = vadd.s32 %v234, %v235
      %vm237 = vcmp.lt.s32.totalorder %v236, 578
      %v238 = vsel %vm237, %v230, %v9
      %v239 = vlaneseq
      %v240 = vand.u32 %v239, 127
      %vm242 = vcmp.lt.s32.totalorder %v240, 64
      %v243 = vsel %vm242, %v238, %v9
      %s244 = scalar_lea.vmem [#allocation7], 16
      %246 = vst [vmem:[%s244] sm:$0xff] %v243
      %s247 = scalar_lea.vmem %s184, 24
      %v248 = vld [vmem:[%s247] sm:$0xff]
      %s249 = sadd.s32 %s185, 3
      %s250 = smul.addr %s249, 8
      %v251 = vlaneseq
      %v252 = vshrl.u32 %v251, 7
      %v253 = vstv %s250
      %v254 = vadd.s32 %v252, %v253
      %vm255 = vcmp.lt.s32.totalorder %v254, 578
      %v256 = vsel %vm255, %v248, %v9
      %v257 = vlaneseq
      %v258 = vand.u32 %v257, 127
      %vm260 = vcmp.lt.s32.totalorder %v258, 64
      %v261 = vsel %vm260, %v256, %v9
      %s262 = scalar_lea.vmem [#allocation7], 24
      %264 = vst [vmem:[%s262] sm:$0xff] %v261
      %s265 = scalar_lea.vmem %s184, 32
      %v266 = vld [vmem:[%s265] sm:$0xff]
      %s267 = sadd.s32 %s185, 4
      %s268 = smul.addr %s267, 8
      %v269 = vlaneseq
      %v270 = vshrl.u32 %v269, 7
      %v271 = vstv %s268
      %v272 = vadd.s32 %v270, %v271
      %vm273 = vcmp.lt.s32.totalorder %v272, 578
      %v274 = vsel %vm273, %v266, %v9
      %v275 = vlaneseq
      %v276 = vand.u32 %v275, 127
      %vm278 = vcmp.lt.s32.totalorder %v276, 64
      %v279 = vsel %vm278, %v274, %v9
      %s280 = scalar_lea.vmem [#allocation7], 32
      %282 = vst [vmem:[%s280] sm:$0xff] %v279
      %s283 = scalar_lea.vmem %s184, 40
      %v284 = vld [vmem:[%s283] sm:$0xff]
      %s285 = sadd.s32 %s185, 5
      %s286 = smul.addr %s285, 8
      %v287 = vlaneseq
      %v288 = vshrl.u32 %v287, 7
      %v289 = vstv %s286
      %v290 = vadd.s32 %v288, %v289
      %vm291 = vcmp.lt.s32.totalorder %v290, 578
      %v292 = vsel %vm291, %v284, %v9
      %v293 = vlaneseq
      %v294 = vand.u32 %v293, 127
      %vm296 = vcmp.lt.s32.totalorder %v294, 64
      %v297 = vsel %vm296, %v292, %v9
      %s298 = scalar_lea.vmem [#allocation7], 40
      %300 = vst [vmem:[%s298] sm:$0xff] %v297
      %s301 = scalar_lea.vmem %s184, 48
      %v302 = vld [vmem:[%s301] sm:$0xff]
      %s303 = sadd.s32 %s185, 6
      %s304 = smul.addr %s303, 8
      %v305 = vlaneseq
      %v306 = vshrl.u32 %v305, 7
      %v307 = vstv %s304
      %v308 = vadd.s32 %v306, %v307
      %vm309 = vcmp.lt.s32.totalorder %v308, 578
      %v310 = vsel %vm309, %v302, %v9
      %v311 = vlaneseq
      %v312 = vand.u32 %v311, 127
      %vm314 = vcmp.lt.s32.totalorder %v312, 64
      %v315 = vsel %vm314, %v310, %v9
      %s316 = scalar_lea.vmem [#allocation7], 48
      %318 = vst [vmem:[%s316] sm:$0xff] %v315
      %s319 = scalar_lea.vmem %s184, 56
      %v320 = vld [vmem:[%s319] sm:$0xff]
      %s321 = sadd.s32 %s185, 7
      %s322 = smul.addr %s321, 8
      %v323 = vlaneseq
      %v324 = vshrl.u32 %v323, 7
      %v325 = vstv %s322
      %v326 = vadd.s32 %v324, %v325
      %vm327 = vcmp.lt.s32.totalorder %v326, 578
      %v328 = vsel %vm327, %v320, %v9
      %v329 = vlaneseq
      %v330 = vand.u32 %v329, 127
      %vm332 = vcmp.lt.s32.totalorder %v330, 64
      %v333 = vsel %vm332, %v328, %v9
      %s334 = scalar_lea.vmem [#allocation7], 56
      %336 = vst [vmem:[%s334] sm:$0xff] %v333
      %s337 = scalar_lea.vmem %s184, 64
      %v338 = vld [vmem:[%s337] sm:$0xff]
      %s339 = sadd.s32 %s185, 8
      %s340 = smul.addr %s339, 8
      %v341 = vlaneseq
      %v342 = vshrl.u32 %v341, 7
      %v343 = vstv %s340
      %v344 = vadd.s32 %v342, %v343
      %vm345 = vcmp.lt.s32.totalorder %v344, 578
      %v346 = vsel %vm345, %v338, %v9
      %v347 = vlaneseq
      %v348 = vand.u32 %v347, 127
      %vm350 = vcmp.lt.s32.totalorder %v348, 64
      %v351 = vsel %vm350, %v346, %v9
      %s352 = scalar_lea.vmem [#allocation7], 64
      %354 = vst [vmem:[%s352] sm:$0xff] %v351
      %s355 = scalar_lea.vmem %s184, 72
      %v356 = vld [vmem:[%s355] sm:$0xff]
      %s357 = sadd.s32 %s185, 9
      %s358 = smul.addr %s357, 8
      %v359 = vlaneseq
      %v360 = vshrl.u32 %v359, 7
      %v361 = vstv %s358
      %v362 = vadd.s32 %v360, %v361
      %vm363 = vcmp.lt.s32.totalorder %v362, 578
      %v364 = vsel %vm363, %v356, %v9
      %v365 = vlaneseq
      %v366 = vand.u32 %v365, 127
      %vm368 = vcmp.lt.s32.totalorder %v366, 64
      %v369 = vsel %vm368, %v364, %v9
      %s370 = scalar_lea.vmem [#allocation7], 72
      %372 = vst [vmem:[%s370] sm:$0xff] %v369
      %s373 = scalar_lea.vmem %s184, 80
      %v374 = vld [vmem:[%s373] sm:$0xff]
      %s375 = sadd.s32 %s185, 10
      %s376 = smul.addr %s375, 8
      %v377 = vlaneseq
      %v378 = vshrl.u32 %v377, 7
      %v379 = vstv %s376
      %v380 = vadd.s32 %v378, %v379
      %vm381 = vcmp.lt.s32.totalorder %v380, 578
      %v382 = vsel %vm381, %v374, %v9
      %v383 = vlaneseq
      %v384 = vand.u32 %v383, 127
      %vm386 = vcmp.lt.s32.totalorder %v384, 64
      %v387 = vsel %vm386, %v382, %v9
      %s388 = scalar_lea.vmem [#allocation7], 80
      %390 = vst [vmem:[%s388] sm:$0xff] %v387
      %s391 = scalar_lea.vmem %s184, 88
      %v392 = vld [vmem:[%s391] sm:$0xff]
      %s393 = sadd.s32 %s185, 11
      %s394 = smul.addr %s393, 8
      %v395 = vlaneseq
      %v396 = vshrl.u32 %v395, 7
      %v397 = vstv %s394
      %v398 = vadd.s32 %v396, %v397
      %vm399 = vcmp.lt.s32.totalorder %v398, 578
      %v400 = vsel %vm399, %v392, %v9
      %v401 = vlaneseq
      %v402 = vand.u32 %v401, 127
      %vm404 = vcmp.lt.s32.totalorder %v402, 64
      %v405 = vsel %vm404, %v400, %v9
      %s406 = scalar_lea.vmem [#allocation7], 88
      %408 = vst [vmem:[%s406] sm:$0xff] %v405
      %s409 = scalar_lea.vmem %s184, 96
      %v410 = vld [vmem:[%s409] sm:$0xff]
      %s411 = sadd.s32 %s185, 12
      %s412 = smul.addr %s411, 8
      %v413 = vlaneseq
      %v414 = vshrl.u32 %v413, 7
      %v415 = vstv %s412
      %v416 = vadd.s32 %v414, %v415
      %vm417 = vcmp.lt.s32.totalorder %v416, 578
      %v418 = vsel %vm417, %v410, %v9
      %v419 = vlaneseq
      %v420 = vand.u32 %v419, 127
      %vm422 = vcmp.lt.s32.totalorder %v420, 64
      %v423 = vsel %vm422, %v418, %v9
      %s424 = scalar_lea.vmem [#allocation7], 96
      %426 = vst [vmem:[%s424] sm:$0xff] %v423
      %s427 = scalar_lea.vmem %s184, 104
      %v428 = vld [vmem:[%s427] sm:$0xff]
      %s429 = sadd.s32 %s185, 13
      %s430 = smul.addr %s429, 8
      %v431 = vlaneseq
      %v432 = vshrl.u32 %v431, 7
      %v433 = vstv %s430
      %v434 = vadd.s32 %v432, %v433
      %vm435 = vcmp.lt.s32.totalorder %v434, 578
      %v436 = vsel %vm435, %v428, %v9
      %v437 = vlaneseq
      %v438 = vand.u32 %v437, 127
      %vm440 = vcmp.lt.s32.totalorder %v438, 64
      %v441 = vsel %vm440, %v436, %v9
      %s442 = scalar_lea.vmem [#allocation7], 104
      %444 = vst [vmem:[%s442] sm:$0xff] %v441
      %s445 = scalar_lea.vmem %s184, 112
      %v446 = vld [vmem:[%s445] sm:$0xff]
      %s447 = sadd.s32 %s185, 14
      %s448 = smul.addr %s447, 8
      %v449 = vlaneseq
      %v450 = vshrl.u32 %v449, 7
      %v451 = vstv %s448
      %v452 = vadd.s32 %v450, %v451
      %vm453 = vcmp.lt.s32.totalorder %v452, 578
      %v454 = vsel %vm453, %v446, %v9
      %v455 = vlaneseq
      %v456 = vand.u32 %v455, 127
      %vm458 = vcmp.lt.s32.totalorder %v456, 64
      %v459 = vsel %vm458, %v454, %v9
      %s460 = scalar_lea.vmem [#allocation7], 112
      %462 = vst [vmem:[%s460] sm:$0xff] %v459
      %s463 = scalar_lea.vmem %s184, 120
      %v464 = vld [vmem:[%s463] sm:$0xff]
      %s465 = sadd.s32 %s185, 15
      %s466 = smul.addr %s465, 8
      %v467 = vlaneseq
      %v468 = vshrl.u32 %v467, 7
      %v469 = vstv %s466
      %v470 = vadd.s32 %v468, %v469
      %vm471 = vcmp.lt.s32.totalorder %v470, 578
      %v472 = vsel %vm471, %v464, %v9
      %v473 = vlaneseq
      %v474 = vand.u32 %v473, 127
      %vm476 = vcmp.lt.s32.totalorder %v474, 64
      %v477 = vsel %vm476, %v472, %v9
      %s478 = scalar_lea.vmem [#allocation7], 120
      %480 = vst [vmem:[%s478] sm:$0xff] %v477
      %s481 = scalar_lea.vmem %s184, 128
      %v482 = vld [vmem:[%s481] sm:$0xff]
      %s483 = sadd.s32 %s185, 16
      %s484 = smul.addr %s483, 8
      %v485 = vlaneseq
      %v486 = vshrl.u32 %v485, 7
      %v487 = vstv %s484
      %v488 = vadd.s32 %v486, %v487
      %vm489 = vcmp.lt.s32.totalorder %v488, 578
      %v490 = vsel %vm489, %v482, %v9
      %v491 = vlaneseq
      %v492 = vand.u32 %v491, 127
      %vm494 = vcmp.lt.s32.totalorder %v492, 64
      %v495 = vsel %vm494, %v490, %v9
      %s496 = scalar_lea.vmem [#allocation7], 128
      %498 = vst [vmem:[%s496] sm:$0xff] %v495
      %s499 = scalar_lea.vmem %s184, 136
      %v500 = vld [vmem:[%s499] sm:$0xff]
      %s501 = sadd.s32 %s185, 17
      %s502 = smul.addr %s501, 8
      %v503 = vlaneseq
      %v504 = vshrl.u32 %v503, 7
      %v505 = vstv %s502
      %v506 = vadd.s32 %v504, %v505
      %vm507 = vcmp.lt.s32.totalorder %v506, 578
      %v508 = vsel %vm507, %v500, %v9
      %v509 = vlaneseq
      %v510 = vand.u32 %v509, 127
      %vm512 = vcmp.lt.s32.totalorder %v510, 64
      %v513 = vsel %vm512, %v508, %v9
      %s514 = scalar_lea.vmem [#allocation7], 136
      %516 = vst [vmem:[%s514] sm:$0xff] %v513
      %s517 = scalar_lea.vmem %s184, 144
      %v518 = vld [vmem:[%s517] sm:$0xff]
      %s519 = sadd.s32 %s185, 18
      %s520 = smul.addr %s519, 8
      %v521 = vlaneseq
      %v522 = vshrl.u32 %v521, 7
      %v523 = vstv %s520
      %v524 = vadd.s32 %v522, %v523
      %vm525 = vcmp.lt.s32.totalorder %v524, 578
      %v526 = vsel %vm525, %v518, %v9
      %v527 = vlaneseq
      %v528 = vand.u32 %v527, 127
      %vm530 = vcmp.lt.s32.totalorder %v528, 64
      %v531 = vsel %vm530, %v526, %v9
      %s532 = scalar_lea.vmem [#allocation7], 144
      %534 = vst [vmem:[%s532] sm:$0xff] %v531
      %s535 = scalar_lea.vmem %s184, 152
      %v536 = vld [vmem:[%s535] sm:$0xff]
      %s537 = sadd.s32 %s185, 19
      %s538 = smul.addr %s537, 8
      %v539 = vlaneseq
      %v540 = vshrl.u32 %v539, 7
      %v541 = vstv %s538
      %v542 = vadd.s32 %v540, %v541
      %vm543 = vcmp.lt.s32.totalorder %v542, 578
      %v544 = vsel %vm543, %v536, %v9
      %v545 = vlaneseq
      %v546 = vand.u32 %v545, 127
      %vm548 = vcmp.lt.s32.totalorder %v546, 64
      %v549 = vsel %vm548, %v544, %v9
      %s550 = scalar_lea.vmem [#allocation7], 152
      %552 = vst [vmem:[%s550] sm:$0xff] %v549
      %s553 = scalar_lea.vmem %s184, 160
      %v554 = vld [vmem:[%s553] sm:$0xff]
      %s555 = sadd.s32 %s185, 20
      %s556 = smul.addr %s555, 8
      %v557 = vlaneseq
      %v558 = vshrl.u32 %v557, 7
      %v559 = vstv %s556
      %v560 = vadd.s32 %v558, %v559
      %vm561 = vcmp.lt.s32.totalorder %v560, 578
      %v562 = vsel %vm561, %v554, %v9
      %v563 = vlaneseq
      %v564 = vand.u32 %v563, 127
      %vm566 = vcmp.lt.s32.totalorder %v564, 64
      %v567 = vsel %vm566, %v562, %v9
      %s568 = scalar_lea.vmem [#allocation7], 160
      %570 = vst [vmem:[%s568] sm:$0xff] %v567
      %s571 = scalar_lea.vmem %s184, 168
      %v572 = vld [vmem:[%s571] sm:$0xff]
      %s573 = sadd.s32 %s185, 21
      %s574 = smul.addr %s573, 8
      %v575 = vlaneseq
      %v576 = vshrl.u32 %v575, 7
      %v577 = vstv %s574
      %v578 = vadd.s32 %v576, %v577
      %vm579 = vcmp.lt.s32.totalorder %v578, 578
      %v580 = vsel %vm579, %v572, %v9
      %v581 = vlaneseq
      %v582 = vand.u32 %v581, 127
      %vm584 = vcmp.lt.s32.totalorder %v582, 64
      %v585 = vsel %vm584, %v580, %v9
      %s586 = scalar_lea.vmem [#allocation7], 168
      %588 = vst [vmem:[%s586] sm:$0xff] %v585
      %s589 = scalar_lea.vmem %s184, 176
      %v590 = vld [vmem:[%s589] sm:$0xff]
      %s591 = sadd.s32 %s185, 22
      %s592 = smul.addr %s591, 8
      %v593 = vlaneseq
      %v594 = vshrl.u32 %v593, 7
      %v595 = vstv %s592
      %v596 = vadd.s32 %v594, %v595
      %vm597 = vcmp.lt.s32.totalorder %v596, 578
      %v598 = vsel %vm597, %v590, %v9
      %v599 = vlaneseq
      %v600 = vand.u32 %v599, 127
      %vm602 = vcmp.lt.s32.totalorder %v600, 64
      %v603 = vsel %vm602, %v598, %v9
      %s604 = scalar_lea.vmem [#allocation7], 176
      %606 = vst [vmem:[%s604] sm:$0xff] %v603
      %s607 = scalar_lea.vmem %s184, 184
      %v608 = vld [vmem:[%s607] sm:$0xff]
      %s609 = sadd.s32 %s185, 23
      %s610 = smul.addr %s609, 8
      %v611 = vlaneseq
      %v612 = vshrl.u32 %v611, 7
      %v613 = vstv %s610
      %v614 = vadd.s32 %v612, %v613
      %vm615 = vcmp.lt.s32.totalorder %v614, 578
      %v616 = vsel %vm615, %v608, %v9
      %v617 = vlaneseq
      %v618 = vand.u32 %v617, 127
      %vm620 = vcmp.lt.s32.totalorder %v618, 64
      %v621 = vsel %vm620, %v616, %v9
      %s622 = scalar_lea.vmem [#allocation7], 184
      %624 = vst [vmem:[%s622] sm:$0xff] %v621
      %s625 = scalar_lea.vmem %s184, 192
      %v626 = vld [vmem:[%s625] sm:$0xff]
      %s627 = sadd.s32 %s185, 24
      %s628 = smul.addr %s627, 8
      %v629 = vlaneseq
      %v630 = vshrl.u32 %v629, 7
      %v631 = vstv %s628
      %v632 = vadd.s32 %v630, %v631
      %vm633 = vcmp.lt.s32.totalorder %v632, 578
      %v634 = vsel %vm633, %v626, %v9
      %v635 = vlaneseq
      %v636 = vand.u32 %v635, 127
      %vm638 = vcmp.lt.s32.totalorder %v636, 64
      %v639 = vsel %vm638, %v634, %v9
      %s640 = scalar_lea.vmem [#allocation7], 192
      %642 = vst [vmem:[%s640] sm:$0xff] %v639
      %s643 = scalar_lea.vmem %s184, 200
      %v644 = vld [vmem:[%s643] sm:$0xff]
      %s645 = sadd.s32 %s185, 25
      %s646 = smul.addr %s645, 8
      %v647 = vlaneseq
      %v648 = vshrl.u32 %v647, 7
      %v649 = vstv %s646
      %v650 = vadd.s32 %v648, %v649
      %vm651 = vcmp.lt.s32.totalorder %v650, 578
      %v652 = vsel %vm651, %v644, %v9
      %v653 = vlaneseq
      %v654 = vand.u32 %v653, 127
      %vm656 = vcmp.lt.s32.totalorder %v654, 64
      %v657 = vsel %vm656, %v652, %v9
      %s658 = scalar_lea.vmem [#allocation7], 200
      %660 = vst [vmem:[%s658] sm:$0xff] %v657
      %s661 = scalar_lea.vmem %s184, 208
      %v662 = vld [vmem:[%s661] sm:$0xff]
      %s663 = sadd.s32 %s185, 26
      %s664 = smul.addr %s663, 8
      %v665 = vlaneseq
      %v666 = vshrl.u32 %v665, 7
      %v667 = vstv %s664
      %v668 = vadd.s32 %v666, %v667
      %vm669 = vcmp.lt.s32.totalorder %v668, 578
      %v670 = vsel %vm669, %v662, %v9
      %v671 = vlaneseq
      %v672 = vand.u32 %v671, 127
      %vm674 = vcmp.lt.s32.totalorder %v672, 64
      %v675 = vsel %vm674, %v670, %v9
      %s676 = scalar_lea.vmem [#allocation7], 208
      %678 = vst [vmem:[%s676] sm:$0xff] %v675
      %s679 = scalar_lea.vmem %s184, 216
      %v680 = vld [vmem:[%s679] sm:$0xff]
      %s681 = sadd.s32 %s185, 27
      %s682 = smul.addr %s681, 8
      %v683 = vlaneseq
      %v684 = vshrl.u32 %v683, 7
      %v685 = vstv %s682
      %v686 = vadd.s32 %v684, %v685
      %vm687 = vcmp.lt.s32.totalorder %v686, 578
      %v688 = vsel %vm687, %v680, %v9
      %v689 = vlaneseq
      %v690 = vand.u32 %v689, 127
      %vm692 = vcmp.lt.s32.totalorder %v690, 64
      %v693 = vsel %vm692, %v688, %v9
      %s694 = scalar_lea.vmem [#allocation7], 216
      %696 = vst [vmem:[%s694] sm:$0xff] %v693
      %s697 = scalar_lea.vmem %s184, 224
      %v698 = vld [vmem:[%s697] sm:$0xff]
      %s699 = sadd.s32 %s185, 28
      %s700 = smul.addr %s699, 8
      %v701 = vlaneseq
      %v702 = vshrl.u32 %v701, 7
      %v703 = vstv %s700
      %v704 = vadd.s32 %v702, %v703
      %vm705 = vcmp.lt.s32.totalorder %v704, 578
      %v706 = vsel %vm705, %v698, %v9
      %v707 = vlaneseq
      %v708 = vand.u32 %v707, 127
      %vm710 = vcmp.lt.s32.totalorder %v708, 64
      %v711 = vsel %vm710, %v706, %v9
      %s712 = scalar_lea.vmem [#allocation7], 224
      %714 = vst [vmem:[%s712] sm:$0xff] %v711
      %s715 = scalar_lea.vmem %s184, 232
      %v716 = vld [vmem:[%s715] sm:$0xff]
      %s717 = sadd.s32 %s185, 29
      %s718 = smul.addr %s717, 8
      %v719 = vlaneseq
      %v720 = vshrl.u32 %v719, 7
      %v721 = vstv %s718
      %v722 = vadd.s32 %v720, %v721
      %vm723 = vcmp.lt.s32.totalorder %v722, 578
      %v724 = vsel %vm723, %v716, %v9
      %v725 = vlaneseq
      %v726 = vand.u32 %v725, 127
      %vm728 = vcmp.lt.s32.totalorder %v726, 64
      %v729 = vsel %vm728, %v724, %v9
      %s730 = scalar_lea.vmem [#allocation7], 232
      %732 = vst [vmem:[%s730] sm:$0xff] %v729
      %s733 = scalar_lea.vmem %s184, 240
      %v734 = vld [vmem:[%s733] sm:$0xff]
      %s735 = sadd.s32 %s185, 30
      %s736 = smul.addr %s735, 8
      %v737 = vlaneseq
      %v738 = vshrl.u32 %v737, 7
      %v739 = vstv %s736
      %v740 = vadd.s32 %v738, %v739
      %vm741 = vcmp.lt.s32.totalorder %v740, 578
      %v742 = vsel %vm741, %v734, %v9
      %v743 = vlaneseq
      %v744 = vand.u32 %v743, 127
      %vm746 = vcmp.lt.s32.totalorder %v744, 64
      %v747 = vsel %vm746, %v742, %v9
      %s748 = scalar_lea.vmem [#allocation7], 240
      %750 = vst [vmem:[%s748] sm:$0xff] %v747
      %s751 = scalar_lea.vmem %s184, 248
      %v752 = vld [vmem:[%s751] sm:$0xff]
      %s753 = sadd.s32 %s185, 31
      %s754 = smul.addr %s753, 8
      %v755 = vlaneseq
      %v756 = vshrl.u32 %v755, 7
      %v757 = vstv %s754
      %v758 = vadd.s32 %v756, %v757
      %vm759 = vcmp.lt.s32.totalorder %v758, 578
      %v760 = vsel %vm759, %v752, %v9
      %v761 = vlaneseq
      %v762 = vand.u32 %v761, 127
      %vm764 = vcmp.lt.s32.totalorder %v762, 64
      %v765 = vsel %vm764, %v760, %v9
      %s766 = scalar_lea.vmem [#allocation7], 248
      %768 = vst [vmem:[%s766] sm:$0xff] %v765
      %s769 = scalar_lea.vmem %s184, 256
      %v770 = vld [vmem:[%s769] sm:$0xff]
      %s771 = sadd.s32 %s185, 32
      %s772 = smul.addr %s771, 8
      %v773 = vlaneseq
      %v774 = vshrl.u32 %v773, 7
      %v775 = vstv %s772
      %v776 = vadd.s32 %v774, %v775
      %vm777 = vcmp.lt.s32.totalorder %v776, 578
      %v778 = vsel %vm777, %v770, %v9
      %v779 = vlaneseq
      %v780 = vand.u32 %v779, 127
      %vm782 = vcmp.lt.s32.totalorder %v780, 64
      %v783 = vsel %vm782, %v778, %v9
      %s784 = scalar_lea.vmem [#allocation7], 256
      %786 = vst [vmem:[%s784] sm:$0xff] %v783
      %s787 = scalar_lea.vmem %s184, 264
      %v788 = vld [vmem:[%s787] sm:$0xff]
      %s789 = sadd.s32 %s185, 33
      %s790 = smul.addr %s789, 8
      %v791 = vlaneseq
      %v792 = vshrl.u32 %v791, 7
      %v793 = vstv %s790
      %v794 = vadd.s32 %v792, %v793
      %vm795 = vcmp.lt.s32.totalorder %v794, 578
      %v796 = vsel %vm795, %v788, %v9
      %v797 = vlaneseq
      %v798 = vand.u32 %v797, 127
      %vm800 = vcmp.lt.s32.totalorder %v798, 64
      %v801 = vsel %vm800, %v796, %v9
      %s802 = scalar_lea.vmem [#allocation7], 264
      %804 = vst [vmem:[%s802] sm:$0xff] %v801
      %s805 = scalar_lea.vmem %s184, 272
      %v806 = vld [vmem:[%s805] sm:$0xff]
      %s807 = sadd.s32 %s185, 34
      %s808 = smul.addr %s807, 8
      %v809 = vlaneseq
      %v810 = vshrl.u32 %v809, 7
      %v811 = vstv %s808
      %v812 = vadd.s32 %v810, %v811
      %vm813 = vcmp.lt.s32.totalorder %v812, 578
      %v814 = vsel %vm813, %v806, %v9
      %v815 = vlaneseq
      %v816 = vand.u32 %v815, 127
      %vm818 = vcmp.lt.s32.totalorder %v816, 64
      %v819 = vsel %vm818, %v814, %v9
      %s820 = scalar_lea.vmem [#allocation7], 272
      %822 = vst [vmem:[%s820] sm:$0xff] %v819
      %s823 = scalar_lea.vmem %s184, 280
      %s824 = sadd.s32 %s185, 35
      %s825 = ssub.s32 72, %s824
      %p826 = scmp.lt.s32.totalorder %s825, 0
      %s827 = scalar_select %p826, 0, 255
      %v828 = vld [vmem:[%s823] sm:%s827]
      %s829 = sadd.s32 %s185, 35
      %s830 = ssub.s32 72, %s829
      %v831 = vstv %s830
      %vm832 = vcmp.lt.s32.totalorder %v831, 0
      %v833 = vsel %vm832, %v9, %v828
      %s834 = sadd.s32 %s185, 35
      %s835 = smul.addr %s834, 8
      %v836 = vlaneseq
      %v837 = vshrl.u32 %v836, 7
      %v838 = vstv %s835
      %v839 = vadd.s32 %v837, %v838
      %vm840 = vcmp.lt.s32.totalorder %v839, 578
      %v841 = vsel %vm840, %v833, %v9
      %v842 = vlaneseq
      %v843 = vand.u32 %v842, 127
      %vm845 = vcmp.lt.s32.totalorder %v843, 64
      %v846 = vsel %vm845, %v841, %v9
      %s847 = scalar_lea.vmem [#allocation7], 280
      %849 = vst [vmem:[%s847] sm:$0xff] %v846
      %s850 = scalar_lea.vmem %s184, 288
      %s851 = sadd.s32 %s185, 36
      %s852 = ssub.s32 72, %s851
      %p853 = scmp.lt.s32.totalorder %s852, 0
      %s854 = scalar_select %p853, 0, 255
      %v855 = vld [vmem:[%s850] sm:%s854]
      %s856 = sadd.s32 %s185, 36
      %s857 = ssub.s32 72, %s856
      %v858 = vstv %s857
      %vm859 = vcmp.lt.s32.totalorder %v858, 0
      %v860 = vsel %vm859, %v9, %v855
      %s861 = sadd.s32 %s185, 36
      %s862 = smul.addr %s861, 8
      %v863 = vlaneseq
      %v864 = vshrl.u32 %v863, 7
      %v865 = vstv %s862
      %v866 = vadd.s32 %v864, %v865
      %vm867 = vcmp.lt.s32.totalorder %v866, 578
      %v868 = vsel %vm867, %v860, %v9
      %v869 = vlaneseq
      %v870 = vand.u32 %v869, 127
      %vm872 = vcmp.lt.s32.totalorder %v870, 64
      %v873 = vsel %vm872, %v868, %v9
      %s874 = scalar_lea.vmem [#allocation7], 288
      %876 = vst [vmem:[%s874] sm:$0xff] %v873
      %v877 = vld [vmem:[#allocation7] sm:$0xff]
      %v878 = vld [vmem:[#allocation7 + $0x8] sm:$0xff]
      %v879 = vld [vmem:[#allocation7 + $0x10] sm:$0xff]
      %v880 = vld [vmem:[#allocation7 + $0x18] sm:$0xff]
      %v881 = vld [vmem:[#allocation7 + $0x20] sm:$0xff]
      %v882 = vld [vmem:[#allocation7 + $0x28] sm:$0xff]
      %v883 = vld [vmem:[#allocation7 + $0x30] sm:$0xff]
      %v884 = vld [vmem:[#allocation7 + $0x38] sm:$0xff]
      %v885 = vld [vmem:[#allocation7 + $0x40] sm:$0xff]
      %v886 = vld [vmem:[#allocation7 + $0x48] sm:$0xff]
      %v887 = vld [vmem:[#allocation7 + $0x50] sm:$0xff]
      %v888 = vld [vmem:[#allocation7 + $0x58] sm:$0xff]
      %v889 = vld [vmem:[#allocation7 + $0x60] sm:$0xff]
      %v890 = vld [vmem:[#allocation7 + $0x68] sm:$0xff]
      %v891 = vld [vmem:[#allocation7 + $0x70] sm:$0xff]
      %v892 = vld [vmem:[#allocation7 + $0x78] sm:$0xff]
      %v893 = vld [vmem:[#allocation7 + $0x80] sm:$0xff]
      %v894 = vld [vmem:[#allocation7 + $0x88] sm:$0xff]
      %v895 = vld [vmem:[#allocation7 + $0x90] sm:$0xff]
      %v896 = vld [vmem:[#allocation7 + $0x98] sm:$0xff]
      %v897 = vld [vmem:[#allocation7 + $0xa0] sm:$0xff]
      %v898 = vld [vmem:[#allocation7 + $0xa8] sm:$0xff]
      %v899 = vld [vmem:[#allocation7 + $0xb0] sm:$0xff]
      %v900 = vld [vmem:[#allocation7 + $0xb8] sm:$0xff]
      %v901 = vld [vmem:[#allocation7 + $0xc0] sm:$0xff]
      %v902 = vld [vmem:[#allocation7 + $0xc8] sm:$0xff]
      %v903 = vld [vmem:[#allocation7 + $0xd0] sm:$0xff]
      %v904 = vld [vmem:[#allocation7 + $0xd8] sm:$0xff]
      %v905 = vld [vmem:[#allocation7 + $0xe0] sm:$0xff]
      %v906 = vld [vmem:[#allocation7 + $0xe8] sm:$0xff]
      %v907 = vld [vmem:[#allocation7 + $0xf0] sm:$0xff]
      %v908 = vld [vmem:[#allocation7 + $0xf8] sm:$0xff]
      %v909 = vld [vmem:[#allocation7 + $0x100] sm:$0xff]
      %v910 = vld [vmem:[#allocation7 + $0x108] sm:$0xff]
      %v911 = vld [vmem:[#allocation7 + $0x110] sm:$0xff]
      %v912 = vld [vmem:[#allocation7 + $0x118] sm:$0xff]
      %v913 = vld [vmem:[#allocation7 + $0x120] sm:$0xff]
      %v914 = vld [vmem:[%s0] sm:$0xff]
      %v915 = vld [vmem:[%s0 + $0x8] sm:$0xff]
      %v916 = vld [vmem:[%s0 + $0x10] sm:$0xff]
      %v917 = vld [vmem:[%s0 + $0x18] sm:$0xff]
      %v918 = vld [vmem:[%s0 + $0x20] sm:$0xff]
      %v919 = vld [vmem:[%s0 + $0x28] sm:$0xff]
      %v920 = vld [vmem:[%s0 + $0x30] sm:$0xff]
      %v921 = vld [vmem:[%s0 + $0x38] sm:$0xff]
      %v922 = vld [vmem:[%s1] sm:$0x1]
      %v924 = vlaneseq
      %v925 = vshrl.u32 %v924, 7
      %v926 = vsub.s32 0, %v925
      %v927 = vrot.slane %v922, %v926
      %vm929 = vcmask 523264
      %v931 = vsel %vm929, %v877, 0
      %v934 = vsel %vm929, %v878, 0
      %v937 = vsel %vm929, %v879, 0
      %v940 = vsel %vm929, %v880, 0
      %v943 = vsel %vm929, %v881, 0
      %v946 = vsel %vm929, %v882, 0
      %v949 = vsel %vm929, %v883, 0
      %v952 = vsel %vm929, %v884, 0
      %v955 = vsel %vm929, %v885, 0
      %v958 = vsel %vm929, %v886, 0
      %v961 = vsel %vm929, %v887, 0
      %v964 = vsel %vm929, %v888, 0
      %v967 = vsel %vm929, %v889, 0
      %v970 = vsel %vm929, %v890, 0
      %v973 = vsel %vm929, %v891, 0
      %v976 = vsel %vm929, %v892, 0
      %v979 = vsel %vm929, %v893, 0
      %v982 = vsel %vm929, %v894, 0
      %v985 = vsel %vm929, %v895, 0
      %v988 = vsel %vm929, %v896, 0
      %v991 = vsel %vm929, %v897, 0
      %v994 = vsel %vm929, %v898, 0
      %v997 = vsel %vm929, %v899, 0
      %v1000 = vsel %vm929, %v900, 0
      %v1003 = vsel %vm929, %v901, 0
      %v1006 = vsel %vm929, %v902, 0
      %v1009 = vsel %vm929, %v903, 0
      %v1012 = vsel %vm929, %v904, 0
      %v1015 = vsel %vm929, %v905, 0
      %v1018 = vsel %vm929, %v906, 0
      %v1021 = vsel %vm929, %v907, 0
      %v1024 = vsel %vm929, %v908, 0
      %v1027 = vsel %vm929, %v909, 0
      %v1030 = vsel %vm929, %v910, 0
      %v1033 = vsel %vm929, %v911, 0
      %v1036 = vsel %vm929, %v912, 0
      %v1039 = vsel %vm929, %v913, 0
      %1041 = vmatprep.subr.mxu0 0.0
      %1042 = vmatpush1.msra.mxu0 %v914
      %1043 = vmatprep.subr.mxu0 0.0
      %1044 = vmatpush1.msra.mxu0 %v915
      %1045 = vmatprep.subr.mxu0 0.0
      %1046 = vmatpush1.msra.mxu0 %v916
      %1047 = vmatprep.subr.mxu0 0.0
      %1048 = vmatpush1.msra.mxu0 %v917
      %1049 = vmatprep.subr.mxu0 0.0
      %1050 = vmatpush1.msra.mxu0 %v918
      %1051 = vmatprep.subr.mxu0 0.0
      %1052 = vmatpush1.msra.mxu0 %v919
      %1053 = vmatprep.subr.mxu0 0.0
      %1054 = vmatpush1.msra.mxu0 %v920
      %1055 = vmatprep.subr.mxu0 0.0
      %1056 = vmatpush1.msra.mxu0 %v921
      %1057 = vmatprep.subr.mxu0 0.0
      %1058 = vmatpush1.msra.mxu0 0.0
      %1059 = vmatprep.subr.mxu0 0.0
      %1060 = vmatpush1.msra.mxu0 0.0
      %1061 = vmatprep.subr.mxu0 0.0
      %1062 = vmatpush1.msra.mxu0 0.0
      %1063 = vmatprep.subr.mxu0 0.0
      %1064 = vmatpush1.msra.mxu0 0.0
      %1065 = vmatprep.subr.mxu0 0.0
      %1066 = vmatpush1.msra.mxu0 0.0
      %1067 = vmatprep.subr.mxu0 0.0
      %1068 = vmatpush1.msra.mxu0 0.0
      %1069 = vmatprep.subr.mxu0 0.0
      %1070 = vmatpush1.msra.mxu0 0.0
      %1071 = vmatprep.subr.mxu0 0.0
      %1072 = vmatpush1.msra.mxu0 0.0
      %1073 = vmatprep.subr.mxu0 0.0
      %1074 = vmatpush1.msra.mxu0 0.0
      %1075 = vmatprep.subr.mxu0 0.0
      %1076 = vmatpush1.msra.mxu0 0.0
      %1077 = vmatprep.subr.mxu0 0.0
      %1078 = vmatpush1.msra.mxu0 0.0
      %1079 = vmatprep.subr.mxu0 0.0
      %1080 = vmatpush1.msra.mxu0 0.0
      %1081 = vmatprep.subr.mxu0 0.0
      %1082 = vmatpush1.msra.mxu0 0.0
      %1083 = vmatprep.subr.mxu0 0.0
      %1084 = vmatpush1.msra.mxu0 0.0
      %1085 = vmatprep.subr.mxu0 0.0
      %1086 = vmatpush1.msra.mxu0 0.0
      %1087 = vmatprep.subr.mxu0 0.0
      %1088 = vmatpush1.msra.mxu0 0.0
      %1089 = vmatprep.subr.mxu0 0.0
      %1090 = vmatpush1.msra.mxu0 0.0
      %1091 = vmatprep.subr.mxu0 0.0
      %1092 = vmatpush1.msra.mxu0 0.0
      %1093 = vmatprep.subr.mxu0 0.0
      %1094 = vmatpush1.msra.mxu0 0.0
      %1095 = vmatprep.subr.mxu0 0.0
      %1096 = vmatpush1.msra.mxu0 0.0
      %1097 = vmatprep.subr.mxu0 0.0
      %1098 = vmatpush1.msra.mxu0 0.0
      %1099 = vmatprep.subr.mxu0 0.0
      %1100 = vmatpush1.msra.mxu0 0.0
      %1101 = vmatprep.subr.mxu0 0.0
      %1102 = vmatpush1.msra.mxu0 0.0
      %1103 = vmatprep.subr.mxu0 0.0
      %1104 = vmatpush1.msra.mxu0 0.0
      %1105 = vmatprep.mubr.f32.mxu0 0.0
      %1106 = vmatmul.mubr.f32.gmra.mrb[0].mxu0 %v931
      %v1107 = vpop.f32.mrb[0].mxu0
      %v1108 = vadd.f32 %v927, %v1107
      %v1109 = vpop.f32.mrb[0].mxu0
      %1110 = vmatprep.mubr.f32.mxu0 0.0
      %1111 = vmatmul.mubr.f32.gmra.mrb[0].mxu0 %v934
      %v1112 = vpop.f32.mrb[0].mxu0
      %v1113 = vadd.f32 %v927, %v1112
      %v1114 = vpop.f32.mrb[0].mxu0
      %1115 = vmatprep.mubr.f32.mxu0 0.0
      %1116 = vmatmul.mubr.f32.gmra.mrb[0].mxu0 %v937
      %v1117 = vpop.f32.mrb[0].mxu0
      %v1118 = vadd.f32 %v927, %v1117
      %v1119 = vpop.f32.mrb[0].mxu0
      %1120 = vmatprep.mubr.f32.mxu0 0.0
      %1121 = vmatmul.mubr.f32.gmra.mrb[0].mxu0 %v940
      %v1122 = vpop.f32.mrb[0].mxu0
      %v1123 = vadd.f32 %v927, %v1122
      %v1124 = vpop.f32.mrb[0].mxu0
      %1125 = vmatprep.mubr.f32.mxu0 0.0
      %1126 = vmatmul.mubr.f32.gmra.mrb[0].mxu0 %v943
      %v1127 = vpop.f32.mrb[0].mxu0
      %v1128 = vadd.f32 %v927, %v1127
      %v1129 = vpop.f32.mrb[0].mxu0
      %1130 = vmatprep.mubr.f32.mxu0 0.0
      %1131 = vmatmul.mubr.f32.gmra.mrb[0].mxu0 %v946
      %v1132 = vpop.f32.mrb[0].mxu0
      %v1133 = vadd.f32 %v927, %v1132
      %v1134 = vpop.f32.mrb[0].mxu0
      %1135 = vmatprep.mubr.f32.mxu0 0.0
      %1136 = vmatmul.mubr.f32.gmra.mrb[0].mxu0 %v949
      %v1137 = vpop.f32.mrb[0].mxu0
      %v1138 = vadd.f32 %v927, %v1137
      %v1139 = vpop.f32.mrb[0].mxu0
      %1140 = vmatprep.mubr.f32.mxu0 0.0
      %1141 = vmatmul.mubr.f32.gmra.mrb[0].mxu0 %v952
      %v1142 = vpop.f32.mrb[0].mxu0
      %v1143 = vadd.f32 %v927, %v1142
      %v1144 = vpop.f32.mrb[0].mxu0
      %1145 = vmatprep.mubr.f32.mxu0 0.0
      %1146 = vmatmul.mubr.f32.gmra.mrb[0].mxu0 %v955
      %v1147 = vpop.f32.mrb[0].mxu0
      %v1148 = vadd.f32 %v927, %v1147
      %v1149 = vpop.f32.mrb[0].mxu0
      %1150 = vmatprep.mubr.f32.mxu0 0.0
      %1151 = vmatmul.mubr.f32.gmra.mrb[0].mxu0 %v958
      %v1152 = vpop.f32.mrb[0].mxu0
      %v1153 = vadd.f32 %v927, %v1152
      %v1154 = vpop.f32.mrb[0].mxu0
      %1155 = vmatprep.mubr.f32.mxu0 0.0
      %1156 = vmatmul.mubr.f32.gmra.mrb[0].mxu0 %v961
      %v1157 = vpop.f32.mrb[0].mxu0
      %v1158 = vadd.f32 %v927, %v1157
      %v1159 = vpop.f32.mrb[0].mxu0
      %1160 = vmatprep.mubr.f32.mxu0 0.0
      %1161 = vmatmul.mubr.f32.gmra.mrb[0].mxu0 %v964
      %v1162 = vpop.f32.mrb[0].mxu0
      %v1163 = vadd.f32 %v927, %v1162
      %v1164 = vpop.f32.mrb[0].mxu0
      %1165 = vmatprep.mubr.f32.mxu0 0.0
      %1166 = vmatmul.mubr.f32.gmra.mrb[0].mxu0 %v967
      %v1167 = vpop.f32.mrb[0].mxu0
      %v1168 = vadd.f32 %v927, %v1167
      %v1169 = vpop.f32.mrb[0].mxu0
      %1170 = vmatprep.mubr.f32.mxu0 0.0
      %1171 = vmatmul.mubr.f32.gmra.mrb[0].mxu0 %v970
      %v1172 = vpop.f32.mrb[0].mxu0
      %v1173 = vadd.f32 %v927, %v1172
      %v1174 = vpop.f32.mrb[0].mxu0
      %1175 = vmatprep.mubr.f32.mxu0 0.0
      %1176 = vmatmul.mubr.f32.gmra.mrb[0].mxu0 %v973
      %v1177 = vpop.f32.mrb[0].mxu0
      %v1178 = vadd.f32 %v927, %v1177
      %v1179 = vpop.f32.mrb[0].mxu0
      %1180 = vmatprep.mubr.f32.mxu0 0.0
      %1181 = vmatmul.mubr.f32.gmra.mrb[0].mxu0 %v976
      %v1182 = vpop.f32.mrb[0].mxu0
      %v1183 = vadd.f32 %v927, %v1182
      %v1184 = vpop.f32.mrb[0].mxu0
      %1185 = vmatprep.mubr.f32.mxu0 0.0
      %1186 = vmatmul.mubr.f32.gmra.mrb[0].mxu0 %v979
      %v1187 = vpop.f32.mrb[0].mxu0
      %v1188 = vadd.f32 %v927, %v1187
      %v1189 = vpop.f32.mrb[0].mxu0
      %1190 = vmatprep.mubr.f32.mxu0 0.0
      %1191 = vmatmul.mubr.f32.gmra.mrb[0].mxu0 %v982
      %v1192 = vpop.f32.mrb[0].mxu0
      %v1193 = vadd.f32 %v927, %v1192
      %v1194 = vpop.f32.mrb[0].mxu0
      %1195 = vmatprep.mubr.f32.mxu0 0.0
      %1196 = vmatmul.mubr.f32.gmra.mrb[0].mxu0 %v985
      %v1197 = vpop.f32.mrb[0].mxu0
      %v1198 = vadd.f32 %v927, %v1197
      %v1199 = vpop.f32.mrb[0].mxu0
      %1200 = vmatprep.mubr.f32.mxu0 0.0
      %1201 = vmatmul.mubr.f32.gmra.mrb[0].mxu0 %v988
      %v1202 = vpop.f32.mrb[0].mxu0
      %v1203 = vadd.f32 %v927, %v1202
      %v1204 = vpop.f32.mrb[0].mxu0
      %1205 = vmatprep.mubr.f32.mxu0 0.0
      %1206 = vmatmul.mubr.f32.gmra.mrb[0].mxu0 %v991
      %v1207 = vpop.f32.mrb[0].mxu0
      %v1208 = vadd.f32 %v927, %v1207
      %v1209 = vpop.f32.mrb[0].mxu0
      %1210 = vmatprep.mubr.f32.mxu0 0.0
      %1211 = vmatmul.mubr.f32.gmra.mrb[0].mxu0 %v994
      %v1212 = vpop.f32.mrb[0].mxu0
      %v1213 = vadd.f32 %v927, %v1212
      %v1214 = vpop.f32.mrb[0].mxu0
      %1215 = vmatprep.mubr.f32.mxu0 0.0
      %1216 = vmatmul.mubr.f32.gmra.mrb[0].mxu0 %v997
      %v1217 = vpop.f32.mrb[0].mxu0
      %v1218 = vadd.f32 %v927, %v1217
      %v1219 = vpop.f32.mrb[0].mxu0
      %1220 = vmatprep.mubr.f32.mxu0 0.0
      %1221 = vmatmul.mubr.f32.gmra.mrb[0].mxu0 %v1000
      %v1222 = vpop.f32.mrb[0].mxu0
      %v1223 = vadd.f32 %v927, %v1222
      %v1224 = vpop.f32.mrb[0].mxu0
      %1225 = vmatprep.mubr.f32.mxu0 0.0
      %1226 = vmatmul.mubr.f32.gmra.mrb[0].mxu0 %v1003
      %v1227 = vpop.f32.mrb[0].mxu0
      %v1228 = vadd.f32 %v927, %v1227
      %v1229 = vpop.f32.mrb[0].mxu0
      %1230 = vmatprep.mubr.f32.mxu0 0.0
      %1231 = vmatmul.mubr.f32.gmra.mrb[0].mxu0 %v1006
      %v1232 = vpop.f32.mrb[0].mxu0
      %v1233 = vadd.f32 %v927, %v1232
      %v1234 = vpop.f32.mrb[0].mxu0
      %1235 = vmatprep.mubr.f32.mxu0 0.0
      %1236 = vmatmul.mubr.f32.gmra.mrb[0].mxu0 %v1009
      %v1237 = vpop.f32.mrb[0].mxu0
      %v1238 = vadd.f32 %v927, %v1237
      %v1239 = vpop.f32.mrb[0].mxu0
      %1240 = vmatprep.mubr.f32.mxu0 0.0
      %1241 = vmatmul.mubr.f32.gmra.mrb[0].mxu0 %v1012
      %v1242 = vpop.f32.mrb[0].mxu0
      %v1243 = vadd.f32 %v927, %v1242
      %v1244 = vpop.f32.mrb[0].mxu0
      %1245 = vmatprep.mubr.f32.mxu0 0.0
      %1246 = vmatmul.mubr.f32.gmra.mrb[0].mxu0 %v1015
      %v1247 = vpop.f32.mrb[0].mxu0
      %v1248 = vadd.f32 %v927, %v1247
      %v1249 = vpop.f32.mrb[0].mxu0
      %1250 = vmatprep.mubr.f32.mxu0 0.0
      %1251 = vmatmul.mubr.f32.gmra.mrb[0].mxu0 %v1018
      %v1252 = vpop.f32.mrb[0].mxu0
      %v1253 = vadd.f32 %v927, %v1252
      %v1254 = vpop.f32.mrb[0].mxu0
      %1255 = vmatprep.mubr.f32.mxu0 0.0
      %1256 = vmatmul.mubr.f32.gmra.mrb[0].mxu0 %v1021
      %v1257 = vpop.f32.mrb[0].mxu0
      %v1258 = vadd.f32 %v927, %v1257
      %v1259 = vpop.f32.mrb[0].mxu0
      %1260 = vmatprep.mubr.f32.mxu0 0.0
      %1261 = vmatmul.mubr.f32.gmra.mrb[0].mxu0 %v1024
      %v1262 = vpop.f32.mrb[0].mxu0
      %v1263 = vadd.f32 %v927, %v1262
      %v1264 = vpop.f32.mrb[0].mxu0
      %1265 = vmatprep.mubr.f32.mxu0 0.0
      %1266 = vmatmul.mubr.f32.gmra.mrb[0].mxu0 %v1027
      %v1267 = vpop.f32.mrb[0].mxu0
      %v1268 = vadd.f32 %v927, %v1267
      %v1269 = vpop.f32.mrb[0].mxu0
      %1270 = vmatprep.mubr.f32.mxu0 0.0
      %1271 = vmatmul.mubr.f32.gmra.mrb[0].mxu0 %v1030
      %v1272 = vpop.f32.mrb[0].mxu0
      %v1273 = vadd.f32 %v927, %v1272
      %v1274 = vpop.f32.mrb[0].mxu0
      %1275 = vmatprep.mubr.f32.mxu0 0.0
      %1276 = vmatmul.mubr.f32.gmra.mrb[0].mxu0 %v1033
      %v1277 = vpop.f32.mrb[0].mxu0
      %v1278 = vadd.f32 %v927, %v1277
      %v1279 = vpop.f32.mrb[0].mxu0
      %1280 = vmatprep.mubr.f32.mxu0 0.0
      %1281 = vmatmul.mubr.f32.gmra.mrb[0].mxu0 %v1036
      %v1282 = vpop.f32.mrb[0].mxu0
      %v1283 = vadd.f32 %v927, %v1282
      %v1284 = vpop.f32.mrb[0].mxu0
      %1285 = vmatprep.mubr.f32.mxu0 0.0
      %1286 = vmatmul.mubr.f32.gmra.mrb[0].mxu0 %v1039
      %v1287 = vpop.f32.mrb[0].mxu0
      %v1288 = vadd.f32 %v927, %v1287
      %v1289 = vpop.f32.mrb[0].mxu0
      %1290 = vdwg.mxu0
      %v1291 = vxor.u32 %v1108, 2147483648
      %v1292 = vxor.u32 %v1113, 2147483648
      %v1293 = vxor.u32 %v1118, 2147483648
      %v1294 = vxor.u32 %v1123, 2147483648
      %v1295 = vxor.u32 %v1128, 2147483648
      %v1296 = vxor.u32 %v1133, 2147483648
      %v1297 = vxor.u32 %v1138, 2147483648
      %v1298 = vxor.u32 %v1143, 2147483648
      %v1299 = vxor.u32 %v1148, 2147483648
      %v1300 = vxor.u32 %v1153, 2147483648
      %v1301 = vxor.u32 %v1158, 2147483648
      %v1302 = vxor.u32 %v1163, 2147483648
      %v1303 = vxor.u32 %v1168, 2147483648
      %v1304 = vxor.u32 %v1173, 2147483648
      %v1305 = vxor.u32 %v1178, 2147483648
      %v1306 = vxor.u32 %v1183, 2147483648
      %v1307 = vxor.u32 %v1188, 2147483648
      %v1308 = vxor.u32 %v1193, 2147483648
      %v1309 = vxor.u32 %v1198, 2147483648
      %v1310 = vxor.u32 %v1203, 2147483648
      %v1311 = vxor.u32 %v1208, 2147483648
      %v1312 = vxor.u32 %v1213, 2147483648
      %v1313 = vxor.u32 %v1218, 2147483648
      %v1314 = vxor.u32 %v1223, 2147483648
      %v1315 = vxor.u32 %v1228, 2147483648
      %v1316 = vxor.u32 %v1233, 2147483648
      %v1317 = vxor.u32 %v1238, 2147483648
      %v1318 = vxor.u32 %v1243, 2147483648
      %v1319 = vxor.u32 %v1248, 2147483648
      %v1320 = vxor.u32 %v1253, 2147483648
      %v1321 = vxor.u32 %v1258, 2147483648
      %v1322 = vxor.u32 %v1263, 2147483648
      %v1323 = vxor.u32 %v1268, 2147483648
      %v1324 = vxor.u32 %v1273, 2147483648
      %v1325 = vxor.u32 %v1278, 2147483648
      %v1326 = vxor.u32 %v1283, 2147483648
      %v1327 = vxor.u32 %v1288, 2147483648
      %v1328 = vmul.f32 %v1291, 1.442695
      %v1329 = vpow.pop %v1328
      %v1330 = vmul.f32 %v1292, 1.442695
      %v1331 = vpow.pop %v1330
      %v1332 = vmul.f32 %v1293, 1.442695
      %v1333 = vpow.pop %v1332
      %v1334 = vmul.f32 %v1294, 1.442695
      %v1335 = vpow.pop %v1334
      %v1336 = vmul.f32 %v1295, 1.442695
      %v1337 = vpow.pop %v1336
      %v1338 = vmul.f32 %v1296, 1.442695
      %v1339 = vpow.pop %v1338
      %v1340 = vmul.f32 %v1297, 1.442695
      %v1341 = vpow.pop %v1340
      %v1342 = vmul.f32 %v1298, 1.442695
      %v1343 = vpow.pop %v1342
      %v1344 = vmul.f32 %v1299, 1.442695
      %v1345 = vpow.pop %v1344
      %v1346 = vmul.f32 %v1300, 1.442695
      %v1347 = vpow.pop %v1346
      %v1348 = vmul.f32 %v1301, 1.442695
      %v1349 = vpow.pop %v1348
      %v1350 = vmul.f32 %v1302, 1.442695
      %v1351 = vpow.pop %v1350
      %v1352 = vmul.f32 %v1303, 1.442695
      %v1353 = vpow.pop %v1352
      %v1354 = vmul.f32 %v1304, 1.442695
      %v1355 = vpow.pop %v1354
      %v1356 = vmul.f32 %v1305, 1.442695
      %v1357 = vpow.pop %v1356
      %v1358 = vmul.f32 %v1306, 1.442695
      %v1359 = vpow.pop %v1358
      %v1360 = vmul.f32 %v1307, 1.442695
      %v1361 = vpow.pop %v1360
      %v1362 = vmul.f32 %v1308, 1.442695
      %v1363 = vpow.pop %v1362
      %v1364 = vmul.f32 %v1309, 1.442695
      %v1365 = vpow.pop %v1364
      %v1366 = vmul.f32 %v1310, 1.442695
      %v1367 = vpow.pop %v1366
      %v1368 = vmul.f32 %v1311, 1.442695
      %v1369 = vpow.pop %v1368
      %v1370 = vmul.f32 %v1312, 1.442695
      %v1371 = vpow.pop %v1370
      %v1372 = vmul.f32 %v1313, 1.442695
      %v1373 = vpow.pop %v1372
      %v1374 = vmul.f32 %v1314, 1.442695
      %v1375 = vpow.pop %v1374
      %v1376 = vmul.f32 %v1315, 1.442695
      %v1377 = vpow.pop %v1376
      %v1378 = vmul.f32 %v1316, 1.442695
      %v1379 = vpow.pop %v1378
      %v1380 = vmul.f32 %v1317, 1.442695
      %v1381 = vpow.pop %v1380
      %v1382 = vmul.f32 %v1318, 1.442695
      %v1383 = vpow.pop %v1382
      %v1384 = vmul.f32 %v1319, 1.442695
      %v1385 = vpow.pop %v1384
      %v1386 = vmul.f32 %v1320, 1.442695
      %v1387 = vpow.pop %v1386
      %v1388 = vmul.f32 %v1321, 1.442695
      %v1389 = vpow.pop %v1388
      %v1390 = vmul.f32 %v1322, 1.442695
      %v1391 = vpow.pop %v1390
      %v1392 = vmul.f32 %v1323, 1.442695
      %v1393 = vpow.pop %v1392
      %v1394 = vmul.f32 %v1324, 1.442695
      %v1395 = vpow.pop %v1394
      %v1396 = vmul.f32 %v1325, 1.442695
      %v1397 = vpow.pop %v1396
      %v1398 = vmul.f32 %v1326, 1.442695
      %v1399 = vpow.pop %v1398
      %v1400 = vmul.f32 %v1327, 1.442695
      %v1401 = vpow.pop %v1400
      %v1402 = vadd.f32 %v1329, 1.0
      %v1403 = vadd.f32 %v1331, 1.0
      %v1404 = vadd.f32 %v1333, 1.0
      %v1405 = vadd.f32 %v1335, 1.0
      %v1406 = vadd.f32 %v1337, 1.0
      %v1407 = vadd.f32 %v1339, 1.0
      %v1408 = vadd.f32 %v1341, 1.0
      %v1409 = vadd.f32 %v1343, 1.0
      %v1410 = vadd.f32 %v1345, 1.0
      %v1411 = vadd.f32 %v1347, 1.0
      %v1412 = vadd.f32 %v1349, 1.0
      %v1413 = vadd.f32 %v1351, 1.0
      %v1414 = vadd.f32 %v1353, 1.0
      %v1415 = vadd.f32 %v1355, 1.0
      %v1416 = vadd.f32 %v1357, 1.0
      %v1417 = vadd.f32 %v1359, 1.0
      %v1418 = vadd.f32 %v1361, 1.0
      %v1419 = vadd.f32 %v1363, 1.0
      %v1420 = vadd.f32 %v1365, 1.0
      %v1421 = vadd.f32 %v1367, 1.0
      %v1422 = vadd.f32 %v1369, 1.0
      %v1423 = vadd.f32 %v1371, 1.0
      %v1424 = vadd.f32 %v1373, 1.0
      %v1425 = vadd.f32 %v1375, 1.0
      %v1426 = vadd.f32 %v1377, 1.0
      %v1427 = vadd.f32 %v1379, 1.0
      %v1428 = vadd.f32 %v1381, 1.0
      %v1429 = vadd.f32 %v1383, 1.0
      %v1430 = vadd.f32 %v1385, 1.0
      %v1431 = vadd.f32 %v1387, 1.0
      %v1432 = vadd.f32 %v1389, 1.0
      %v1433 = vadd.f32 %v1391, 1.0
      %v1434 = vadd.f32 %v1393, 1.0
      %v1435 = vadd.f32 %v1395, 1.0
      %v1436 = vadd.f32 %v1397, 1.0
      %v1437 = vadd.f32 %v1399, 1.0
      %v1438 = vadd.f32 %v1401, 1.0
      %v1439 = vrcp.pop %v1402
      %v1440 = vmul.f32 1.0, %v1439
      %v1441 = vrcp.pop %v1403
      %v1442 = vmul.f32 1.0, %v1441
      %v1443 = vrcp.pop %v1404
      %v1444 = vmul.f32 1.0, %v1443
      %v1445 = vrcp.pop %v1405
      %v1446 = vmul.f32 1.0, %v1445
      %v1447 = vrcp.pop %v1406
      %v1448 = vmul.f32 1.0, %v1447
      %v1449 = vrcp.pop %v1407
      %v1450 = vmul.f32 1.0, %v1449
      %v1451 = vrcp.pop %v1408
      %v1452 = vmul.f32 1.0, %v1451
      %v1453 = vrcp.pop %v1409
      %v1454 = vmul.f32 1.0, %v1453
      %v1455 = vrcp.pop %v1410
      %v1456 = vmul.f32 1.0, %v1455
      %v1457 = vrcp.pop %v1411
      %v1458 = vmul.f32 1.0, %v1457
      %v1459 = vrcp.pop %v1412
      %v1460 = vmul.f32 1.0, %v1459
      %v1461 = vrcp.pop %v1413
      %v1462 = vmul.f32 1.0, %v1461
      %v1463 = vrcp.pop %v1414
      %v1464 = vmul.f32 1.0, %v1463
      %v1465 = vrcp.pop %v1415
      %v1466 = vmul.f32 1.0, %v1465
      %v1467 = vrcp.pop %v1416
      %v1468 = vmul.f32 1.0, %v1467
      %v1469 = vrcp.pop %v1417
      %v1470 = vmul.f32 1.0, %v1469
      %v1471 = vrcp.pop %v1418
      %v1472 = vmul.f32 1.0, %v1471
      %v1473 = vrcp.pop %v1419
      %v1474 = vmul.f32 1.0, %v1473
      %v1475 = vrcp.pop %v1420
      %v1476 = vmul.f32 1.0, %v1475
      %v1477 = vrcp.pop %v1421
      %v1478 = vmul.f32 1.0, %v1477
      %v1479 = vrcp.pop %v1422
      %v1480 = vmul.f32 1.0, %v1479
      %v1481 = vrcp.pop %v1423
      %v1482 = vmul.f32 1.0, %v1481
      %v1483 = vrcp.pop %v1424
      %v1484 = vmul.f32 1.0, %v1483
      %v1485 = vrcp.pop %v1425
      %v1486 = vmul.f32 1.0, %v1485
      %v1487 = vrcp.pop %v1426
      %v1488 = vmul.f32 1.0, %v1487
      %v1489 = vrcp.pop %v1427
      %v1490 = vmul.f32 1.0, %v1489
      %v1491 = vrcp.pop %v1428
      %v1492 = vmul.f32 1.0, %v1491
      %v1493 = vrcp.pop %v1429
      %v1494 = vmul.f32 1.0, %v1493
      %v1495 = vrcp.pop %v1430
      %v1496 = vmul.f32 1.0, %v1495
      %v1497 = vrcp.pop %v1431
      %v1498 = vmul.f32 1.0, %v1497
      %v1499 = vrcp.pop %v1432
      %v1500 = vmul.f32 1.0, %v1499
      %v1501 = vrcp.pop %v1433
      %v1502 = vmul.f32 1.0, %v1501
      %v1503 = vrcp.pop %v1434
      %v1504 = vmul.f32 1.0, %v1503
      %v1505 = vrcp.pop %v1435
      %v1506 = vmul.f32 1.0, %v1505
      %v1507 = vrcp.pop %v1436
      %v1508 = vmul.f32 1.0, %v1507
      %v1509 = vrcp.pop %v1437
      %v1510 = vmul.f32 1.0, %v1509
      %v1511 = vrcp.pop %v1438
      %v1512 = vmul.f32 1.0, %v1511
      %1513 = vst [vmem:[%s194] sm:$0xff] %v1440
      %1514 = vst [vmem:[%s194 + $0x8] sm:$0xff] %v1442
      %1515 = vst [vmem:[%s194 + $0x10] sm:$0xff] %v1444
      %1516 = vst [vmem:[%s194 + $0x18] sm:$0xff] %v1446
      %1517 = vst [vmem:[%s194 + $0x20] sm:$0xff] %v1448
      %1518 = vst [vmem:[%s194 + $0x28] sm:$0xff] %v1450
      %1519 = vst [vmem:[%s194 + $0x30] sm:$0xff] %v1452
      %1520 = vst [vmem:[%s194 + $0x38] sm:$0xff] %v1454
      %1521 = vst [vmem:[%s194 + $0x40] sm:$0xff] %v1456
      %1522 = vst [vmem:[%s194 + $0x48] sm:$0xff] %v1458
      %1523 = vst [vmem:[%s194 + $0x50] sm:$0xff] %v1460
      %1524 = vst [vmem:[%s194 + $0x58] sm:$0xff] %v1462
      %1525 = vst [vmem:[%s194 + $0x60] sm:$0xff] %v1464
      %1526 = vst [vmem:[%s194 + $0x68] sm:$0xff] %v1466
      %1527 = vst [vmem:[%s194 + $0x70] sm:$0xff] %v1468
      %1528 = vst [vmem:[%s194 + $0x78] sm:$0xff] %v1470
      %1529 = vst [vmem:[%s194 + $0x80] sm:$0xff] %v1472
      %1530 = vst [vmem:[%s194 + $0x88] sm:$0xff] %v1474
      %1531 = vst [vmem:[%s194 + $0x90] sm:$0xff] %v1476
      %1532 = vst [vmem:[%s194 + $0x98] sm:$0xff] %v1478
      %1533 = vst [vmem:[%s194 + $0xa0] sm:$0xff] %v1480
      %1534 = vst [vmem:[%s194 + $0xa8] sm:$0xff] %v1482
      %1535 = vst [vmem:[%s194 + $0xb0] sm:$0xff] %v1484
      %1536 = vst [vmem:[%s194 + $0xb8] sm:$0xff] %v1486
      %1537 = vst [vmem:[%s194 + $0xc0] sm:$0xff] %v1488
      %1538 = vst [vmem:[%s194 + $0xc8] sm:$0xff] %v1490
      %1539 = vst [vmem:[%s194 + $0xd0] sm:$0xff] %v1492
      %1540 = vst [vmem:[%s194 + $0xd8] sm:$0xff] %v1494
      %1541 = vst [vmem:[%s194 + $0xe0] sm:$0xff] %v1496
      %1542 = vst [vmem:[%s194 + $0xe8] sm:$0xff] %v1498
      %1543 = vst [vmem:[%s194 + $0xf0] sm:$0xff] %v1500
      %1544 = vst [vmem:[%s194 + $0xf8] sm:$0xff] %v1502
      %1545 = vst [vmem:[%s194 + $0x100] sm:$0xff] %v1504
      %1546 = vst [vmem:[%s194 + $0x108] sm:$0xff] %v1506
      %1547 = vst [vmem:[%s194 + $0x110] sm:$0xff] %v1508
      %1548 = vst [vmem:[%s194 + $0x118] sm:$0xff] %v1510
      %1549 = vst [vmem:[%s194 + $0x120] sm:$0xff] %v1512
      %s1550 = smul.u32 37, %s16
      %p1551 = scmp.lt.s32.totalorder %s1550, 73
      %s1552 = scalar_select %p1551, %s1550, 73
      %s1553 = smul.addr %s1552, 8
      %s1554 = scalar_lea.vmem %s4, %s1553
      // Predicated region
      $region33: #{autoencoder_forward.12} parent=31 // pred_check
        %p1555 = pneg %p102
      $region34: #{autoencoder_forward.12} parent=31 // pred_check_branch
        %1557 = sbr.rel (%p1555) target = $region36
      $region35: #{autoencoder_forward.12} parent=31 // pred_region
        %s1558 = smul.u32 37, %s16
      $region36: #{autoencoder_forward.12} parent=31 // pred_fallthru
        _
    $region32: #{autoencoder_forward.12} parent=5 // pred_fallthru
      _
    %p1559 = scmp.le.s32.totalorder 2, %s11
    // Predicated region
    $region37: #{autoencoder_forward.12} parent=5 // pred_check
      %p1560 = pneg %p1559
    $region38: #{autoencoder_forward.12} parent=5 // pred_check_branch
      %1562 = sbr.rel (%p1560) target = $region40
    $region39: #{autoencoder_forward.12} parent=5 // pred_region
      %s1563 = ssub.s32 %s11, 2
      // Predicated region
      $region41: #{autoencoder_forward.12} parent=39 // pred_check
        %p1564 = pneg %p108
      $region42: #{autoencoder_forward.12} parent=39 // pred_check_branch
        %1566 = sbr.rel (%p1564) target = $region44
      $region43: #{autoencoder_forward.12} parent=39 // pred_region
        %s1567 = smul.u32 37, %s17
        %p1568 = scmp.lt.s32.totalorder %s1567, 73
        %s1569 = scalar_select %p1568, %s1567, 73
        %s1570 = smul.addr %s1569, 8
        %s1571 = scalar_lea.vmem %s4, %s1570
      $region44: #{autoencoder_forward.12} parent=39 // pred_fallthru
        _
    $region40: #{autoencoder_forward.12} parent=5 // pred_fallthru
      _
  $region6: #{autoencoder_forward.12} parent=0 // loop_footer
    %s15 = sadd.s32 1, %s11
  $region7: #{autoencoder_forward.12} parent=0 // loop_footer_branch
    %10 = sbr.rel target = $region3
  $region8: #{autoencoder_forward.12} parent=0 // loop_exit
    _

</llo_original>
